<compile_context>
chip_gen: v5e
topology: v5e:2x2
jax: 0.10.0
libtpu: 0.0.40
codegen_flags: <defaults>
</compile_context>

<pallas_src>
import math

import jax
import jax.numpy as jnp
from jax import lax
from jax.experimental import pallas as pl
from jax.experimental.pallas import tpu as pltpu

# ----------------------------- config (small, consistent with the module) -----------------------------
VOCAB = 16          # config.vocab_size
PAD_ID = 0          # config.pad_id
D_MODEL = 32        # config.d_model
NUM_HEADS = 4       # config.num_att_heads
D_HEAD = D_MODEL // NUM_HEADS
FF_DIM = 64         # config.feed_forward_dim
NUM_LAYERS = 2      # config.num_enc_layers
MAX_LEN = 8         # config.max_enc_len (== seq len, as the PyTorch broadcast requires)
BATCH = 2
SEQ = MAX_LEN
SQRT_D = math.sqrt(D_MODEL)
INV_SQRT_DH = 1.0 / math.sqrt(D_HEAD)


# ----------------------------- positional encoding (host-side constant) -----------------------------
def positional_encoding(max_len, d_model):
    pos = jnp.arange(max_len, dtype=jnp.float32)[:, None]                       # (L, 1)
    div = jnp.power(10000.0, jnp.arange(0, d_model, 2, dtype=jnp.float32) / d_model)
    pe = jnp.zeros((max_len, d_model), dtype=jnp.float32)
    pe = pe.at[:, 0::2].set(jnp.sin(pos / div))
    pe = pe.at[:, 1::2].set(jnp.cos(pos / div))
    return pe                                                                    # (L, D)


def _layer_norm(x, gamma, beta, eps=1e-5):
    mu = jnp.mean(x, axis=-1, keepdims=True)
    var = jnp.mean((x - mu) ** 2, axis=-1, keepdims=True)
    return (x - mu) * lax.rsqrt(var + eps) * gamma + beta


# ----------------------------- fused Pallas kernel -----------------------------
def fused_encoder_kernel(
    ids_ref, ids_col_ref, table_ref, pe_ref,
    wqkv_ref, bqkv_ref, wo_ref, bo_ref, w1_ref, b1_ref, w2_ref, b2_ref, ln_ref,
    out_ref, attn_ref,
):
    B, S, D, H, Dh = BATCH, SEQ, D_MODEL, NUM_HEADS, D_HEAD
    R = B * S

    # ---- embedding: gather expressed as a one-hot matmul on the (otherwise idle) MXU ----
    onehot = (ids_col_ref[...] ==
              lax.broadcasted_iota(jnp.int32, (R, VOCAB), 1)).astype(jnp.float32)   # (R, V)
    emb = jnp.dot(onehot, table_ref[...], preferred_element_type=jnp.float32)        # (R, D)
    pe = jnp.concatenate([pe_ref[...]] * B, axis=0)                                  # (R, D)
    x = emb * SQRT_D + pe

    # ---- pad mask over key positions (built once, shared by every layer/head) ----
    ids3 = ids_ref[...][:, None, :]                                                  # (B, 1, S)
    key_pad = ids3 == PAD_ID                                                         # (B, 1, S)

    for l in range(NUM_LAYERS):                      # static unroll, NUM_LAYERS = 2
        ln_l = ln_ref[l]                             # (4, D): ln1_g, ln1_b, ln2_g, ln2_b

        # fused QKV projection: one (R,D)@(D,3D) MXU matmul instead of three
        qkv = jnp.dot(x, wqkv_ref[l], preferred_element_type=jnp.float32) + bqkv_ref[l]   # (R, 3D)

        ctx_parts = []
        for h in range(H):                           # static unroll over heads
            qh = qkv[:, h * Dh:(h + 1) * Dh].reshape(B, S, Dh)
            kh = qkv[:, D + h * Dh:D + (h + 1) * Dh].reshape(B, S, Dh)
            vh = qkv[:, 2 * D + h * Dh:2 * D + (h + 1) * Dh].reshape(B, S, Dh)
            # batched over B, contraction on last dims -> no explicit transpose of k
            s = jnp.einsum('bqd,bkd->bqk', qh, kh,
                           preferred_element_type=jnp.float32) * INV_SQRT_DH         # (B, S, S)
            s = jnp.where(key_pad, -10000.0, s)      # masked_fill_
            m = jnp.max(s, axis=-1, keepdims=True)
            e = jnp.exp(s - m)
            p = e / jnp.sum(e, axis=-1, keepdims=True)                                # softmax(dim=-1)
            attn_ref[l * H + h] = p                                                   # (B, S, S)
            ctx = jnp.einsum('bqk,bkd->bqd', p, vh,
                             preferred_element_type=jnp.float32)                      # (B, S, Dh)
            ctx_parts.append(ctx.reshape(R, Dh))
        context = jnp.concatenate(ctx_parts, axis=-1)                                 # (R, D)

        attn_out = jnp.dot(context, wo_ref[l], preferred_element_type=jnp.float32) + bo_ref[l]
        y = _layer_norm(attn_out + x, ln_l[0:1], ln_l[1:2])       # AddNorm #1

        # TODO(synk): nn.Dropout layers are identity here (inference semantics).
        hdn = jnp.maximum(
            jnp.dot(y, w1_ref[l], preferred_element_type=jnp.float32) + b1_ref[l], 0.0)
        ff = jnp.dot(hdn, w2_ref[l], preferred_element_type=jnp.float32) + b2_ref[l]
        x = _layer_norm(ff + y, ln_l[2:3], ln_l[3:4])             # AddNorm #2

    out_ref[...] = x


# ----------------------------- wrapper -----------------------------
def _vspec(shape):
    nd = len(shape)
    return pl.BlockSpec(shape, lambda i, _nd=nd: (0,) * _nd)


@jax.jit
def transformer_encoder(ids, packed):
    """Full forward pass: returns (outputs (B,S,D), [attn_prob (B,H,S,S)] * num_layers)."""
    B, S = ids.shape
    ids_col = ids.reshape(B * S, 1)   # same ids, column layout for the in-kernel one-hot compare

    out_flat, attn_flat = pl.pallas_call(
        fused_encoder_kernel,
        out_shape=(
            jax.ShapeDtypeStruct((B * S, D_MODEL), jnp.float32),
            jax.ShapeDtypeStruct((NUM_LAYERS * NUM_HEADS, B, S, S), jnp.float32),
        ),
        grid=(1,),
        in_specs=[
            _vspec((B, S)),                                   # ids (row layout, for pad mask)
            _vspec((B * S, 1)),                               # ids (column layout, for one-hot)
            _vspec((VOCAB, D_MODEL)),                         # embedding table
            _vspec((S, D_MODEL)),                             # positional encoding
            _vspec((NUM_LAYERS, D_MODEL, 3 * D_MODEL)),       # packed Wq|Wk|Wv
            _vspec((NUM_LAYERS, 1, 3 * D_MODEL)),             # packed bq|bk|bv
            _vspec((NUM_LAYERS, D_MODEL, D_MODEL)),           # Wo
            _vspec((NUM_LAYERS, 1, D_MODEL)),                 # bo
            _vspec((NUM_LAYERS, D_MODEL, FF_DIM)),            # W1
            _vspec((NUM_LAYERS, 1, FF_DIM)),                  # b1
            _vspec((NUM_LAYERS, FF_DIM, D_MODEL)),            # W2
            _vspec((NUM_LAYERS, 1, D_MODEL)),                 # b2
            _vspec((NUM_LAYERS, 4, D_MODEL)),                 # ln1_g|ln1_b|ln2_g|ln2_b
        ],
        out_specs=(
            _vspec((B * S, D_MODEL)),
            _vspec((NUM_LAYERS * NUM_HEADS, B, S, S)),
        ),
        compiler_params=pltpu.CompilerParams(dimension_semantics=("arbitrary",)),
    )(ids, ids_col, packed["emb"], packed["pe"],
      packed["wqkv"], packed["bqkv"], packed["wo"], packed["bo"],
      packed["w1"], packed["b1"], packed["w2"], packed["b2"], packed["ln"])

    out = out_flat.reshape(B, S, D_MODEL)
    attn5 = attn_flat.reshape(NUM_LAYERS, NUM_HEADS, B, S, S)
    probs = [jnp.transpose(attn5[l], (1, 0, 2, 3)) for l in range(NUM_LAYERS)]
    return out, probs


# ----------------------------- parameter init / packing -----------------------------
def init_params(key):
    n_per_layer = 16
    keys = jax.random.split(key, 1 + NUM_LAYERS * n_per_layer)
    emb = 0.05 * jax.random.normal(keys[0], (VOCAB, D_MODEL), jnp.float32)
    emb = emb.at[PAD_ID].set(0.0)  # padding_idx=pad_id
    layers = []
    ki = 1
    for _ in range(NUM_LAYERS):
        def nrm(shape, scale=0.05):
            nonlocal ki
            w = scale * jax.random.normal(keys[ki], shape, jnp.float32)
            ki += 1
            return w
        lp = dict(
            wq=nrm((D_MODEL, D_MODEL)), bq=nrm((1, D_MODEL), 0.01),
            wk=nrm((D_MODEL, D_MODEL)), bk=nrm((1, D_MODEL), 0.01),
            wv=nrm((D_MODEL, D_MODEL)), bv=nrm((1, D_MODEL), 0.01),
            wo=nrm((D_MODEL, D_MODEL)), bo=nrm((1, D_MODEL), 0.01),
            ln1_g=jnp.ones((1, D_MODEL), jnp.float32), ln1_b=jnp.zeros((1, D_MODEL), jnp.float32),
            w1=nrm((D_MODEL, FF_DIM)), b1=nrm((1, FF_DIM), 0.01),
            w2=nrm((FF_DIM, D_MODEL)), b2=nrm((1, D_MODEL), 0.01),
            ln2_g=jnp.ones((1, D_MODEL), jnp.float32), ln2_b=jnp.zeros((1, D_MODEL), jnp.float32),
        )
        layers.append(lp)
    return dict(emb=emb, pe=positional_encoding(MAX_LEN, D_MODEL), layers=layers)


def pack_params(params):
    """Stack per-layer params on a leading layer axis and fuse QKV / layernorm params."""
    L = params["layers"]
    stk = lambda name: jnp.stack([lp[name] for lp in L])
    return dict(
        emb=params["emb"],
        pe=params["pe"],
        wqkv=jnp.stack([jnp.concatenate([lp["wq"], lp["wk"], lp["wv"]], axis=1) for lp in L]),
        bqkv=jnp.stack([jnp.concatenate([lp["bq"], lp["bk"], lp["bv"]], axis=1) for lp in L]),
        wo=stk("wo"), bo=stk("bo"),
        w1=stk("w1"), b1=stk("b1"),
        w2=stk("w2"), b2=stk("b2"),
        ln=jnp.stack([jnp.concatenate(
            [lp["ln1_g"], lp["ln1_b"], lp["ln2_g"], lp["ln2_b"]], axis=0) for lp in L]),
    )


# ----------------------------- pure-JAX reference (for correctness check) -----------------------------
def ref_forward(ids, params):
    B, S = ids.shape
    x = params["emb"][ids] * SQRT_D + params["pe"][None, :S, :]
    mask = jnp.broadcast_to((ids == PAD_ID)[:, None, :], (B, S, S))
    probs = []
    for lp in params["layers"]:
        q = (x @ lp["wq"] + lp["bq"]).reshape(B, S, NUM_HEADS, D_HEAD).transpose(0, 2, 1, 3)
        k = (x @ lp["wk"] + lp["bk"]).reshape(B, S, NUM_HEADS, D_HEAD).transpose(0, 2, 1, 3)
        v = (x @ lp["wv"] + lp["bv"]).reshape(B, S, NUM_HEADS, D_HEAD).transpose(0, 2, 1, 3)
        scores = (q @ k.transpose(0, 1, 3, 2)) / math.sqrt(D_HEAD)
        scores = jnp.where(mask[:, None, :, :], -10000.0, scores)
        p = jax.nn.softmax(scores, axis=-1)
        ctx = (p @ v).transpose(0, 2, 1, 3).reshape(B, S, D_MODEL)
        attn_out = ctx @ lp["wo"] + lp["bo"]
        y = _layer_norm(attn_out + x, lp["ln1_g"], lp["ln1_b"])
        ff = jnp.maximum(y @ lp["w1"] + lp["b1"], 0.0) @ lp["w2"] + lp["b2"]
        x = _layer_norm(ff + y, lp["ln2_g"], lp["ln2_b"])
        probs.append(p)
    return x, probs


# ----------------------------- main -----------------------------
if __name__ == "__main__":
    key = jax.random.PRNGKey(0)
    k_ids, k_par = jax.random.split(key)

    ids = jax.random.randint(k_ids, (BATCH, SEQ), 1, VOCAB).astype(jnp.int32)
    ids = ids.at[1, SEQ - 2:].set(PAD_ID)  # make sure the pad mask is exercised

    params = init_params(k_par)
    packed = pack_params(params)

    out, attn_probs = transformer_encoder(ids, packed)
    out = jax.block_until_ready(out)
    attn_probs = [jax.block_until_ready(p) for p in attn_probs]

    out_ref, probs_ref = ref_forward(ids, params)
    assert out.shape == (BATCH, SEQ, D_MODEL)
    assert all(p.shape == (BATCH, NUM_HEADS, SEQ, SEQ) for p in attn_probs)
    assert jnp.allclose(out, out_ref, atol=1e-2, rtol=1e-2)
    for p, pr in zip(attn_probs, probs_ref):
        assert jnp.allclose(p, pr, atol=1e-2, rtol=1e-2)

    print("KERNEL_OK")
</pallas_src>

<mosaic_0001>
module attributes {stable_mosaic.version = 11 : i64} {
  func.func @fused_encoder_kernel(%arg0: i32, %arg1: memref<2x8xi32, #tpu.memory_space<vmem>>, %arg2: memref<16x1xi32, #tpu.memory_space<vmem>>, %arg3: memref<16x32xf32, #tpu.memory_space<vmem>>, %arg4: memref<8x32xf32, #tpu.memory_space<vmem>>, %arg5: memref<2x32x96xf32, #tpu.memory_space<vmem>>, %arg6: memref<2x1x96xf32, #tpu.memory_space<vmem>>, %arg7: memref<2x32x32xf32, #tpu.memory_space<vmem>>, %arg8: memref<2x1x32xf32, #tpu.memory_space<vmem>>, %arg9: memref<2x32x64xf32, #tpu.memory_space<vmem>>, %arg10: memref<2x1x64xf32, #tpu.memory_space<vmem>>, %arg11: memref<2x64x32xf32, #tpu.memory_space<vmem>>, %arg12: memref<2x1x32xf32, #tpu.memory_space<vmem>>, %arg13: memref<2x4x32xf32, #tpu.memory_space<vmem>>, %arg14: memref<16x32xf32, #tpu.memory_space<vmem>>, %arg15: memref<8x2x8x8xf32, #tpu.memory_space<vmem>>) attributes {dimension_semantics = [#tpu.dimension_semantics<arbitrary>], iteration_bounds = array<i64: 1>, scalar_prefetch = 0 : i64, scratch_operands = 0 : i64, tpu.core_type = #tpu.core_type<tc>, window_params = [{pipeline_mode = #tpu.pipeline_mode<synchronous>, transform_indices = @transform_0, window_bounds = array<i64: 2, 8>}, {pipeline_mode = #tpu.pipeline_mode<synchronous>, transform_indices = @transform_1, window_bounds = array<i64: 16, 1>}, {pipeline_mode = #tpu.pipeline_mode<synchronous>, transform_indices = @transform_2, window_bounds = array<i64: 16, 32>}, {pipeline_mode = #tpu.pipeline_mode<synchronous>, transform_indices = @transform_3, window_bounds = array<i64: 8, 32>}, {pipeline_mode = #tpu.pipeline_mode<synchronous>, transform_indices = @transform_4, window_bounds = array<i64: 2, 32, 96>}, {pipeline_mode = #tpu.pipeline_mode<synchronous>, transform_indices = @transform_5, window_bounds = array<i64: 2, 1, 96>}, {pipeline_mode = #tpu.pipeline_mode<synchronous>, transform_indices = @transform_6, window_bounds = array<i64: 2, 32, 32>}, {pipeline_mode = #tpu.pipeline_mode<synchronous>, transform_indices = @transform_7, window_bounds = array<i64: 2, 1, 32>}, {pipeline_mode = #tpu.pipeline_mode<synchronous>, transform_indices = @transform_8, window_bounds = array<i64: 2, 32, 64>}, {pipeline_mode = #tpu.pipeline_mode<synchronous>, transform_indices = @transform_9, window_bounds = array<i64: 2, 1, 64>}, {pipeline_mode = #tpu.pipeline_mode<synchronous>, transform_indices = @transform_10, window_bounds = array<i64: 2, 64, 32>}, {pipeline_mode = #tpu.pipeline_mode<synchronous>, transform_indices = @transform_11, window_bounds = array<i64: 2, 1, 32>}, {pipeline_mode = #tpu.pipeline_mode<synchronous>, transform_indices = @transform_12, window_bounds = array<i64: 2, 4, 32>}, {pipeline_mode = #tpu.pipeline_mode<synchronous>, transform_indices = @transform_13, window_bounds = array<i64: 16, 32>}, {pipeline_mode = #tpu.pipeline_mode<synchronous>, transform_indices = @transform_14, window_bounds = array<i64: 8, 2, 8, 8>}]} {
    %c0 = arith.constant 0 : index
    %c0_0 = arith.constant 0 : index
    %0 = vector.load %arg2[%c0, %c0_0] : memref<16x1xi32, #tpu.memory_space<vmem>>, vector<16x1xi32>
    %1 = tpu.iota {dimensions = array<i32: 1>} : vector<16x16xi32>
    %2 = vector.broadcast %0 : vector<16x1xi32> to vector<16x16xi32>
    %3 = arith.cmpi eq, %2, %1 : vector<16x16xi32>
    %4 = arith.extui %3 : vector<16x16xi1> to vector<16x16xi32>
    %5 = arith.sitofp %4 : vector<16x16xi32> to vector<16x16xf32>
    %c0_1 = arith.constant 0 : index
    %c0_2 = arith.constant 0 : index
    %6 = vector.load %arg3[%c0_1, %c0_2] : memref<16x32xf32, #tpu.memory_space<vmem>>, vector<16x32xf32>
    %cst = arith.constant dense<0.000000e+00> : vector<16x32xf32>
    %7 = tpu.matmul %5, %6, %cst {dimension_numbers = #tpu.dot_dimension_numbers<[1], [0], [0], [1], [0, 0, 1, 1], [], []>} : vector<16x16xf32>, vector<16x32xf32>, vector<16x32xf32> -> vector<16x32xf32>
    %c0_3 = arith.constant 0 : index
    %c0_4 = arith.constant 0 : index
    %8 = vector.load %arg4[%c0_3, %c0_4] : memref<8x32xf32, #tpu.memory_space<vmem>>, vector<8x32xf32>
    %9 = tpu.concatenate %8, %8 in 0 : vector<8x32xf32>, vector<8x32xf32> -> vector<16x32xf32>
    %cst_5 = arith.constant 5.65685415 : f32
    %10 = vector.broadcast %cst_5 : f32 to vector<16x32xf32>
    %11 = arith.mulf %7, %10 : vector<16x32xf32>
    %12 = arith.addf %11, %9 : vector<16x32xf32>
    %c0_6 = arith.constant 0 : index
    %c0_7 = arith.constant 0 : index
    %13 = vector.load %arg1[%c0_6, %c0_7] : memref<2x8xi32, #tpu.memory_space<vmem>>, vector<2x8xi32>
    %14 = vector.shape_cast %13 : vector<2x8xi32> to vector<2x1x8xi32>
    %c0_i32 = arith.constant 0 : i32
    %15 = vector.broadcast %c0_i32 : i32 to vector<2x1x8xi32>
    %16 = arith.cmpi eq, %14, %15 : vector<2x1x8xi32>
    %c0_8 = arith.constant 0 : index
    %c0_9 = arith.constant 0 : index
    %c0_10 = arith.constant 0 : index
    %17 = vector.load %arg13[%c0_8, %c0_9, %c0_10] : memref<2x4x32xf32, #tpu.memory_space<vmem>>, vector<1x4x32xf32>
    %18 = vector.shape_cast %17 : vector<1x4x32xf32> to vector<4x32xf32>
    %c0_11 = arith.constant 0 : index
    %c0_12 = arith.constant 0 : index
    %c0_13 = arith.constant 0 : index
    %19 = vector.load %arg5[%c0_11, %c0_12, %c0_13] : memref<2x32x96xf32, #tpu.memory_space<vmem>>, vector<1x32x96xf32>
    %20 = vector.shape_cast %19 : vector<1x32x96xf32> to vector<32x96xf32>
    %cst_14 = arith.constant dense<0.000000e+00> : vector<16x96xf32>
    %21 = tpu.matmul %12, %20, %cst_14 {dimension_numbers = #tpu.dot_dimension_numbers<[1], [0], [0], [1], [0, 0, 1, 1], [], []>} : vector<16x32xf32>, vector<32x96xf32>, vector<16x96xf32> -> vector<16x96xf32>
    %c0_15 = arith.constant 0 : index
    %c0_16 = arith.constant 0 : index
    %c0_17 = arith.constant 0 : index
    %22 = vector.load %arg6[%c0_15, %c0_16, %c0_17] : memref<2x1x96xf32, #tpu.memory_space<vmem>>, vector<1x1x96xf32>
    %23 = vector.shape_cast %22 : vector<1x1x96xf32> to vector<1x96xf32>
    %24 = vector.broadcast %23 : vector<1x96xf32> to vector<16x96xf32>
    %25 = arith.addf %21, %24 : vector<16x96xf32>
    %26 = vector.extract_strided_slice %25 {offsets = [0, 0], sizes = [16, 8], strides = [1, 1]} : vector<16x96xf32> to vector<16x8xf32>
    %27 = vector.shape_cast %26 : vector<16x8xf32> to vector<2x8x8xf32>
    %28 = vector.extract_strided_slice %25 {offsets = [0, 32], sizes = [16, 8], strides = [1, 1]} : vector<16x96xf32> to vector<16x8xf32>
    %29 = vector.shape_cast %28 : vector<16x8xf32> to vector<2x8x8xf32>
    %30 = vector.extract_strided_slice %25 {offsets = [0, 64], sizes = [16, 8], strides = [1, 1]} : vector<16x96xf32> to vector<16x8xf32>
    %31 = vector.shape_cast %30 : vector<16x8xf32> to vector<2x8x8xf32>
    "tpu.trace_start"() <{level = 10 : i32, message = "bqd,bkd->bqk"}> : () -> ()
    %cst_18 = arith.constant dense<0.000000e+00> : vector<2x8x8xf32>
    %32 = tpu.matmul %27, %29, %cst_18 {dimension_numbers = #tpu.dot_dimension_numbers<[2], [2], [1], [1], [0, 0, 0, 1, 1, 1], [0], [0]>} : vector<2x8x8xf32>, vector<2x8x8xf32>, vector<2x8x8xf32> -> vector<2x8x8xf32>
    "tpu.trace_stop"() : () -> ()
    %cst_19 = arith.constant 0.353553385 : f32
    %33 = vector.broadcast %cst_19 : f32 to vector<2x8x8xf32>
    %34 = arith.mulf %32, %33 : vector<2x8x8xf32>
    %cst_20 = arith.constant -1.000000e+04 : f32
    %35 = vector.shape_cast %16 : vector<2x1x8xi1> to vector<2x1x8xi1>
    %36 = vector.broadcast %35 : vector<2x1x8xi1> to vector<2x8x8xi1>
    %37 = vector.broadcast %cst_20 : f32 to vector<2x8x8xf32>
    %38 = arith.select %36, %37, %34 : vector<2x8x8xi1>, vector<2x8x8xf32>
    %cst_21 = arith.constant dense<0xFF800000> : vector<2x8xf32>
    %39 = vector.multi_reduction <maximumf>, %38, %cst_21 [2] : vector<2x8x8xf32> to vector<2x8xf32>
    %40 = vector.shape_cast %39 : vector<2x8xf32> to vector<2x8x1xf32>
    %41 = vector.broadcast %40 : vector<2x8x1xf32> to vector<2x8x8xf32>
    %42 = arith.subf %38, %41 : vector<2x8x8xf32>
    %43 = math.exp %42 : vector<2x8x8xf32>
    %cst_22 = arith.constant dense<0.000000e+00> : vector<2x8xf32>
    %44 = vector.multi_reduction <add>, %43, %cst_22 [2] : vector<2x8x8xf32> to vector<2x8xf32>
    %45 = vector.shape_cast %44 : vector<2x8xf32> to vector<2x8x1xf32>
    %46 = vector.broadcast %45 : vector<2x8x1xf32> to vector<2x8x8xf32>
    %47 = arith.divf %43, %46 : vector<2x8x8xf32>
    %c0_23 = arith.constant 0 : index
    %c0_24 = arith.constant 0 : index
    %c0_25 = arith.constant 0 : index
    %c0_26 = arith.constant 0 : index
    %48 = vector.load %arg15[%c0_23, %c0_24, %c0_25, %c0_26] : memref<8x2x8x8xf32, #tpu.memory_space<vmem>>, vector<1x2x8x8xf32>
    %49 = vector.shape_cast %48 : vector<1x2x8x8xf32> to vector<2x8x8xf32>
    %50 = vector.shape_cast %47 : vector<2x8x8xf32> to vector<1x2x8x8xf32>
    tpu.vector_store %arg15[%c0_23, %c0_24, %c0_25, %c0_26], %50 {strides = array<i32>} : memref<8x2x8x8xf32, #tpu.memory_space<vmem>>, vector<1x2x8x8xf32>,
    "tpu.trace_start"() <{level = 10 : i32, message = "bqk,bkd->bqd"}> : () -> ()
    %cst_27 = arith.constant dense<0.000000e+00> : vector<2x8x8xf32>
    %51 = tpu.matmul %47, %31, %cst_27 {dimension_numbers = #tpu.dot_dimension_numbers<[2], [1], [1], [2], [0, 0, 0, 1, 1, 2], [0], [0]>} : vector<2x8x8xf32>, vector<2x8x8xf32>, vector<2x8x8xf32> -> vector<2x8x8xf32>
    "tpu.trace_stop"() : () -> ()
    %52 = vector.shape_cast %51 : vector<2x8x8xf32> to vector<16x8xf32>
    %53 = vector.extract_strided_slice %25 {offsets = [0, 8], sizes = [16, 8], strides = [1, 1]} : vector<16x96xf32> to vector<16x8xf32>
    %54 = vector.shape_cast %53 : vector<16x8xf32> to vector<2x8x8xf32>
    %55 = vector.extract_strided_slice %25 {offsets = [0, 40], sizes = [16, 8], strides = [1, 1]} : vector<16x96xf32> to vector<16x8xf32>
    %56 = vector.shape_cast %55 : vector<16x8xf32> to vector<2x8x8xf32>
    %57 = vector.extract_strided_slice %25 {offsets = [0, 72], sizes = [16, 8], strides = [1, 1]} : vector<16x96xf32> to vector<16x8xf32>
    %58 = vector.shape_cast %57 : vector<16x8xf32> to vector<2x8x8xf32>
    "tpu.trace_start"() <{level = 10 : i32, message = "bqd,bkd->bqk"}> : () -> ()
    %cst_28 = arith.constant dense<0.000000e+00> : vector<2x8x8xf32>
    %59 = tpu.matmul %54, %56, %cst_28 {dimension_numbers = #tpu.dot_dimension_numbers<[2], [2], [1], [1], [0, 0, 0, 1, 1, 1], [0], [0]>} : vector<2x8x8xf32>, vector<2x8x8xf32>, vector<2x8x8xf32> -> vector<2x8x8xf32>
    "tpu.trace_stop"() : () -> ()
    %cst_29 = arith.constant 0.353553385 : f32
    %60 = vector.broadcast %cst_29 : f32 to vector<2x8x8xf32>
    %61 = arith.mulf %59, %60 : vector<2x8x8xf32>
    %cst_30 = arith.constant -1.000000e+04 : f32
    %62 = vector.shape_cast %16 : vector<2x1x8xi1> to vector<2x1x8xi1>
    %63 = vector.broadcast %62 : vector<2x1x8xi1> to vector<2x8x8xi1>
    %64 = vector.broadcast %cst_30 : f32 to vector<2x8x8xf32>
    %65 = arith.select %63, %64, %61 : vector<2x8x8xi1>, vector<2x8x8xf32>
    %cst_31 = arith.constant dense<0xFF800000> : vector<2x8xf32>
    %66 = vector.multi_reduction <maximumf>, %65, %cst_31 [2] : vector<2x8x8xf32> to vector<2x8xf32>
    %67 = vector.shape_cast %66 : vector<2x8xf32> to vector<2x8x1xf32>
    %68 = vector.broadcast %67 : vector<2x8x1xf32> to vector<2x8x8xf32>
    %69 = arith.subf %65, %68 : vector<2x8x8xf32>
    %70 = math.exp %69 : vector<2x8x8xf32>
    %cst_32 = arith.constant dense<0.000000e+00> : vector<2x8xf32>
    %71 = vector.multi_reduction <add>, %70, %cst_32 [2] : vector<2x8x8xf32> to vector<2x8xf32>
    %72 = vector.shape_cast %71 : vector<2x8xf32> to vector<2x8x1xf32>
    %73 = vector.broadcast %72 : vector<2x8x1xf32> to vector<2x8x8xf32>
    %74 = arith.divf %70, %73 : vector<2x8x8xf32>
    %c1 = arith.constant 1 : index
    %c0_33 = arith.constant 0 : index
    %c0_34 = arith.constant 0 : index
    %c0_35 = arith.constant 0 : index
    %75 = vector.load %arg15[%c1, %c0_33, %c0_34, %c0_35] : memref<8x2x8x8xf32, #tpu.memory_space<vmem>>, vector<1x2x8x8xf32>
    %76 = vector.shape_cast %75 : vector<1x2x8x8xf32> to vector<2x8x8xf32>
    %77 = vector.shape_cast %74 : vector<2x8x8xf32> to vector<1x2x8x8xf32>
    tpu.vector_store %arg15[%c1, %c0_33, %c0_34, %c0_35], %77 {strides = array<i32>} : memref<8x2x8x8xf32, #tpu.memory_space<vmem>>, vector<1x2x8x8xf32>,
    "tpu.trace_start"() <{level = 10 : i32, message = "bqk,bkd->bqd"}> : () -> ()
    %cst_36 = arith.constant dense<0.000000e+00> : vector<2x8x8xf32>
    %78 = tpu.matmul %74, %58, %cst_36 {dimension_numbers = #tpu.dot_dimension_numbers<[2], [1], [1], [2], [0, 0, 0, 1, 1, 2], [0], [0]>} : vector<2x8x8xf32>, vector<2x8x8xf32>, vector<2x8x8xf32> -> vector<2x8x8xf32>
    "tpu.trace_stop"() : () -> ()
    %79 = vector.shape_cast %78 : vector<2x8x8xf32> to vector<16x8xf32>
    %80 = vector.extract_strided_slice %25 {offsets = [0, 16], sizes = [16, 8], strides = [1, 1]} : vector<16x96xf32> to vector<16x8xf32>
    %81 = vector.shape_cast %80 : vector<16x8xf32> to vector<2x8x8xf32>
    %82 = vector.extract_strided_slice %25 {offsets = [0, 48], sizes = [16, 8], strides = [1, 1]} : vector<16x96xf32> to vector<16x8xf32>
    %83 = vector.shape_cast %82 : vector<16x8xf32> to vector<2x8x8xf32>
    %84 = vector.extract_strided_slice %25 {offsets = [0, 80], sizes = [16, 8], strides = [1, 1]} : vector<16x96xf32> to vector<16x8xf32>
    %85 = vector.shape_cast %84 : vector<16x8xf32> to vector<2x8x8xf32>
    "tpu.trace_start"() <{level = 10 : i32, message = "bqd,bkd->bqk"}> : () -> ()
    %cst_37 = arith.constant dense<0.000000e+00> : vector<2x8x8xf32>
    %86 = tpu.matmul %81, %83, %cst_37 {dimension_numbers = #tpu.dot_dimension_numbers<[2], [2], [1], [1], [0, 0, 0, 1, 1, 1], [0], [0]>} : vector<2x8x8xf32>, vector<2x8x8xf32>, vector<2x8x8xf32> -> vector<2x8x8xf32>
    "tpu.trace_stop"() : () -> ()
    %cst_38 = arith.constant 0.353553385 : f32
    %87 = vector.broadcast %cst_38 : f32 to vector<2x8x8xf32>
    %88 = arith.mulf %86, %87 : vector<2x8x8xf32>
    %cst_39 = arith.constant -1.000000e+04 : f32
    %89 = vector.shape_cast %16 : vector<2x1x8xi1> to vector<2x1x8xi1>
    %90 = vector.broadcast %89 : vector<2x1x8xi1> to vector<2x8x8xi1>
    %91 = vector.broadcast %cst_39 : f32 to vector<2x8x8xf32>
    %92 = arith.select %90, %91, %88 : vector<2x8x8xi1>, vector<2x8x8xf32>
    %cst_40 = arith.constant dense<0xFF800000> : vector<2x8xf32>
    %93 = vector.multi_reduction <maximumf>, %92, %cst_40 [2] : vector<2x8x8xf32> to vector<2x8xf32>
    %94 = vector.shape_cast %93 : vector<2x8xf32> to vector<2x8x1xf32>
    %95 = vector.broadcast %94 : vector<2x8x1xf32> to vector<2x8x8xf32>
    %96 = arith.subf %92, %95 : vector<2x8x8xf32>
    %97 = math.exp %96 : vector<2x8x8xf32>
    %cst_41 = arith.constant dense<0.000000e+00> : vector<2x8xf32>
    %98 = vector.multi_reduction <add>, %97, %cst_41 [2] : vector<2x8x8xf32> to vector<2x8xf32>
    %99 = vector.shape_cast %98 : vector<2x8xf32> to vector<2x8x1xf32>
    %100 = vector.broadcast %99 : vector<2x8x1xf32> to vector<2x8x8xf32>
    %101 = arith.divf %97, %100 : vector<2x8x8xf32>
    %c2 = arith.constant 2 : index
    %c0_42 = arith.constant 0 : index
    %c0_43 = arith.constant 0 : index
    %c0_44 = arith.constant 0 : index
    %102 = vector.load %arg15[%c2, %c0_42, %c0_43, %c0_44] : memref<8x2x8x8xf32, #tpu.memory_space<vmem>>, vector<1x2x8x8xf32>
    %103 = vector.shape_cast %102 : vector<1x2x8x8xf32> to vector<2x8x8xf32>
    %104 = vector.shape_cast %101 : vector<2x8x8xf32> to vector<1x2x8x8xf32>
    tpu.vector_store %arg15[%c2, %c0_42, %c0_43, %c0_44], %104 {strides = array<i32>} : memref<8x2x8x8xf32, #tpu.memory_space<vmem>>, vector<1x2x8x8xf32>,
    "tpu.trace_start"() <{level = 10 : i32, message = "bqk,bkd->bqd"}> : () -> ()
    %cst_45 = arith.constant dense<0.000000e+00> : vector<2x8x8xf32>
    %105 = tpu.matmul %101, %85, %cst_45 {dimension_numbers = #tpu.dot_dimension_numbers<[2], [1], [1], [2], [0, 0, 0, 1, 1, 2], [0], [0]>} : vector<2x8x8xf32>, vector<2x8x8xf32>, vector<2x8x8xf32> -> vector<2x8x8xf32>
    "tpu.trace_stop"() : () -> ()
    %106 = vector.shape_cast %105 : vector<2x8x8xf32> to vector<16x8xf32>
    %107 = vector.extract_strided_slice %25 {offsets = [0, 24], sizes = [16, 8], strides = [1, 1]} : vector<16x96xf32> to vector<16x8xf32>
    %108 = vector.shape_cast %107 : vector<16x8xf32> to vector<2x8x8xf32>
    %109 = vector.extract_strided_slice %25 {offsets = [0, 56], sizes = [16, 8], strides = [1, 1]} : vector<16x96xf32> to vector<16x8xf32>
    %110 = vector.shape_cast %109 : vector<16x8xf32> to vector<2x8x8xf32>
    %111 = vector.extract_strided_slice %25 {offsets = [0, 88], sizes = [16, 8], strides = [1, 1]} : vector<16x96xf32> to vector<16x8xf32>
    %112 = vector.shape_cast %111 : vector<16x8xf32> to vector<2x8x8xf32>
    "tpu.trace_start"() <{level = 10 : i32, message = "bqd,bkd->bqk"}> : () -> ()
    %cst_46 = arith.constant dense<0.000000e+00> : vector<2x8x8xf32>
    %113 = tpu.matmul %108, %110, %cst_46 {dimension_numbers = #tpu.dot_dimension_numbers<[2], [2], [1], [1], [0, 0, 0, 1, 1, 1], [0], [0]>} : vector<2x8x8xf32>, vector<2x8x8xf32>, vector<2x8x8xf32> -> vector<2x8x8xf32>
    "tpu.trace_stop"() : () -> ()
    %cst_47 = arith.constant 0.353553385 : f32
    %114 = vector.broadcast %cst_47 : f32 to vector<2x8x8xf32>
    %115 = arith.mulf %113, %114 : vector<2x8x8xf32>
    %cst_48 = arith.constant -1.000000e+04 : f32
    %116 = vector.shape_cast %16 : vector<2x1x8xi1> to vector<2x1x8xi1>
    %117 = vector.broadcast %116 : vector<2x1x8xi1> to vector<2x8x8xi1>
    %118 = vector.broadcast %cst_48 : f32 to vector<2x8x8xf32>
    %119 = arith.select %117, %118, %115 : vector<2x8x8xi1>, vector<2x8x8xf32>
    %cst_49 = arith.constant dense<0xFF800000> : vector<2x8xf32>
    %120 = vector.multi_reduction <maximumf>, %119, %cst_49 [2] : vector<2x8x8xf32> to vector<2x8xf32>
    %121 = vector.shape_cast %120 : vector<2x8xf32> to vector<2x8x1xf32>
    %122 = vector.broadcast %121 : vector<2x8x1xf32> to vector<2x8x8xf32>
    %123 = arith.subf %119, %122 : vector<2x8x8xf32>
    %124 = math.exp %123 : vector<2x8x8xf32>
    %cst_50 = arith.constant dense<0.000000e+00> : vector<2x8xf32>
    %125 = vector.multi_reduction <add>, %124, %cst_50 [2] : vector<2x8x8xf32> to vector<2x8xf32>
    %126 = vector.shape_cast %125 : vector<2x8xf32> to vector<2x8x1xf32>
    %127 = vector.broadcast %126 : vector<2x8x1xf32> to vector<2x8x8xf32>
    %128 = arith.divf %124, %127 : vector<2x8x8xf32>
    %c3 = arith.constant 3 : index
    %c0_51 = arith.constant 0 : index
    %c0_52 = arith.constant 0 : index
    %c0_53 = arith.constant 0 : index
    %129 = vector.load %arg15[%c3, %c0_51, %c0_52, %c0_53] : memref<8x2x8x8xf32, #tpu.memory_space<vmem>>, vector<1x2x8x8xf32>
    %130 = vector.shape_cast %129 : vector<1x2x8x8xf32> to vector<2x8x8xf32>
    %131 = vector.shape_cast %128 : vector<2x8x8xf32> to vector<1x2x8x8xf32>
    tpu.vector_store %arg15[%c3, %c0_51, %c0_52, %c0_53], %131 {strides = array<i32>} : memref<8x2x8x8xf32, #tpu.memory_space<vmem>>, vector<1x2x8x8xf32>,
    "tpu.trace_start"() <{level = 10 : i32, message = "bqk,bkd->bqd"}> : () -> ()
    %cst_54 = arith.constant dense<0.000000e+00> : vector<2x8x8xf32>
    %132 = tpu.matmul %128, %112, %cst_54 {dimension_numbers = #tpu.dot_dimension_numbers<[2], [1], [1], [2], [0, 0, 0, 1, 1, 2], [0], [0]>} : vector<2x8x8xf32>, vector<2x8x8xf32>, vector<2x8x8xf32> -> vector<2x8x8xf32>
    "tpu.trace_stop"() : () -> ()
    %133 = vector.shape_cast %132 : vector<2x8x8xf32> to vector<16x8xf32>
    %134 = tpu.concatenate %52, %79, %106, %133 in 1 : vector<16x8xf32>, vector<16x8xf32>, vector<16x8xf32>, vector<16x8xf32> -> vector<16x32xf32>
    %c0_55 = arith.constant 0 : index
    %c0_56 = arith.constant 0 : index
    %c0_57 = arith.constant 0 : index
    %135 = vector.load %arg7[%c0_55, %c0_56, %c0_57] : memref<2x32x32xf32, #tpu.memory_space<vmem>>, vector<1x32x32xf32>
    %136 = vector.shape_cast %135 : vector<1x32x32xf32> to vector<32x32xf32>
    %cst_58 = arith.constant dense<0.000000e+00> : vector<16x32xf32>
    %137 = tpu.matmul %134, %136, %cst_58 {dimension_numbers = #tpu.dot_dimension_numbers<[1], [0], [0], [1], [0, 0, 1, 1], [], []>} : vector<16x32xf32>, vector<32x32xf32>, vector<16x32xf32> -> vector<16x32xf32>
    %c0_59 = arith.constant 0 : index
    %c0_60 = arith.constant 0 : index
    %c0_61 = arith.constant 0 : index
    %138 = vector.load %arg8[%c0_59, %c0_60, %c0_61] : memref<2x1x32xf32, #tpu.memory_space<vmem>>, vector<1x1x32xf32>
    %139 = vector.shape_cast %138 : vector<1x1x32xf32> to vector<1x32xf32>
    %140 = vector.broadcast %139 : vector<1x32xf32> to vector<16x32xf32>
    %141 = arith.addf %137, %140 : vector<16x32xf32>
    %142 = arith.addf %141, %12 : vector<16x32xf32>
    %143 = vector.extract_strided_slice %18 {offsets = [0, 0], sizes = [1, 32], strides = [1, 1]} : vector<4x32xf32> to vector<1x32xf32>
    %144 = vector.extract_strided_slice %18 {offsets = [1, 0], sizes = [1, 32], strides = [1, 1]} : vector<4x32xf32> to vector<1x32xf32>
    %cst_62 = arith.constant dense<0.000000e+00> : vector<16xf32>
    %145 = vector.multi_reduction <add>, %142, %cst_62 [1] : vector<16x32xf32> to vector<16xf32>
    %146 = vector.shape_cast %145 : vector<16xf32> to vector<16x1xf32>
    %cst_63 = arith.constant 3.200000e+01 : f32
    %147 = vector.broadcast %cst_63 : f32 to vector<16x1xf32>
    %148 = arith.divf %146, %147 : vector<16x1xf32>
    %149 = vector.broadcast %148 : vector<16x1xf32> to vector<16x32xf32>
    %150 = arith.subf %142, %149 : vector<16x32xf32>
    %151 = arith.mulf %150, %150 : vector<16x32xf32>
    %cst_64 = arith.constant dense<0.000000e+00> : vector<16xf32>
    %152 = vector.multi_reduction <add>, %151, %cst_64 [1] : vector<16x32xf32> to vector<16xf32>
    %153 = vector.shape_cast %152 : vector<16xf32> to vector<16x1xf32>
    %cst_65 = arith.constant 3.200000e+01 : f32
    %154 = vector.broadcast %cst_65 : f32 to vector<16x1xf32>
    %155 = arith.divf %153, %154 : vector<16x1xf32>
    %156 = vector.broadcast %148 : vector<16x1xf32> to vector<16x32xf32>
    %157 = arith.subf %142, %156 : vector<16x32xf32>
    %cst_66 = arith.constant 9.99999974E-6 : f32
    %158 = vector.broadcast %cst_66 : f32 to vector<16x1xf32>
    %159 = arith.addf %155, %158 : vector<16x1xf32>
    %160 = math.rsqrt %159 : vector<16x1xf32>
    %161 = vector.broadcast %160 : vector<16x1xf32> to vector<16x32xf32>
    %162 = arith.mulf %157, %161 : vector<16x32xf32>
    %163 = vector.broadcast %143 : vector<1x32xf32> to vector<16x32xf32>
    %164 = arith.mulf %162, %163 : vector<16x32xf32>
    %165 = vector.broadcast %144 : vector<1x32xf32> to vector<16x32xf32>
    %166 = arith.addf %164, %165 : vector<16x32xf32>
    %c0_67 = arith.constant 0 : index
    %c0_68 = arith.constant 0 : index
    %c0_69 = arith.constant 0 : index
    %167 = vector.load %arg9[%c0_67, %c0_68, %c0_69] : memref<2x32x64xf32, #tpu.memory_space<vmem>>, vector<1x32x64xf32>
    %168 = vector.shape_cast %167 : vector<1x32x64xf32> to vector<32x64xf32>
    %cst_70 = arith.constant dense<0.000000e+00> : vector<16x64xf32>
    %169 = tpu.matmul %166, %168, %cst_70 {dimension_numbers = #tpu.dot_dimension_numbers<[1], [0], [0], [1], [0, 0, 1, 1], [], []>} : vector<16x32xf32>, vector<32x64xf32>, vector<16x64xf32> -> vector<16x64xf32>
    %c0_71 = arith.constant 0 : index
    %c0_72 = arith.constant 0 : index
    %c0_73 = arith.constant 0 : index
    %170 = vector.load %arg10[%c0_71, %c0_72, %c0_73] : memref<2x1x64xf32, #tpu.memory_space<vmem>>, vector<1x1x64xf32>
    %171 = vector.shape_cast %170 : vector<1x1x64xf32> to vector<1x64xf32>
    %172 = vector.broadcast %171 : vector<1x64xf32> to vector<16x64xf32>
    %173 = arith.addf %169, %172 : vector<16x64xf32>
    %cst_74 = arith.constant 0.000000e+00 : f32
    %174 = vector.broadcast %cst_74 : f32 to vector<16x64xf32>
    %175 = arith.maximumf %173, %174 : vector<16x64xf32>
    %c0_75 = arith.constant 0 : index
    %c0_76 = arith.constant 0 : index
    %c0_77 = arith.constant 0 : index
    %176 = vector.load %arg11[%c0_75, %c0_76, %c0_77] : memref<2x64x32xf32, #tpu.memory_space<vmem>>, vector<1x64x32xf32>
    %177 = vector.shape_cast %176 : vector<1x64x32xf32> to vector<64x32xf32>
    %cst_78 = arith.constant dense<0.000000e+00> : vector<16x32xf32>
    %178 = tpu.matmul %175, %177, %cst_78 {dimension_numbers = #tpu.dot_dimension_numbers<[1], [0], [0], [1], [0, 0, 1, 1], [], []>} : vector<16x64xf32>, vector<64x32xf32>, vector<16x32xf32> -> vector<16x32xf32>
    %c0_79 = arith.constant 0 : index
    %c0_80 = arith.constant 0 : index
    %c0_81 = arith.constant 0 : index
    %179 = vector.load %arg12[%c0_79, %c0_80, %c0_81] : memref<2x1x32xf32, #tpu.memory_space<vmem>>, vector<1x1x32xf32>
    %180 = vector.shape_cast %179 : vector<1x1x32xf32> to vector<1x32xf32>
    %181 = vector.broadcast %180 : vector<1x32xf32> to vector<16x32xf32>
    %182 = arith.addf %178, %181 : vector<16x32xf32>
    %183 = arith.addf %182, %166 : vector<16x32xf32>
    %184 = vector.extract_strided_slice %18 {offsets = [2, 0], sizes = [1, 32], strides = [1, 1]} : vector<4x32xf32> to vector<1x32xf32>
    %185 = vector.extract_strided_slice %18 {offsets = [3, 0], sizes = [1, 32], strides = [1, 1]} : vector<4x32xf32> to vector<1x32xf32>
    %cst_82 = arith.constant dense<0.000000e+00> : vector<16xf32>
    %186 = vector.multi_reduction <add>, %183, %cst_82 [1] : vector<16x32xf32> to vector<16xf32>
    %187 = vector.shape_cast %186 : vector<16xf32> to vector<16x1xf32>
    %cst_83 = arith.constant 3.200000e+01 : f32
    %188 = vector.broadcast %cst_83 : f32 to vector<16x1xf32>
    %189 = arith.divf %187, %188 : vector<16x1xf32>
    %190 = vector.broadcast %189 : vector<16x1xf32> to vector<16x32xf32>
    %191 = arith.subf %183, %190 : vector<16x32xf32>
    %192 = arith.mulf %191, %191 : vector<16x32xf32>
    %cst_84 = arith.constant dense<0.000000e+00> : vector<16xf32>
    %193 = vector.multi_reduction <add>, %192, %cst_84 [1] : vector<16x32xf32> to vector<16xf32>
    %194 = vector.shape_cast %193 : vector<16xf32> to vector<16x1xf32>
    %cst_85 = arith.constant 3.200000e+01 : f32
    %195 = vector.broadcast %cst_85 : f32 to vector<16x1xf32>
    %196 = arith.divf %194, %195 : vector<16x1xf32>
    %197 = vector.broadcast %189 : vector<16x1xf32> to vector<16x32xf32>
    %198 = arith.subf %183, %197 : vector<16x32xf32>
    %cst_86 = arith.constant 9.99999974E-6 : f32
    %199 = vector.broadcast %cst_86 : f32 to vector<16x1xf32>
    %200 = arith.addf %196, %199 : vector<16x1xf32>
    %201 = math.rsqrt %200 : vector<16x1xf32>
    %202 = vector.broadcast %201 : vector<16x1xf32> to vector<16x32xf32>
    %203 = arith.mulf %198, %202 : vector<16x32xf32>
    %204 = vector.broadcast %184 : vector<1x32xf32> to vector<16x32xf32>
    %205 = arith.mulf %203, %204 : vector<16x32xf32>
    %206 = vector.broadcast %185 : vector<1x32xf32> to vector<16x32xf32>
    %207 = arith.addf %205, %206 : vector<16x32xf32>
    %c1_87 = arith.constant 1 : index
    %c0_88 = arith.constant 0 : index
    %c0_89 = arith.constant 0 : index
    %208 = vector.load %arg13[%c1_87, %c0_88, %c0_89] : memref<2x4x32xf32, #tpu.memory_space<vmem>>, vector<1x4x32xf32>
    %209 = vector.shape_cast %208 : vector<1x4x32xf32> to vector<4x32xf32>
    %c1_90 = arith.constant 1 : index
    %c0_91 = arith.constant 0 : index
    %c0_92 = arith.constant 0 : index
    %210 = vector.load %arg5[%c1_90, %c0_91, %c0_92] : memref<2x32x96xf32, #tpu.memory_space<vmem>>, vector<1x32x96xf32>
    %211 = vector.shape_cast %210 : vector<1x32x96xf32> to vector<32x96xf32>
    %cst_93 = arith.constant dense<0.000000e+00> : vector<16x96xf32>
    %212 = tpu.matmul %207, %211, %cst_93 {dimension_numbers = #tpu.dot_dimension_numbers<[1], [0], [0], [1], [0, 0, 1, 1], [], []>} : vector<16x32xf32>, vector<32x96xf32>, vector<16x96xf32> -> vector<16x96xf32>
    %c1_94 = arith.constant 1 : index
    %c0_95 = arith.constant 0 : index
    %c0_96 = arith.constant 0 : index
    %213 = vector.load %arg6[%c1_94, %c0_95, %c0_96] : memref<2x1x96xf32, #tpu.memory_space<vmem>>, vector<1x1x96xf32>
    %214 = vector.shape_cast %213 : vector<1x1x96xf32> to vector<1x96xf32>
    %215 = vector.broadcast %214 : vector<1x96xf32> to vector<16x96xf32>
    %216 = arith.addf %212, %215 : vector<16x96xf32>
    %217 = vector.extract_strided_slice %216 {offsets = [0, 0], sizes = [16, 8], strides = [1, 1]} : vector<16x96xf32> to vector<16x8xf32>
    %218 = vector.shape_cast %217 : vector<16x8xf32> to vector<2x8x8xf32>
    %219 = vector.extract_strided_slice %216 {offsets = [0, 32], sizes = [16, 8], strides = [1, 1]} : vector<16x96xf32> to vector<16x8xf32>
    %220 = vector.shape_cast %219 : vector<16x8xf32> to vector<2x8x8xf32>
    %221 = vector.extract_strided_slice %216 {offsets = [0, 64], sizes = [16, 8], strides = [1, 1]} : vector<16x96xf32> to vector<16x8xf32>
    %222 = vector.shape_cast %221 : vector<16x8xf32> to vector<2x8x8xf32>
    "tpu.trace_start"() <{level = 10 : i32, message = "bqd,bkd->bqk"}> : () -> ()
    %cst_97 = arith.constant dense<0.000000e+00> : vector<2x8x8xf32>
    %223 = tpu.matmul %218, %220, %cst_97 {dimension_numbers = #tpu.dot_dimension_numbers<[2], [2], [1], [1], [0, 0, 0, 1, 1, 1], [0], [0]>} : vector<2x8x8xf32>, vector<2x8x8xf32>, vector<2x8x8xf32> -> vector<2x8x8xf32>
    "tpu.trace_stop"() : () -> ()
    %cst_98 = arith.constant 0.353553385 : f32
    %224 = vector.broadcast %cst_98 : f32 to vector<2x8x8xf32>
    %225 = arith.mulf %223, %224 : vector<2x8x8xf32>
    %cst_99 = arith.constant -1.000000e+04 : f32
    %226 = vector.shape_cast %16 : vector<2x1x8xi1> to vector<2x1x8xi1>
    %227 = vector.broadcast %226 : vector<2x1x8xi1> to vector<2x8x8xi1>
    %228 = vector.broadcast %cst_99 : f32 to vector<2x8x8xf32>
    %229 = arith.select %227, %228, %225 : vector<2x8x8xi1>, vector<2x8x8xf32>
    %cst_100 = arith.constant dense<0xFF800000> : vector<2x8xf32>
    %230 = vector.multi_reduction <maximumf>, %229, %cst_100 [2] : vector<2x8x8xf32> to vector<2x8xf32>
    %231 = vector.shape_cast %230 : vector<2x8xf32> to vector<2x8x1xf32>
    %232 = vector.broadcast %231 : vector<2x8x1xf32> to vector<2x8x8xf32>
    %233 = arith.subf %229, %232 : vector<2x8x8xf32>
    %234 = math.exp %233 : vector<2x8x8xf32>
    %cst_101 = arith.constant dense<0.000000e+00> : vector<2x8xf32>
    %235 = vector.multi_reduction <add>, %234, %cst_101 [2] : vector<2x8x8xf32> to vector<2x8xf32>
    %236 = vector.shape_cast %235 : vector<2x8xf32> to vector<2x8x1xf32>
    %237 = vector.broadcast %236 : vector<2x8x1xf32> to vector<2x8x8xf32>
    %238 = arith.divf %234, %237 : vector<2x8x8xf32>
    %c4 = arith.constant 4 : index
    %c0_102 = arith.constant 0 : index
    %c0_103 = arith.constant 0 : index
    %c0_104 = arith.constant 0 : index
    %239 = vector.load %arg15[%c4, %c0_102, %c0_103, %c0_104] : memref<8x2x8x8xf32, #tpu.memory_space<vmem>>, vector<1x2x8x8xf32>
    %240 = vector.shape_cast %239 : vector<1x2x8x8xf32> to vector<2x8x8xf32>
    %241 = vector.shape_cast %238 : vector<2x8x8xf32> to vector<1x2x8x8xf32>
    tpu.vector_store %arg15[%c4, %c0_102, %c0_103, %c0_104], %241 {strides = array<i32>} : memref<8x2x8x8xf32, #tpu.memory_space<vmem>>, vector<1x2x8x8xf32>,
    "tpu.trace_start"() <{level = 10 : i32, message = "bqk,bkd->bqd"}> : () -> ()
    %cst_105 = arith.constant dense<0.000000e+00> : vector<2x8x8xf32>
    %242 = tpu.matmul %238, %222, %cst_105 {dimension_numbers = #tpu.dot_dimension_numbers<[2], [1], [1], [2], [0, 0, 0, 1, 1, 2], [0], [0]>} : vector<2x8x8xf32>, vector<2x8x8xf32>, vector<2x8x8xf32> -> vector<2x8x8xf32>
    "tpu.trace_stop"() : () -> ()
    %243 = vector.shape_cast %242 : vector<2x8x8xf32> to vector<16x8xf32>
    %244 = vector.extract_strided_slice %216 {offsets = [0, 8], sizes = [16, 8], strides = [1, 1]} : vector<16x96xf32> to vector<16x8xf32>
    %245 = vector.shape_cast %244 : vector<16x8xf32> to vector<2x8x8xf32>
    %246 = vector.extract_strided_slice %216 {offsets = [0, 40], sizes = [16, 8], strides = [1, 1]} : vector<16x96xf32> to vector<16x8xf32>
    %247 = vector.shape_cast %246 : vector<16x8xf32> to vector<2x8x8xf32>
    %248 = vector.extract_strided_slice %216 {offsets = [0, 72], sizes = [16, 8], strides = [1, 1]} : vector<16x96xf32> to vector<16x8xf32>
    %249 = vector.shape_cast %248 : vector<16x8xf32> to vector<2x8x8xf32>
    "tpu.trace_start"() <{level = 10 : i32, message = "bqd,bkd->bqk"}> : () -> ()
    %cst_106 = arith.constant dense<0.000000e+00> : vector<2x8x8xf32>
    %250 = tpu.matmul %245, %247, %cst_106 {dimension_numbers = #tpu.dot_dimension_numbers<[2], [2], [1], [1], [0, 0, 0, 1, 1, 1], [0], [0]>} : vector<2x8x8xf32>, vector<2x8x8xf32>, vector<2x8x8xf32> -> vector<2x8x8xf32>
    "tpu.trace_stop"() : () -> ()
    %cst_107 = arith.constant 0.353553385 : f32
    %251 = vector.broadcast %cst_107 : f32 to vector<2x8x8xf32>
    %252 = arith.mulf %250, %251 : vector<2x8x8xf32>
    %cst_108 = arith.constant -1.000000e+04 : f32
    %253 = vector.shape_cast %16 : vector<2x1x8xi1> to vector<2x1x8xi1>
    %254 = vector.broadcast %253 : vector<2x1x8xi1> to vector<2x8x8xi1>
    %255 = vector.broadcast %cst_108 : f32 to vector<2x8x8xf32>
    %256 = arith.select %254, %255, %252 : vector<2x8x8xi1>, vector<2x8x8xf32>
    %cst_109 = arith.constant dense<0xFF800000> : vector<2x8xf32>
    %257 = vector.multi_reduction <maximumf>, %256, %cst_109 [2] : vector<2x8x8xf32> to vector<2x8xf32>
    %258 = vector.shape_cast %257 : vector<2x8xf32> to vector<2x8x1xf32>
    %259 = vector.broadcast %258 : vector<2x8x1xf32> to vector<2x8x8xf32>
    %260 = arith.subf %256, %259 : vector<2x8x8xf32>
    %261 = math.exp %260 : vector<2x8x8xf32>
    %cst_110 = arith.constant dense<0.000000e+00> : vector<2x8xf32>
    %262 = vector.multi_reduction <add>, %261, %cst_110 [2] : vector<2x8x8xf32> to vector<2x8xf32>
    %263 = vector.shape_cast %262 : vector<2x8xf32> to vector<2x8x1xf32>
    %264 = vector.broadcast %263 : vector<2x8x1xf32> to vector<2x8x8xf32>
    %265 = arith.divf %261, %264 : vector<2x8x8xf32>
    %c5 = arith.constant 5 : index
    %c0_111 = arith.constant 0 : index
    %c0_112 = arith.constant 0 : index
    %c0_113 = arith.constant 0 : index
    %266 = vector.load %arg15[%c5, %c0_111, %c0_112, %c0_113] : memref<8x2x8x8xf32, #tpu.memory_space<vmem>>, vector<1x2x8x8xf32>
    %267 = vector.shape_cast %266 : vector<1x2x8x8xf32> to vector<2x8x8xf32>
    %268 = vector.shape_cast %265 : vector<2x8x8xf32> to vector<1x2x8x8xf32>
    tpu.vector_store %arg15[%c5, %c0_111, %c0_112, %c0_113], %268 {strides = array<i32>} : memref<8x2x8x8xf32, #tpu.memory_space<vmem>>, vector<1x2x8x8xf32>,
    "tpu.trace_start"() <{level = 10 : i32, message = "bqk,bkd->bqd"}> : () -> ()
    %cst_114 = arith.constant dense<0.000000e+00> : vector<2x8x8xf32>
    %269 = tpu.matmul %265, %249, %cst_114 {dimension_numbers = #tpu.dot_dimension_numbers<[2], [1], [1], [2], [0, 0, 0, 1, 1, 2], [0], [0]>} : vector<2x8x8xf32>, vector<2x8x8xf32>, vector<2x8x8xf32> -> vector<2x8x8xf32>
    "tpu.trace_stop"() : () -> ()
    %270 = vector.shape_cast %269 : vector<2x8x8xf32> to vector<16x8xf32>
    %271 = vector.extract_strided_slice %216 {offsets = [0, 16], sizes = [16, 8], strides = [1, 1]} : vector<16x96xf32> to vector<16x8xf32>
    %272 = vector.shape_cast %271 : vector<16x8xf32> to vector<2x8x8xf32>
    %273 = vector.extract_strided_slice %216 {offsets = [0, 48], sizes = [16, 8], strides = [1, 1]} : vector<16x96xf32> to vector<16x8xf32>
    %274 = vector.shape_cast %273 : vector<16x8xf32> to vector<2x8x8xf32>
    %275 = vector.extract_strided_slice %216 {offsets = [0, 80], sizes = [16, 8], strides = [1, 1]} : vector<16x96xf32> to vector<16x8xf32>
    %276 = vector.shape_cast %275 : vector<16x8xf32> to vector<2x8x8xf32>
    "tpu.trace_start"() <{level = 10 : i32, message = "bqd,bkd->bqk"}> : () -> ()
    %cst_115 = arith.constant dense<0.000000e+00> : vector<2x8x8xf32>
    %277 = tpu.matmul %272, %274, %cst_115 {dimension_numbers = #tpu.dot_dimension_numbers<[2], [2], [1], [1], [0, 0, 0, 1, 1, 1], [0], [0]>} : vector<2x8x8xf32>, vector<2x8x8xf32>, vector<2x8x8xf32> -> vector<2x8x8xf32>
    "tpu.trace_stop"() : () -> ()
    %cst_116 = arith.constant 0.353553385 : f32
    %278 = vector.broadcast %cst_116 : f32 to vector<2x8x8xf32>
    %279 = arith.mulf %277, %278 : vector<2x8x8xf32>
    %cst_117 = arith.constant -1.000000e+04 : f32
    %280 = vector.shape_cast %16 : vector<2x1x8xi1> to vector<2x1x8xi1>
    %281 = vector.broadcast %280 : vector<2x1x8xi1> to vector<2x8x8xi1>
    %282 = vector.broadcast %cst_117 : f32 to vector<2x8x8xf32>
    %283 = arith.select %281, %282, %279 : vector<2x8x8xi1>, vector<2x8x8xf32>
    %cst_118 = arith.constant dense<0xFF800000> : vector<2x8xf32>
    %284 = vector.multi_reduction <maximumf>, %283, %cst_118 [2] : vector<2x8x8xf32> to vector<2x8xf32>
    %285 = vector.shape_cast %284 : vector<2x8xf32> to vector<2x8x1xf32>
    %286 = vector.broadcast %285 : vector<2x8x1xf32> to vector<2x8x8xf32>
    %287 = arith.subf %283, %286 : vector<2x8x8xf32>
    %288 = math.exp %287 : vector<2x8x8xf32>
    %cst_119 = arith.constant dense<0.000000e+00> : vector<2x8xf32>
    %289 = vector.multi_reduction <add>, %288, %cst_119 [2] : vector<2x8x8xf32> to vector<2x8xf32>
    %290 = vector.shape_cast %289 : vector<2x8xf32> to vector<2x8x1xf32>
    %291 = vector.broadcast %290 : vector<2x8x1xf32> to vector<2x8x8xf32>
    %292 = arith.divf %288, %291 : vector<2x8x8xf32>
    %c6 = arith.constant 6 : index
    %c0_120 = arith.constant 0 : index
    %c0_121 = arith.constant 0 : index
    %c0_122 = arith.constant 0 : index
    %293 = vector.load %arg15[%c6, %c0_120, %c0_121, %c0_122] : memref<8x2x8x8xf32, #tpu.memory_space<vmem>>, vector<1x2x8x8xf32>
    %294 = vector.shape_cast %293 : vector<1x2x8x8xf32> to vector<2x8x8xf32>
    %295 = vector.shape_cast %292 : vector<2x8x8xf32> to vector<1x2x8x8xf32>
    tpu.vector_store %arg15[%c6, %c0_120, %c0_121, %c0_122], %295 {strides = array<i32>} : memref<8x2x8x8xf32, #tpu.memory_space<vmem>>, vector<1x2x8x8xf32>,
    "tpu.trace_start"() <{level = 10 : i32, message = "bqk,bkd->bqd"}> : () -> ()
    %cst_123 = arith.constant dense<0.000000e+00> : vector<2x8x8xf32>
    %296 = tpu.matmul %292, %276, %cst_123 {dimension_numbers = #tpu.dot_dimension_numbers<[2], [1], [1], [2], [0, 0, 0, 1, 1, 2], [0], [0]>} : vector<2x8x8xf32>, vector<2x8x8xf32>, vector<2x8x8xf32> -> vector<2x8x8xf32>
    "tpu.trace_stop"() : () -> ()
    %297 = vector.shape_cast %296 : vector<2x8x8xf32> to vector<16x8xf32>
    %298 = vector.extract_strided_slice %216 {offsets = [0, 24], sizes = [16, 8], strides = [1, 1]} : vector<16x96xf32> to vector<16x8xf32>
    %299 = vector.shape_cast %298 : vector<16x8xf32> to vector<2x8x8xf32>
    %300 = vector.extract_strided_slice %216 {offsets = [0, 56], sizes = [16, 8], strides = [1, 1]} : vector<16x96xf32> to vector<16x8xf32>
    %301 = vector.shape_cast %300 : vector<16x8xf32> to vector<2x8x8xf32>
    %302 = vector.extract_strided_slice %216 {offsets = [0, 88], sizes = [16, 8], strides = [1, 1]} : vector<16x96xf32> to vector<16x8xf32>
    %303 = vector.shape_cast %302 : vector<16x8xf32> to vector<2x8x8xf32>
    "tpu.trace_start"() <{level = 10 : i32, message = "bqd,bkd->bqk"}> : () -> ()
    %cst_124 = arith.constant dense<0.000000e+00> : vector<2x8x8xf32>
    %304 = tpu.matmul %299, %301, %cst_124 {dimension_numbers = #tpu.dot_dimension_numbers<[2], [2], [1], [1], [0, 0, 0, 1, 1, 1], [0], [0]>} : vector<2x8x8xf32>, vector<2x8x8xf32>, vector<2x8x8xf32> -> vector<2x8x8xf32>
    "tpu.trace_stop"() : () -> ()
    %cst_125 = arith.constant 0.353553385 : f32
    %305 = vector.broadcast %cst_125 : f32 to vector<2x8x8xf32>
    %306 = arith.mulf %304, %305 : vector<2x8x8xf32>
    %cst_126 = arith.constant -1.000000e+04 : f32
    %307 = vector.shape_cast %16 : vector<2x1x8xi1> to vector<2x1x8xi1>
    %308 = vector.broadcast %307 : vector<2x1x8xi1> to vector<2x8x8xi1>
    %309 = vector.broadcast %cst_126 : f32 to vector<2x8x8xf32>
    %310 = arith.select %308, %309, %306 : vector<2x8x8xi1>, vector<2x8x8xf32>
    %cst_127 = arith.constant dense<0xFF800000> : vector<2x8xf32>
    %311 = vector.multi_reduction <maximumf>, %310, %cst_127 [2] : vector<2x8x8xf32> to vector<2x8xf32>
    %312 = vector.shape_cast %311 : vector<2x8xf32> to vector<2x8x1xf32>
    %313 = vector.broadcast %312 : vector<2x8x1xf32> to vector<2x8x8xf32>
    %314 = arith.subf %310, %313 : vector<2x8x8xf32>
    %315 = math.exp %314 : vector<2x8x8xf32>
    %cst_128 = arith.constant dense<0.000000e+00> : vector<2x8xf32>
    %316 = vector.multi_reduction <add>, %315, %cst_128 [2] : vector<2x8x8xf32> to vector<2x8xf32>
    %317 = vector.shape_cast %316 : vector<2x8xf32> to vector<2x8x1xf32>
    %318 = vector.broadcast %317 : vector<2x8x1xf32> to vector<2x8x8xf32>
    %319 = arith.divf %315, %318 : vector<2x8x8xf32>
    %c7 = arith.constant 7 : index
    %c0_129 = arith.constant 0 : index
    %c0_130 = arith.constant 0 : index
    %c0_131 = arith.constant 0 : index
    %320 = vector.load %arg15[%c7, %c0_129, %c0_130, %c0_131] : memref<8x2x8x8xf32, #tpu.memory_space<vmem>>, vector<1x2x8x8xf32>
    %321 = vector.shape_cast %320 : vector<1x2x8x8xf32> to vector<2x8x8xf32>
    %322 = vector.shape_cast %319 : vector<2x8x8xf32> to vector<1x2x8x8xf32>
    tpu.vector_store %arg15[%c7, %c0_129, %c0_130, %c0_131], %322 {strides = array<i32>} : memref<8x2x8x8xf32, #tpu.memory_space<vmem>>, vector<1x2x8x8xf32>,
    "tpu.trace_start"() <{level = 10 : i32, message = "bqk,bkd->bqd"}> : () -> ()
    %cst_132 = arith.constant dense<0.000000e+00> : vector<2x8x8xf32>
    %323 = tpu.matmul %319, %303, %cst_132 {dimension_numbers = #tpu.dot_dimension_numbers<[2], [1], [1], [2], [0, 0, 0, 1, 1, 2], [0], [0]>} : vector<2x8x8xf32>, vector<2x8x8xf32>, vector<2x8x8xf32> -> vector<2x8x8xf32>
    "tpu.trace_stop"() : () -> ()
    %324 = vector.shape_cast %323 : vector<2x8x8xf32> to vector<16x8xf32>
    %325 = tpu.concatenate %243, %270, %297, %324 in 1 : vector<16x8xf32>, vector<16x8xf32>, vector<16x8xf32>, vector<16x8xf32> -> vector<16x32xf32>
    %c1_133 = arith.constant 1 : index
    %c0_134 = arith.constant 0 : index
    %c0_135 = arith.constant 0 : index
    %326 = vector.load %arg7[%c1_133, %c0_134, %c0_135] : memref<2x32x32xf32, #tpu.memory_space<vmem>>, vector<1x32x32xf32>
    %327 = vector.shape_cast %326 : vector<1x32x32xf32> to vector<32x32xf32>
    %cst_136 = arith.constant dense<0.000000e+00> : vector<16x32xf32>
    %328 = tpu.matmul %325, %327, %cst_136 {dimension_numbers = #tpu.dot_dimension_numbers<[1], [0], [0], [1], [0, 0, 1, 1], [], []>} : vector<16x32xf32>, vector<32x32xf32>, vector<16x32xf32> -> vector<16x32xf32>
    %c1_137 = arith.constant 1 : index
    %c0_138 = arith.constant 0 : index
    %c0_139 = arith.constant 0 : index
    %329 = vector.load %arg8[%c1_137, %c0_138, %c0_139] : memref<2x1x32xf32, #tpu.memory_space<vmem>>, vector<1x1x32xf32>
    %330 = vector.shape_cast %329 : vector<1x1x32xf32> to vector<1x32xf32>
    %331 = vector.broadcast %330 : vector<1x32xf32> to vector<16x32xf32>
    %332 = arith.addf %328, %331 : vector<16x32xf32>
    %333 = arith.addf %332, %207 : vector<16x32xf32>
    %334 = vector.extract_strided_slice %209 {offsets = [0, 0], sizes = [1, 32], strides = [1, 1]} : vector<4x32xf32> to vector<1x32xf32>
    %335 = vector.extract_strided_slice %209 {offsets = [1, 0], sizes = [1, 32], strides = [1, 1]} : vector<4x32xf32> to vector<1x32xf32>
    %cst_140 = arith.constant dense<0.000000e+00> : vector<16xf32>
    %336 = vector.multi_reduction <add>, %333, %cst_140 [1] : vector<16x32xf32> to vector<16xf32>
    %337 = vector.shape_cast %336 : vector<16xf32> to vector<16x1xf32>
    %cst_141 = arith.constant 3.200000e+01 : f32
    %338 = vector.broadcast %cst_141 : f32 to vector<16x1xf32>
    %339 = arith.divf %337, %338 : vector<16x1xf32>
    %340 = vector.broadcast %339 : vector<16x1xf32> to vector<16x32xf32>
    %341 = arith.subf %333, %340 : vector<16x32xf32>
    %342 = arith.mulf %341, %341 : vector<16x32xf32>
    %cst_142 = arith.constant dense<0.000000e+00> : vector<16xf32>
    %343 = vector.multi_reduction <add>, %342, %cst_142 [1] : vector<16x32xf32> to vector<16xf32>
    %344 = vector.shape_cast %343 : vector<16xf32> to vector<16x1xf32>
    %cst_143 = arith.constant 3.200000e+01 : f32
    %345 = vector.broadcast %cst_143 : f32 to vector<16x1xf32>
    %346 = arith.divf %344, %345 : vector<16x1xf32>
    %347 = vector.broadcast %339 : vector<16x1xf32> to vector<16x32xf32>
    %348 = arith.subf %333, %347 : vector<16x32xf32>
    %cst_144 = arith.constant 9.99999974E-6 : f32
    %349 = vector.broadcast %cst_144 : f32 to vector<16x1xf32>
    %350 = arith.addf %346, %349 : vector<16x1xf32>
    %351 = math.rsqrt %350 : vector<16x1xf32>
    %352 = vector.broadcast %351 : vector<16x1xf32> to vector<16x32xf32>
    %353 = arith.mulf %348, %352 : vector<16x32xf32>
    %354 = vector.broadcast %334 : vector<1x32xf32> to vector<16x32xf32>
    %355 = arith.mulf %353, %354 : vector<16x32xf32>
    %356 = vector.broadcast %335 : vector<1x32xf32> to vector<16x32xf32>
    %357 = arith.addf %355, %356 : vector<16x32xf32>
    %c1_145 = arith.constant 1 : index
    %c0_146 = arith.constant 0 : index
    %c0_147 = arith.constant 0 : index
    %358 = vector.load %arg9[%c1_145, %c0_146, %c0_147] : memref<2x32x64xf32, #tpu.memory_space<vmem>>, vector<1x32x64xf32>
    %359 = vector.shape_cast %358 : vector<1x32x64xf32> to vector<32x64xf32>
    %cst_148 = arith.constant dense<0.000000e+00> : vector<16x64xf32>
    %360 = tpu.matmul %357, %359, %cst_148 {dimension_numbers = #tpu.dot_dimension_numbers<[1], [0], [0], [1], [0, 0, 1, 1], [], []>} : vector<16x32xf32>, vector<32x64xf32>, vector<16x64xf32> -> vector<16x64xf32>
    %c1_149 = arith.constant 1 : index
    %c0_150 = arith.constant 0 : index
    %c0_151 = arith.constant 0 : index
    %361 = vector.load %arg10[%c1_149, %c0_150, %c0_151] : memref<2x1x64xf32, #tpu.memory_space<vmem>>, vector<1x1x64xf32>
    %362 = vector.shape_cast %361 : vector<1x1x64xf32> to vector<1x64xf32>
    %363 = vector.broadcast %362 : vector<1x64xf32> to vector<16x64xf32>
    %364 = arith.addf %360, %363 : vector<16x64xf32>
    %cst_152 = arith.constant 0.000000e+00 : f32
    %365 = vector.broadcast %cst_152 : f32 to vector<16x64xf32>
    %366 = arith.maximumf %364, %365 : vector<16x64xf32>
    %c1_153 = arith.constant 1 : index
    %c0_154 = arith.constant 0 : index
    %c0_155 = arith.constant 0 : index
    %367 = vector.load %arg11[%c1_153, %c0_154, %c0_155] : memref<2x64x32xf32, #tpu.memory_space<vmem>>, vector<1x64x32xf32>
    %368 = vector.shape_cast %367 : vector<1x64x32xf32> to vector<64x32xf32>
    %cst_156 = arith.constant dense<0.000000e+00> : vector<16x32xf32>
    %369 = tpu.matmul %366, %368, %cst_156 {dimension_numbers = #tpu.dot_dimension_numbers<[1], [0], [0], [1], [0, 0, 1, 1], [], []>} : vector<16x64xf32>, vector<64x32xf32>, vector<16x32xf32> -> vector<16x32xf32>
    %c1_157 = arith.constant 1 : index
    %c0_158 = arith.constant 0 : index
    %c0_159 = arith.constant 0 : index
    %370 = vector.load %arg12[%c1_157, %c0_158, %c0_159] : memref<2x1x32xf32, #tpu.memory_space<vmem>>, vector<1x1x32xf32>
    %371 = vector.shape_cast %370 : vector<1x1x32xf32> to vector<1x32xf32>
    %372 = vector.broadcast %371 : vector<1x32xf32> to vector<16x32xf32>
    %373 = arith.addf %369, %372 : vector<16x32xf32>
    %374 = arith.addf %373, %357 : vector<16x32xf32>
    %375 = vector.extract_strided_slice %209 {offsets = [2, 0], sizes = [1, 32], strides = [1, 1]} : vector<4x32xf32> to vector<1x32xf32>
    %376 = vector.extract_strided_slice %209 {offsets = [3, 0], sizes = [1, 32], strides = [1, 1]} : vector<4x32xf32> to vector<1x32xf32>
    %cst_160 = arith.constant dense<0.000000e+00> : vector<16xf32>
    %377 = vector.multi_reduction <add>, %374, %cst_160 [1] : vector<16x32xf32> to vector<16xf32>
    %378 = vector.shape_cast %377 : vector<16xf32> to vector<16x1xf32>
    %cst_161 = arith.constant 3.200000e+01 : f32
    %379 = vector.broadcast %cst_161 : f32 to vector<16x1xf32>
    %380 = arith.divf %378, %379 : vector<16x1xf32>
    %381 = vector.broadcast %380 : vector<16x1xf32> to vector<16x32xf32>
    %382 = arith.subf %374, %381 : vector<16x32xf32>
    %383 = arith.mulf %382, %382 : vector<16x32xf32>
    %cst_162 = arith.constant dense<0.000000e+00> : vector<16xf32>
    %384 = vector.multi_reduction <add>, %383, %cst_162 [1] : vector<16x32xf32> to vector<16xf32>
    %385 = vector.shape_cast %384 : vector<16xf32> to vector<16x1xf32>
    %cst_163 = arith.constant 3.200000e+01 : f32
    %386 = vector.broadcast %cst_163 : f32 to vector<16x1xf32>
    %387 = arith.divf %385, %386 : vector<16x1xf32>
    %388 = vector.broadcast %380 : vector<16x1xf32> to vector<16x32xf32>
    %389 = arith.subf %374, %388 : vector<16x32xf32>
    %cst_164 = arith.constant 9.99999974E-6 : f32
    %390 = vector.broadcast %cst_164 : f32 to vector<16x1xf32>
    %391 = arith.addf %387, %390 : vector<16x1xf32>
    %392 = math.rsqrt %391 : vector<16x1xf32>
    %393 = vector.broadcast %392 : vector<16x1xf32> to vector<16x32xf32>
    %394 = arith.mulf %389, %393 : vector<16x32xf32>
    %395 = vector.broadcast %375 : vector<1x32xf32> to vector<16x32xf32>
    %396 = arith.mulf %394, %395 : vector<16x32xf32>
    %397 = vector.broadcast %376 : vector<1x32xf32> to vector<16x32xf32>
    %398 = arith.addf %396, %397 : vector<16x32xf32>
    %c0_165 = arith.constant 0 : index
    %c0_166 = arith.constant 0 : index
    %399 = vector.load %arg14[%c0_165, %c0_166] : memref<16x32xf32, #tpu.memory_space<vmem>>, vector<16x32xf32>
    tpu.vector_store %arg14[%c0_165, %c0_166], %398 {strides = array<i32>} : memref<16x32xf32, #tpu.memory_space<vmem>>, vector<16x32xf32>,
    return
  }
  func.func @transform_0(%arg0: i32) -> (i32, i32) {
    %c0_i32 = arith.constant 0 : i32
    %c0_i32_0 = arith.constant 0 : i32
    %c0_i32_1 = arith.constant 0 : i32
    return %c0_i32, %c0_i32_0 : i32, i32
  }
  func.func @transform_1(%arg0: i32) -> (i32, i32) {
    %c0_i32 = arith.constant 0 : i32
    %c0_i32_0 = arith.constant 0 : i32
    %c0_i32_1 = arith.constant 0 : i32
    return %c0_i32, %c0_i32_0 : i32, i32
  }
  func.func @transform_2(%arg0: i32) -> (i32, i32) {
    %c0_i32 = arith.constant 0 : i32
    %c0_i32_0 = arith.constant 0 : i32
    %c0_i32_1 = arith.constant 0 : i32
    return %c0_i32, %c0_i32_0 : i32, i32
  }
  func.func @transform_3(%arg0: i32) -> (i32, i32) {
    %c0_i32 = arith.constant 0 : i32
    %c0_i32_0 = arith.constant 0 : i32
    %c0_i32_1 = arith.constant 0 : i32
    return %c0_i32, %c0_i32_0 : i32, i32
  }
  func.func @transform_4(%arg0: i32) -> (i32, i32, i32) {
    %c0_i32 = arith.constant 0 : i32
    %c0_i32_0 = arith.constant 0 : i32
    %c0_i32_1 = arith.constant 0 : i32
    %c0_i32_2 = arith.constant 0 : i32
    return %c0_i32, %c0_i32_0, %c0_i32_1 : i32, i32, i32
  }
  func.func @transform_5(%arg0: i32) -> (i32, i32, i32) {
    %c0_i32 = arith.constant 0 : i32
    %c0_i32_0 = arith.constant 0 : i32
    %c0_i32_1 = arith.constant 0 : i32
    %c0_i32_2 = arith.constant 0 : i32
    return %c0_i32, %c0_i32_0, %c0_i32_1 : i32, i32, i32
  }
  func.func @transform_6(%arg0: i32) -> (i32, i32, i32) {
    %c0_i32 = arith.constant 0 : i32
    %c0_i32_0 = arith.constant 0 : i32
    %c0_i32_1 = arith.constant 0 : i32
    %c0_i32_2 = arith.constant 0 : i32
    return %c0_i32, %c0_i32_0, %c0_i32_1 : i32, i32, i32
  }
  func.func @transform_7(%arg0: i32) -> (i32, i32, i32) {
    %c0_i32 = arith.constant 0 : i32
    %c0_i32_0 = arith.constant 0 : i32
    %c0_i32_1 = arith.constant 0 : i32
    %c0_i32_2 = arith.constant 0 : i32
    return %c0_i32, %c0_i32_0, %c0_i32_1 : i32, i32, i32
  }
  func.func @transform_8(%arg0: i32) -> (i32, i32, i32) {
    %c0_i32 = arith.constant 0 : i32
    %c0_i32_0 = arith.constant 0 : i32
    %c0_i32_1 = arith.constant 0 : i32
    %c0_i32_2 = arith.constant 0 : i32
    return %c0_i32, %c0_i32_0, %c0_i32_1 : i32, i32, i32
  }
  func.func @transform_9(%arg0: i32) -> (i32, i32, i32) {
    %c0_i32 = arith.constant 0 : i32
    %c0_i32_0 = arith.constant 0 : i32
    %c0_i32_1 = arith.constant 0 : i32
    %c0_i32_2 = arith.constant 0 : i32
    return %c0_i32, %c0_i32_0, %c0_i32_1 : i32, i32, i32
  }
  func.func @transform_10(%arg0: i32) -> (i32, i32, i32) {
    %c0_i32 = arith.constant 0 : i32
    %c0_i32_0 = arith.constant 0 : i32
    %c0_i32_1 = arith.constant 0 : i32
    %c0_i32_2 = arith.constant 0 : i32
    return %c0_i32, %c0_i32_0, %c0_i32_1 : i32, i32, i32
  }
  func.func @transform_11(%arg0: i32) -> (i32, i32, i32) {
    %c0_i32 = arith.constant 0 : i32
    %c0_i32_0 = arith.constant 0 : i32
    %c0_i32_1 = arith.constant 0 : i32
    %c0_i32_2 = arith.constant 0 : i32
    return %c0_i32, %c0_i32_0, %c0_i32_1 : i32, i32, i32
  }
  func.func @transform_12(%arg0: i32) -> (i32, i32, i32) {
    %c0_i32 = arith.constant 0 : i32
    %c0_i32_0 = arith.constant 0 : i32
    %c0_i32_1 = arith.constant 0 : i32
    %c0_i32_2 = arith.constant 0 : i32
    return %c0_i32, %c0_i32_0, %c0_i32_1 : i32, i32, i32
  }
  func.func @transform_13(%arg0: i32) -> (i32, i32) {
    %c0_i32 = arith.constant 0 : i32
    %c0_i32_0 = arith.constant 0 : i32
    %c0_i32_1 = arith.constant 0 : i32
    return %c0_i32, %c0_i32_0 : i32, i32
  }
  func.func @transform_14(%arg0: i32) -> (i32, i32, i32, i32) {
    %c0_i32 = arith.constant 0 : i32
    %c0_i32_0 = arith.constant 0 : i32
    %c0_i32_1 = arith.constant 0 : i32
    %c0_i32_2 = arith.constant 0 : i32
    %c0_i32_3 = arith.constant 0 : i32
    return %c0_i32, %c0_i32_0, %c0_i32_1, %c0_i32_2 : i32, i32, i32, i32
  }
}

</mosaic_0001>

<llo_original>
// kernel: transformer_encoder.1
$region0: #{transformer_encoder.1}
  #allocation0 [shape = 'u32[]', space=smem, size = 0x4, offset = 0x4, fixed_abs, tag = 'smem constant byte address 0x4 - core index']
  #allocation1 [shape = 'u32[72,128]{1,0:T(1,128)}', space=vmem, size = 0x9000, scoped, tag = 'internal scratch']
  %s0 = inlined_call_operand.vmem [shape: s32[2,8], index: 0, kind: input, shape index: {}]
  %s1 = inlined_call_operand.vmem [shape: s32[16,1], index: 1, kind: input, shape index: {}]
  %s2 = inlined_call_operand.vmem [shape: f32[16,32], index: 2, kind: input, shape index: {}]
  %s3 = inlined_call_operand.hbm [shape: f32[8,32], index: 3, kind: input, shape index: {}]
  %s4 = inlined_call_operand.vmem [shape: f32[2,32,96], index: 4, kind: input, shape index: {}]
  %s5 = inlined_call_operand.vmem [shape: f32[2,1,96], index: 5, kind: input, shape index: {}]
  %s6 = inlined_call_operand.vmem [shape: f32[2,32,32], index: 6, kind: input, shape index: {}]
  %s7 = inlined_call_operand.hbm [shape: f32[2,1,32], index: 7, kind: input, shape index: {}]
  %s8 = inlined_call_operand.vmem [shape: f32[2,32,64], index: 8, kind: input, shape index: {}]
  %s9 = inlined_call_operand.hbm [shape: f32[2,1,64], index: 9, kind: input, shape index: {}]
  %s10 = inlined_call_operand.vmem [shape: f32[2,64,32], index: 10, kind: input, shape index: {}]
  %s11 = inlined_call_operand.hbm [shape: f32[2,1,32], index: 11, kind: input, shape index: {}]
  %s12 = inlined_call_operand.hbm [shape: f32[2,4,32], index: 12, kind: input, shape index: {}]
  %s13 = inlined_call_operand.hbm [shape: f32[16,32], index: 13, kind: output, shape index: {0}]
  %s14 = inlined_call_operand.vmem [shape: f32[8,2,8,8], index: 14, kind: output, shape index: {1}]
  %15 = xla_tuple %s13, %s14
  %s16 = sld [smem:[#allocation0]]
  $region90: #{transformer_encoder.1} parent=0
    _
  %s18 = ssub.s32 1, %s16
  %s19 = scalar_select 0, %s18, %s16
  $region1: #{transformer_encoder.1} parent=0
    #allocation2 [shape = 'u8[4096]{0}', space=vmem, size = 0x1000, scoped, tag = 'input window, operand 3, single buffered']
    #allocation3 [shape = 's32[1]{0}', space=sflag, size = 0x4, scoped, tag = 'scoped memory for transformer_encoder.1']
    #allocation4 [shape = 's32[1]{0}', space=sflag, size = 0x4, scoped, tag = 'scoped memory for transformer_encoder.1']
    #allocation5 [shape = 'u8[1024]{0}', space=vmem, size = 0x400, scoped, tag = 'input window, operand 7, single buffered']
    #allocation6 [shape = 's32[1]{0}', space=sflag, size = 0x4, scoped, tag = 'scoped memory for transformer_encoder.1']
    #allocation7 [shape = 'u8[1024]{0}', space=vmem, size = 0x400, scoped, tag = 'input window, operand 9, single buffered']
    #allocation8 [shape = 'u8[1024]{0}', space=vmem, size = 0x400, scoped, tag = 'input window, operand 11, single buffered']
    #allocation9 [shape = 's32[1]{0}', space=sflag, size = 0x4, scoped, tag = 'scoped memory for transformer_encoder.1']
    #allocation10 [shape = 'u8[4096]{0}', space=vmem, size = 0x1000, scoped, tag = 'input window, operand 12, single buffered']
    #allocation11 [shape = 'u8[8192]{0}', space=vmem, size = 0x2000, scoped, tag = 'output window, operand 0, single buffered']
    %20 = vsyncpa [#allocation3], 0
    %21 = vsyncpa [#allocation6], 0
    %22 = vsyncpa [#allocation9], 0
    %23 = vsyncpa [#allocation4], 0
    // Predicated region
    $region2: #{transformer_encoder.1} parent=1 // pred_check
      _
    $region3: #{transformer_encoder.1} parent=1 // pred_check_branch
      %25 = sbr.rel (0) target = $region5
    $region4: #{transformer_encoder.1} parent=1 // pred_region
      _
    $region5: #{transformer_encoder.1} parent=1 // pred_fallthru
      _
    // Predicated region
    $region6: #{transformer_encoder.1} parent=1 // pred_check
      _
    $region7: #{transformer_encoder.1} parent=1 // pred_check_branch
      %27 = sbr.rel (0) target = $region9
    $region8: #{transformer_encoder.1} parent=1 // pred_region
      _
    $region9: #{transformer_encoder.1} parent=1 // pred_fallthru
      _
    // Predicated region
    $region10: #{transformer_encoder.1} parent=1 // pred_check
      _
    $region11: #{transformer_encoder.1} parent=1 // pred_check_branch
      %29 = sbr.rel (0) target = $region13
    $region12: #{transformer_encoder.1} parent=1 // pred_region
      _
    $region13: #{transformer_encoder.1} parent=1 // pred_fallthru
      _
    // Predicated region
    $region14: #{transformer_encoder.1} parent=1 // pred_check
      _
    $region15: #{transformer_encoder.1} parent=1 // pred_check_branch
      %31 = sbr.rel (0) target = $region17
    $region16: #{transformer_encoder.1} parent=1 // pred_region
      %33 = vsyncadd [#allocation3], 0
      %s35 = sshll.u32 %s3, 4
      %s36 = int_to_ptr.hbm [resolvable:$true] %s35
      %s37 = sshll.u32 [#allocation2], 4
      %s38 = int_to_ptr.vmem [resolvable:$true] %s37
      %40 = dma.hbm_to_vmem [thread:$0]  %s36, 128, %s38, [#allocation3]
    $region17: #{transformer_encoder.1} parent=1 // pred_fallthru
      _
    // Predicated region
    $region18: #{transformer_encoder.1} parent=1 // pred_check
      _
    $region19: #{transformer_encoder.1} parent=1 // pred_check_branch
      %42 = sbr.rel (0) target = $region21
    $region20: #{transformer_encoder.1} parent=1 // pred_region
      _
    $region21: #{transformer_encoder.1} parent=1 // pred_fallthru
      _
    // Predicated region
    $region22: #{transformer_encoder.1} parent=1 // pred_check
      _
    $region23: #{transformer_encoder.1} parent=1 // pred_check_branch
      %44 = sbr.rel (0) target = $region25
    $region24: #{transformer_encoder.1} parent=1 // pred_region
      _
    $region25: #{transformer_encoder.1} parent=1 // pred_fallthru
      _
    // Predicated region
    $region26: #{transformer_encoder.1} parent=1 // pred_check
      _
    $region27: #{transformer_encoder.1} parent=1 // pred_check_branch
      %46 = sbr.rel (0) target = $region29
    $region28: #{transformer_encoder.1} parent=1 // pred_region
      _
    $region29: #{transformer_encoder.1} parent=1 // pred_fallthru
      _
    // Predicated region
    $region30: #{transformer_encoder.1} parent=1 // pred_check
      _
    $region31: #{transformer_encoder.1} parent=1 // pred_check_branch
      %48 = sbr.rel (0) target = $region33
    $region32: #{transformer_encoder.1} parent=1 // pred_region
      %50 = vsyncadd [#allocation6], 0
      %s51 = sshll.u32 %s7, 4
      %s52 = int_to_ptr.hbm [resolvable:$true] %s51
      %s53 = sshll.u32 [#allocation5], 4
      %s54 = int_to_ptr.vmem [resolvable:$true] %s53
      %59 = dma.hbm_to_vmem [thread:$0]  %s52, 32, %s54, [#allocation6], 16, 16, 1
    $region33: #{transformer_encoder.1} parent=1 // pred_fallthru
      _
    // Predicated region
    $region34: #{transformer_encoder.1} parent=1 // pred_check
      _
    $region35: #{transformer_encoder.1} parent=1 // pred_check_branch
      %61 = sbr.rel (0) target = $region37
    $region36: #{transformer_encoder.1} parent=1 // pred_region
      _
    $region37: #{transformer_encoder.1} parent=1 // pred_fallthru
      _
    // Predicated region
    $region38: #{transformer_encoder.1} parent=1 // pred_check
      _
    $region39: #{transformer_encoder.1} parent=1 // pred_check_branch
      %63 = sbr.rel (0) target = $region41
    $region40: #{transformer_encoder.1} parent=1 // pred_region
      %65 = vsyncadd [#allocation6], 0
      %s66 = sshll.u32 %s9, 4
      %s67 = int_to_ptr.hbm [resolvable:$true] %s66
      %s68 = sshll.u32 [#allocation7], 4
      %s69 = int_to_ptr.vmem [resolvable:$true] %s68
      %74 = dma.hbm_to_vmem [thread:$0]  %s67, 32, %s69, [#allocation6], 16, 16, 1
    $region41: #{transformer_encoder.1} parent=1 // pred_fallthru
      _
    // Predicated region
    $region42: #{transformer_encoder.1} parent=1 // pred_check
      _
    $region43: #{transformer_encoder.1} parent=1 // pred_check_branch
      %76 = sbr.rel (0) target = $region45
    $region44: #{transformer_encoder.1} parent=1 // pred_region
      _
    $region45: #{transformer_encoder.1} parent=1 // pred_fallthru
      _
    // Predicated region
    $region46: #{transformer_encoder.1} parent=1 // pred_check
      _
    $region47: #{transformer_encoder.1} parent=1 // pred_check_branch
      %78 = sbr.rel (0) target = $region49
    $region48: #{transformer_encoder.1} parent=1 // pred_region
      %80 = vsyncadd [#allocation9], 0
      %s81 = sshll.u32 %s11, 4
      %s82 = int_to_ptr.hbm [resolvable:$true] %s81
      %s83 = sshll.u32 [#allocation8], 4
      %s84 = int_to_ptr.vmem [resolvable:$true] %s83
      %89 = dma.hbm_to_vmem [thread:$0]  %s82, 32, %s84, [#allocation9], 16, 16, 1
    $region49: #{transformer_encoder.1} parent=1 // pred_fallthru
      _
    // Predicated region
    $region50: #{transformer_encoder.1} parent=1 // pred_check
      _
    $region51: #{transformer_encoder.1} parent=1 // pred_check_branch
      %91 = sbr.rel (0) target = $region53
    $region52: #{transformer_encoder.1} parent=1 // pred_region
      %93 = vsyncadd [#allocation9], 0
      %s94 = sshll.u32 %s12, 4
      %s95 = int_to_ptr.hbm [resolvable:$true] %s94
      %s96 = sshll.u32 [#allocation10], 4
      %s97 = int_to_ptr.vmem [resolvable:$true] %s96
      %102 = dma.hbm_to_vmem [thread:$0]  %s95, 128, %s97, [#allocation9], 64, 64, 4
    $region53: #{transformer_encoder.1} parent=1 // pred_fallthru
      _
    // Predicated region
    $region54: #{transformer_encoder.1} parent=1 // pred_check
      _
    $region55: #{transformer_encoder.1} parent=1 // pred_check_branch
      %104 = sbr.rel (0) target = $region57
    $region56: #{transformer_encoder.1} parent=1 // pred_region
      %106 = dma.done [#allocation3], 128
    $region57: #{transformer_encoder.1} parent=1 // pred_fallthru
      _
    // Predicated region
    $region58: #{transformer_encoder.1} parent=1 // pred_check
      _
    $region59: #{transformer_encoder.1} parent=1 // pred_check_branch
      %108 = sbr.rel (0) target = $region61
    $region60: #{transformer_encoder.1} parent=1 // pred_region
      %110 = dma.done [#allocation6], 32
    $region61: #{transformer_encoder.1} parent=1 // pred_fallthru
      _
    // Predicated region
    $region62: #{transformer_encoder.1} parent=1 // pred_check
      _
    $region63: #{transformer_encoder.1} parent=1 // pred_check_branch
      %112 = sbr.rel (0) target = $region65
    $region64: #{transformer_encoder.1} parent=1 // pred_region
      %114 = dma.done [#allocation6], 32
    $region65: #{transformer_encoder.1} parent=1 // pred_fallthru
      _
    // Predicated region
    $region66: #{transformer_encoder.1} parent=1 // pred_check
      _
    $region67: #{transformer_encoder.1} parent=1 // pred_check_branch
      %116 = sbr.rel (0) target = $region69
    $region68: #{transformer_encoder.1} parent=1 // pred_region
      %118 = dma.done [#allocation9], 32
    $region69: #{transformer_encoder.1} parent=1 // pred_fallthru
      _
    // Predicated region
    $region70: #{transformer_encoder.1} parent=1 // pred_check
      _
    $region71: #{transformer_encoder.1} parent=1 // pred_check_branch
      %120 = sbr.rel (0) target = $region73
    $region72: #{transformer_encoder.1} parent=1 // pred_region
      %122 = dma.done [#allocation9], 128
    $region73: #{transformer_encoder.1} parent=1 // pred_fallthru
      _
    %v123 = vld [vmem:[%s1] sm:$0xff]
    %v124 = vld [vmem:[%s1 + $0x8] sm:$0xff]
    %v125 = vlaneseq
    %v126 = vand.u32 %v125, 127
    %127 = vset.pattern.permute.xlu0 0
    %128 = vperm.xlu0 %127, %v123
    %v129 = vpop.permute.xlu0 %128
    %130 = vset.pattern.permute.xlu0 0
    %131 = vperm.xlu0 %130, %v124
    %v132 = vpop.permute.xlu0 %131
    %vm133 = vcmp.eq.s32.totalorder %v129, %v126
    %vm134 = vcmp.eq.s32.totalorder %v132, %v126
    %v135 = vsel %vm133, 1, 0
    %v136 = vsel %vm134, 1, 0
    %v137 = vcvt.s32.f32 %v135
    %v138 = vcvt.s32.f32 %v136
    %v139 = vld [vmem:[%s2] sm:$0xff]
    %v140 = vld [vmem:[%s2 + $0x8] sm:$0xff]
    %vm141 = vcmask 130048
    %v143 = vsel %vm141, %v137, 0
    %v146 = vsel %vm141, %v138, 0
    %148 = vmatpush.msra.mxu0 0.0
    %149 = vmatpush.msra.mxu0 0.0
    %150 = vmatpush.msra.mxu0 0.0
    %151 = vmatpush.msra.mxu0 0.0
    %152 = vmatpush.msra.mxu0 0.0
    %153 = vmatpush.msra.mxu0 0.0
    %154 = vmatpush.msra.mxu0 0.0
    %155 = vmatpush.msra.mxu0 0.0
    %156 = vmatpush.msra.mxu0 0.0
    %157 = vmatpush.msra.mxu0 0.0
    %158 = vmatpush.msra.mxu0 0.0
    %159 = vmatpush.msra.mxu0 0.0
    %160 = vmatpush.msra.mxu0 0.0
    %161 = vmatpush.msra.mxu0 0.0
    %162 = vmatpush.msra.mxu0 %v140
    %163 = vmatpush.msra.mxu0 %v139
    %164 = vmatmul.f32.gmra.mxu0 %v143
    %v165 = vpop.f32.mrf.mxu0
    %v166 = vadd.f32 0.0, %v165
    %167 = vmatmul.f32.gmra.mxu0 %v146
    %v168 = vpop.f32.mrf.mxu0
    %v169 = vadd.f32 0.0, %v168
    %170 = vdwg.mxu0
    %v171 = vld [vmem:[#allocation2] sm:$0xff]
    %v172 = vmul.f32 %v166, 5.656854
    %v173 = vmul.f32 %v169, 5.656854
    %v174 = vadd.f32 %v172, %v171
    %v175 = vadd.f32 %v173, %v171
    %v176 = vld [vmem:[%s0] sm:$0x3]
    %v177 = vrot.slane %v176, 1
    %vm178 = vcmp.eq.s32.totalorder %v176, 0
    %vm179 = vcmp.eq.s32.totalorder %v177, 0
    %v180 = vld [vmem:[#allocation10] sm:$0xf]
    %v181 = vld [vmem:[%s4] sm:$0xff]
    %v182 = vld [vmem:[%s4 + $0x8] sm:$0xff]
    %v183 = vld [vmem:[%s4 + $0x10] sm:$0xff]
    %v184 = vld [vmem:[%s4 + $0x18] sm:$0xff]
    %v185 = vld [vmem:[%s5] sm:$0x1]
    %v187 = vperm.slane %v185, 0
    %vm189 = vcmask 261120
    %v191 = vsel %vm189, %v174, 0
    %v194 = vsel %vm189, %v175, 0
    %196 = vmatpush.msra.mxu0 0.0
    %197 = vmatpush.msra.mxu0 0.0
    %198 = vmatpush.msra.mxu0 0.0
    %199 = vmatpush.msra.mxu0 0.0
    %200 = vmatpush.msra.mxu0 0.0
    %201 = vmatpush.msra.mxu0 0.0
    %202 = vmatpush.msra.mxu0 0.0
    %203 = vmatpush.msra.mxu0 0.0
    %204 = vmatpush.msra.mxu0 0.0
    %205 = vmatpush.msra.mxu0 0.0
    %206 = vmatpush.msra.mxu0 0.0
    %207 = vmatpush.msra.mxu0 0.0
    %208 = vmatpush.msra.mxu0 %v184
    %209 = vmatpush.msra.mxu0 %v183
    %210 = vmatpush.msra.mxu0 %v182
    %211 = vmatpush.msra.mxu0 %v181
    %212 = vmatmul.f32.gmra.mxu0 %v191
    %v213 = vpop.f32.mrf.mxu0
    %v214 = vadd.f32 %v187, %v213
    %215 = vmatmul.f32.gmra.mxu0 %v194
    %v216 = vpop.f32.mrf.mxu0
    %v217 = vadd.f32 %v187, %v216
    %218 = vdwg.mxu0
    %220 = vrot.lane.b32.xlu0 %v214, 96
    %v221 = vpop.permute.xlu0 %220
    %vm222 = vcmask 64512
    %v223 = vsel %vm222, %v214, 0
    %v225 = vsel %vm222, %v221, 0
    %227 = vmatpush.xpose.msra.mxu0 0.0
    %228 = vmatpush.xpose.msra.mxu0 0.0
    %229 = vmatpush.xpose.msra.mxu0 0.0
    %230 = vmatpush.xpose.msra.mxu0 0.0
    %231 = vmatpush.xpose.msra.mxu0 0.0
    %232 = vmatpush.xpose.msra.mxu0 0.0
    %233 = vmatpush.xpose.msra.mxu0 0.0
    %234 = vmatpush.xpose.msra.mxu0 0.0
    %235 = vmatpush.xpose.msra.mxu0 0.0
    %236 = vmatpush.xpose.msra.mxu0 0.0
    %237 = vmatpush.xpose.msra.mxu0 0.0
    %238 = vmatpush.xpose.msra.mxu0 0.0
    %239 = vmatpush.xpose.msra.mxu0 0.0
    %240 = vmatpush.xpose.msra.mxu0 0.0
    %241 = vmatpush.xpose.msra.mxu0 0.0
    %242 = vmatpush.xpose.msra.mxu0 %v225
    %243 = vmatmul.f32.gmra.mxu0 %v223
    %v244 = vpop.f32.mrf.mxu0
    %v245 = vadd.f32 0.0, %v244
    %246 = vdwg.mxu0
    %248 = vrot.lane.b32.xlu0 %v217, 96
    %v249 = vpop.permute.xlu0 %248
    %v250 = vsel %vm222, %v217, 0
    %v252 = vsel %vm222, %v249, 0
    %254 = vmatpush.xpose.msra.mxu0 0.0
    %255 = vmatpush.xpose.msra.mxu0 0.0
    %256 = vmatpush.xpose.msra.mxu0 0.0
    %257 = vmatpush.xpose.msra.mxu0 0.0
    %258 = vmatpush.xpose.msra.mxu0 0.0
    %259 = vmatpush.xpose.msra.mxu0 0.0
    %260 = vmatpush.xpose.msra.mxu0 0.0
    %261 = vmatpush.xpose.msra.mxu0 0.0
    %262 = vmatpush.xpose.msra.mxu0 0.0
    %263 = vmatpush.xpose.msra.mxu0 0.0
    %264 = vmatpush.xpose.msra.mxu0 0.0
    %265 = vmatpush.xpose.msra.mxu0 0.0
    %266 = vmatpush.xpose.msra.mxu0 0.0
    %267 = vmatpush.xpose.msra.mxu0 0.0
    %268 = vmatpush.xpose.msra.mxu0 0.0
    %269 = vmatpush.xpose.msra.mxu0 %v252
    %270 = vmatmul.f32.gmra.mxu0 %v250
    %v271 = vpop.f32.mrf.mxu0
    %v272 = vadd.f32 0.0, %v271
    %273 = vdwg.mxu0
    %v274 = vmul.f32 %v245, 0.35355338
    %v275 = vmul.f32 %v272, 0.35355338
    %v276 = vsel %vm178, 1, 0
    %v277 = vsel %vm179, 1, 0
    %v278 = vperm.slane %v276, 0
    %v279 = vperm.slane %v277, 0
    %vm280 = vcmp.eq.s32.totalorder %v278, 1
    %vm281 = vcmp.eq.s32.totalorder %v279, 1
    %v282 = vsel %vm280, -10000.0, %v274
    %v283 = vsel %vm281, -10000.0, %v275
    %v284 = vsel %vm222, %v282, -inf
    %285 = vmax.xlane.f32.xlu0 %v284
    %v286 = vpop.xlane.xlu0 %285
    %v287 = vsel %vm222, %v283, -inf
    %288 = vmax.xlane.f32.xlu0 %v287
    %v289 = vpop.xlane.xlu0 %288
    %v290 = vsub.f32 %v282, %v286
    %v291 = vsub.f32 %v283, %v289
    %v292 = vmul.f32 %v290, 1.442695
    %v293 = vpow.pop %v292
    %v294 = vmul.f32 %v291, 1.442695
    %v295 = vpow.pop %v294
    %v296 = vsel %vm222, %v293, 0.0
    %297 = vadd.xlane.f32.xlu0 %v296
    %v298 = vpop.xlane.xlu0 %297
    %v299 = vsel %vm222, %v295, 0.0
    %300 = vadd.xlane.f32.xlu0 %v299
    %v301 = vpop.xlane.xlu0 %300
    %v302 = vrcp.pop %v298
    %v303 = vmul.f32 %v298, %v302
    %v304 = vsub.f32 1.0, %v303
    %v305 = vmul.f32 %v302, %v304
    %v306 = vadd.f32 %v302, %v305
    %vm307 = vweird.f32 %v298
    %vm308 = vweird.f32 %v302
    %vm309 = vmor %vm307, %vm308
    %v310 = vsel %vm309, %v302, %v306
    %v311 = vand.u32 2147483647, %v298
    %vm312 = vcmp.eq.f32.partialorder %v311, 8.507059e+37
    %v313 = vand.u32 %v298, 2147483648
    %v314 = vor.u32 1.1754944e-38, %v313
    %v315 = vsel %vm312, %v314, %v310
    %v316 = vmul.f32 %v293, %v315
    %v317 = vrcp.pop %v301
    %v318 = vmul.f32 %v301, %v317
    %v319 = vsub.f32 1.0, %v318
    %v320 = vmul.f32 %v317, %v319
    %v321 = vadd.f32 %v317, %v320
    %vm322 = vweird.f32 %v301
    %vm323 = vweird.f32 %v317
    %vm324 = vmor %vm322, %vm323
    %v325 = vsel %vm324, %v317, %v321
    %v326 = vand.u32 2147483647, %v301
    %vm327 = vcmp.eq.f32.partialorder %v326, 8.507059e+37
    %v328 = vand.u32 %v301, 2147483648
    %v329 = vor.u32 1.1754944e-38, %v328
    %v330 = vsel %vm327, %v329, %v325
    %v331 = vmul.f32 %v295, %v330
    %332 = vst.msk [vmem:[%s14] sm:$0xff] %vm222, %v316
    %333 = vst.msk [vmem:[%s14 + $0x8] sm:$0xff] %vm222, %v331
    %334 = vrot.lane.b32.xlu0 %v214, 64
    %v335 = vpop.permute.xlu0 %334
    %v338 = vsel %vm222, %v316, 0
    %340 = vmatpush.msra.mxu0 0.0
    %341 = vmatpush.msra.mxu0 0.0
    %342 = vmatpush.msra.mxu0 0.0
    %343 = vmatpush.msra.mxu0 0.0
    %344 = vmatpush.msra.mxu0 0.0
    %345 = vmatpush.msra.mxu0 0.0
    %346 = vmatpush.msra.mxu0 0.0
    %347 = vmatpush.msra.mxu0 0.0
    %348 = vmatpush.msra.mxu0 0.0
    %349 = vmatpush.msra.mxu0 0.0
    %350 = vmatpush.msra.mxu0 0.0
    %351 = vmatpush.msra.mxu0 0.0
    %352 = vmatpush.msra.mxu0 0.0
    %353 = vmatpush.msra.mxu0 0.0
    %354 = vmatpush.msra.mxu0 0.0
    %355 = vmatpush.msra.mxu0 %v335
    %356 = vmatmul.f32.gmra.mxu0 %v338
    %v357 = vpop.f32.mrf.mxu0
    %v358 = vadd.f32 0.0, %v357
    %359 = vdwg.mxu0
    %360 = vrot.lane.b32.xlu0 %v217, 64
    %v361 = vpop.permute.xlu0 %360
    %v364 = vsel %vm222, %v331, 0
    %366 = vmatpush.msra.mxu0 0.0
    %367 = vmatpush.msra.mxu0 0.0
    %368 = vmatpush.msra.mxu0 0.0
    %369 = vmatpush.msra.mxu0 0.0
    %370 = vmatpush.msra.mxu0 0.0
    %371 = vmatpush.msra.mxu0 0.0
    %372 = vmatpush.msra.mxu0 0.0
    %373 = vmatpush.msra.mxu0 0.0
    %374 = vmatpush.msra.mxu0 0.0
    %375 = vmatpush.msra.mxu0 0.0
    %376 = vmatpush.msra.mxu0 0.0
    %377 = vmatpush.msra.mxu0 0.0
    %378 = vmatpush.msra.mxu0 0.0
    %379 = vmatpush.msra.mxu0 0.0
    %380 = vmatpush.msra.mxu0 0.0
    %381 = vmatpush.msra.mxu0 %v361
    %382 = vmatmul.f32.gmra.mxu0 %v364
    %v383 = vpop.f32.mrf.mxu0
    %v384 = vadd.f32 0.0, %v383
    %385 = vdwg.mxu0
    %386 = vrot.lane.b32.xlu0 %v214, 120
    %v387 = vpop.permute.xlu0 %386
    %388 = vrot.lane.b32.xlu0 %v214, 88
    %v389 = vpop.permute.xlu0 %388
    %v390 = vsel %vm222, %v387, 0
    %v392 = vsel %vm222, %v389, 0
    %394 = vmatpush.xpose.msra.mxu0 0.0
    %395 = vmatpush.xpose.msra.mxu0 0.0
    %396 = vmatpush.xpose.msra.mxu0 0.0
    %397 = vmatpush.xpose.msra.mxu0 0.0
    %398 = vmatpush.xpose.msra.mxu0 0.0
    %399 = vmatpush.xpose.msra.mxu0 0.0
    %400 = vmatpush.xpose.msra.mxu0 0.0
    %401 = vmatpush.xpose.msra.mxu0 0.0
    %402 = vmatpush.xpose.msra.mxu0 0.0
    %403 = vmatpush.xpose.msra.mxu0 0.0
    %404 = vmatpush.xpose.msra.mxu0 0.0
    %405 = vmatpush.xpose.msra.mxu0 0.0
    %406 = vmatpush.xpose.msra.mxu0 0.0
    %407 = vmatpush.xpose.msra.mxu0 0.0
    %408 = vmatpush.xpose.msra.mxu0 0.0
    %409 = vmatpush.xpose.msra.mxu0 %v392
    %410 = vmatmul.f32.gmra.mxu0 %v390
    %v411 = vpop.f32.mrf.mxu0
    %v412 = vadd.f32 0.0, %v411
    %413 = vdwg.mxu0
    %414 = vrot.lane.b32.xlu0 %v217, 120
    %v415 = vpop.permute.xlu0 %414
    %416 = vrot.lane.b32.xlu0 %v217, 88
    %v417 = vpop.permute.xlu0 %416
    %v418 = vsel %vm222, %v415, 0
    %v420 = vsel %vm222, %v417, 0
    %422 = vmatpush.xpose.msra.mxu0 0.0
    %423 = vmatpush.xpose.msra.mxu0 0.0
    %424 = vmatpush.xpose.msra.mxu0 0.0
    %425 = vmatpush.xpose.msra.mxu0 0.0
    %426 = vmatpush.xpose.msra.mxu0 0.0
    %427 = vmatpush.xpose.msra.mxu0 0.0
    %428 = vmatpush.xpose.msra.mxu0 0.0
    %429 = vmatpush.xpose.msra.mxu0 0.0
    %430 = vmatpush.xpose.msra.mxu0 0.0
    %431 = vmatpush.xpose.msra.mxu0 0.0
    %432 = vmatpush.xpose.msra.mxu0 0.0
    %433 = vmatpush.xpose.msra.mxu0 0.0
    %434 = vmatpush.xpose.msra.mxu0 0.0
    %435 = vmatpush.xpose.msra.mxu0 0.0
    %436 = vmatpush.xpose.msra.mxu0 0.0
    %437 = vmatpush.xpose.msra.mxu0 %v420
    %438 = vmatmul.f32.gmra.mxu0 %v418
    %v439 = vpop.f32.mrf.mxu0
    %v440 = vadd.f32 0.0, %v439
    %441 = vdwg.mxu0
    %v442 = vmul.f32 %v412, 0.35355338
    %v443 = vmul.f32 %v440, 0.35355338
    %v444 = vsel %vm280, -10000.0, %v442
    %v445 = vsel %vm281, -10000.0, %v443
    %v446 = vsel %vm222, %v444, -inf
    %447 = vmax.xlane.f32.xlu0 %v446
    %v448 = vpop.xlane.xlu0 %447
    %v449 = vsel %vm222, %v445, -inf
    %450 = vmax.xlane.f32.xlu0 %v449
    %v451 = vpop.xlane.xlu0 %450
    %v452 = vsub.f32 %v444, %v448
    %v453 = vsub.f32 %v445, %v451
    %v454 = vmul.f32 %v452, 1.442695
    %v455 = vpow.pop %v454
    %v456 = vmul.f32 %v453, 1.442695
    %v457 = vpow.pop %v456
    %v458 = vsel %vm222, %v455, 0.0
    %459 = vadd.xlane.f32.xlu0 %v458
    %v460 = vpop.xlane.xlu0 %459
    %v461 = vsel %vm222, %v457, 0.0
    %462 = vadd.xlane.f32.xlu0 %v461
    %v463 = vpop.xlane.xlu0 %462
    %v464 = vrcp.pop %v460
    %v465 = vmul.f32 %v460, %v464
    %v466 = vsub.f32 1.0, %v465
    %v467 = vmul.f32 %v464, %v466
    %v468 = vadd.f32 %v464, %v467
    %vm469 = vweird.f32 %v460
    %vm470 = vweird.f32 %v464
    %vm471 = vmor %vm469, %vm470
    %v472 = vsel %vm471, %v464, %v468
    %v473 = vand.u32 2147483647, %v460
    %vm474 = vcmp.eq.f32.partialorder %v473, 8.507059e+37
    %v475 = vand.u32 %v460, 2147483648
    %v476 = vor.u32 1.1754944e-38, %v475
    %v477 = vsel %vm474, %v476, %v472
    %v478 = vmul.f32 %v455, %v477
    %v479 = vrcp.pop %v463
    %v480 = vmul.f32 %v463, %v479
    %v481 = vsub.f32 1.0, %v480
    %v482 = vmul.f32 %v479, %v481
    %v483 = vadd.f32 %v479, %v482
    %vm484 = vweird.f32 %v463
    %vm485 = vweird.f32 %v479
    %vm486 = vmor %vm484, %vm485
    %v487 = vsel %vm486, %v479, %v483
    %v488 = vand.u32 2147483647, %v463
    %vm489 = vcmp.eq.f32.partialorder %v488, 8.507059e+37
    %v490 = vand.u32 %v463, 2147483648
    %v491 = vor.u32 1.1754944e-38, %v490
    %v492 = vsel %vm489, %v491, %v487
    %v493 = vmul.f32 %v457, %v492
    %s494 = scalar_lea.vmem %s14, 16
    %495 = vst.msk [vmem:[%s494] sm:$0xff] %vm222, %v478
    %496 = vst.msk [vmem:[%s494 + $0x8] sm:$0xff] %vm222, %v493
    %497 = vrot.lane.b32.xlu0 %v214, 56
    %v498 = vpop.permute.xlu0 %497
    %v501 = vsel %vm222, %v478, 0
    %503 = vmatpush.msra.mxu0 0.0
    %504 = vmatpush.msra.mxu0 0.0
    %505 = vmatpush.msra.mxu0 0.0
    %506 = vmatpush.msra.mxu0 0.0
    %507 = vmatpush.msra.mxu0 0.0
    %508 = vmatpush.msra.mxu0 0.0
    %509 = vmatpush.msra.mxu0 0.0
    %510 = vmatpush.msra.mxu0 0.0
    %511 = vmatpush.msra.mxu0 0.0
    %512 = vmatpush.msra.mxu0 0.0
    %513 = vmatpush.msra.mxu0 0.0
    %514 = vmatpush.msra.mxu0 0.0
    %515 = vmatpush.msra.mxu0 0.0
    %516 = vmatpush.msra.mxu0 0.0
    %517 = vmatpush.msra.mxu0 0.0
    %518 = vmatpush.msra.mxu0 %v498
    %519 = vmatmul.f32.gmra.mxu0 %v501
    %v520 = vpop.f32.mrf.mxu0
    %v521 = vadd.f32 0.0, %v520
    %522 = vdwg.mxu0
    %523 = vrot.lane.b32.xlu0 %v217, 56
    %v524 = vpop.permute.xlu0 %523
    %v527 = vsel %vm222, %v493, 0
    %529 = vmatpush.msra.mxu0 0.0
    %530 = vmatpush.msra.mxu0 0.0
    %531 = vmatpush.msra.mxu0 0.0
    %532 = vmatpush.msra.mxu0 0.0
    %533 = vmatpush.msra.mxu0 0.0
    %534 = vmatpush.msra.mxu0 0.0
    %535 = vmatpush.msra.mxu0 0.0
    %536 = vmatpush.msra.mxu0 0.0
    %537 = vmatpush.msra.mxu0 0.0
    %538 = vmatpush.msra.mxu0 0.0
    %539 = vmatpush.msra.mxu0 0.0
    %540 = vmatpush.msra.mxu0 0.0
    %541 = vmatpush.msra.mxu0 0.0
    %542 = vmatpush.msra.mxu0 0.0
    %543 = vmatpush.msra.mxu0 0.0
    %544 = vmatpush.msra.mxu0 %v524
    %545 = vmatmul.f32.gmra.mxu0 %v527
    %v546 = vpop.f32.mrf.mxu0
    %v547 = vadd.f32 0.0, %v546
    %548 = vdwg.mxu0
    %549 = vrot.lane.b32.xlu0 %v214, 112
    %v550 = vpop.permute.xlu0 %549
    %551 = vrot.lane.b32.xlu0 %v214, 80
    %v552 = vpop.permute.xlu0 %551
    %v553 = vsel %vm222, %v550, 0
    %v555 = vsel %vm222, %v552, 0
    %557 = vmatpush.xpose.msra.mxu0 0.0
    %558 = vmatpush.xpose.msra.mxu0 0.0
    %559 = vmatpush.xpose.msra.mxu0 0.0
    %560 = vmatpush.xpose.msra.mxu0 0.0
    %561 = vmatpush.xpose.msra.mxu0 0.0
    %562 = vmatpush.xpose.msra.mxu0 0.0
    %563 = vmatpush.xpose.msra.mxu0 0.0
    %564 = vmatpush.xpose.msra.mxu0 0.0
    %565 = vmatpush.xpose.msra.mxu0 0.0
    %566 = vmatpush.xpose.msra.mxu0 0.0
    %567 = vmatpush.xpose.msra.mxu0 0.0
    %568 = vmatpush.xpose.msra.mxu0 0.0
    %569 = vmatpush.xpose.msra.mxu0 0.0
    %570 = vmatpush.xpose.msra.mxu0 0.0
    %571 = vmatpush.xpose.msra.mxu0 0.0
    %572 = vmatpush.xpose.msra.mxu0 %v555
    %573 = vmatmul.f32.gmra.mxu0 %v553
    %v574 = vpop.f32.mrf.mxu0
    %v575 = vadd.f32 0.0, %v574
    %576 = vdwg.mxu0
    %577 = vrot.lane.b32.xlu0 %v217, 112
    %v578 = vpop.permute.xlu0 %577
    %579 = vrot.lane.b32.xlu0 %v217, 80
    %v580 = vpop.permute.xlu0 %579
    %v581 = vsel %vm222, %v578, 0
    %v583 = vsel %vm222, %v580, 0
    %585 = vmatpush.xpose.msra.mxu0 0.0
    %586 = vmatpush.xpose.msra.mxu0 0.0
    %587 = vmatpush.xpose.msra.mxu0 0.0
    %588 = vmatpush.xpose.msra.mxu0 0.0
    %589 = vmatpush.xpose.msra.mxu0 0.0
    %590 = vmatpush.xpose.msra.mxu0 0.0
    %591 = vmatpush.xpose.msra.mxu0 0.0
    %592 = vmatpush.xpose.msra.mxu0 0.0
    %593 = vmatpush.xpose.msra.mxu0 0.0
    %594 = vmatpush.xpose.msra.mxu0 0.0
    %595 = vmatpush.xpose.msra.mxu0 0.0
    %596 = vmatpush.xpose.msra.mxu0 0.0
    %597 = vmatpush.xpose.msra.mxu0 0.0
    %598 = vmatpush.xpose.msra.mxu0 0.0
    %599 = vmatpush.xpose.msra.mxu0 0.0
    %600 = vmatpush.xpose.msra.mxu0 %v583
    %601 = vmatmul.f32.gmra.mxu0 %v581
    %v602 = vpop.f32.mrf.mxu0
    %v603 = vadd.f32 0.0, %v602
    %604 = vdwg.mxu0
    %v605 = vmul.f32 %v575, 0.35355338
    %v606 = vmul.f32 %v603, 0.35355338
    %v607 = vsel %vm280, -10000.0, %v605
    %v608 = vsel %vm281, -10000.0, %v606
    %v609 = vsel %vm222, %v607, -inf
    %610 = vmax.xlane.f32.xlu0 %v609
    %v611 = vpop.xlane.xlu0 %610
    %v612 = vsel %vm222, %v608, -inf
    %613 = vmax.xlane.f32.xlu0 %v612
    %v614 = vpop.xlane.xlu0 %613
    %v615 = vsub.f32 %v607, %v611
    %v616 = vsub.f32 %v608, %v614
    %v617 = vmul.f32 %v615, 1.442695
    %v618 = vpow.pop %v617
    %v619 = vmul.f32 %v616, 1.442695
    %v620 = vpow.pop %v619
    %v621 = vsel %vm222, %v618, 0.0
    %622 = vadd.xlane.f32.xlu0 %v621
    %v623 = vpop.xlane.xlu0 %622
    %v624 = vsel %vm222, %v620, 0.0
    %625 = vadd.xlane.f32.xlu0 %v624
    %v626 = vpop.xlane.xlu0 %625
    %v627 = vrcp.pop %v623
    %v628 = vmul.f32 %v623, %v627
    %v629 = vsub.f32 1.0, %v628
    %v630 = vmul.f32 %v627, %v629
    %v631 = vadd.f32 %v627, %v630
    %vm632 = vweird.f32 %v623
    %vm633 = vweird.f32 %v627
    %vm634 = vmor %vm632, %vm633
    %v635 = vsel %vm634, %v627, %v631
    %v636 = vand.u32 2147483647, %v623
    %vm637 = vcmp.eq.f32.partialorder %v636, 8.507059e+37
    %v638 = vand.u32 %v623, 2147483648
    %v639 = vor.u32 1.1754944e-38, %v638
    %v640 = vsel %vm637, %v639, %v635
    %v641 = vmul.f32 %v618, %v640
    %v642 = vrcp.pop %v626
    %v643 = vmul.f32 %v626, %v642
    %v644 = vsub.f32 1.0, %v643
    %v645 = vmul.f32 %v642, %v644
    %v646 = vadd.f32 %v642, %v645
    %vm647 = vweird.f32 %v626
    %vm648 = vweird.f32 %v642
    %vm649 = vmor %vm647, %vm648
    %v650 = vsel %vm649, %v642, %v646
    %v651 = vand.u32 2147483647, %v626
    %vm652 = vcmp.eq.f32.partialorder %v651, 8.507059e+37
    %v653 = vand.u32 %v626, 2147483648
    %v654 = vor.u32 1.1754944e-38, %v653
    %v655 = vsel %vm652, %v654, %v650
    %v656 = vmul.f32 %v620, %v655
    %s657 = scalar_lea.vmem %s14, 32
    %658 = vst.msk [vmem:[%s657] sm:$0xff] %vm222, %v641
    %659 = vst.msk [vmem:[%s657 + $0x8] sm:$0xff] %vm222, %v656
    %660 = vrot.lane.b32.xlu0 %v214, 48
    %v661 = vpop.permute.xlu0 %660
    %v664 = vsel %vm222, %v641, 0
    %666 = vmatpush.msra.mxu0 0.0
    %667 = vmatpush.msra.mxu0 0.0
    %668 = vmatpush.msra.mxu0 0.0
    %669 = vmatpush.msra.mxu0 0.0
    %670 = vmatpush.msra.mxu0 0.0
    %671 = vmatpush.msra.mxu0 0.0
    %672 = vmatpush.msra.mxu0 0.0
    %673 = vmatpush.msra.mxu0 0.0
    %674 = vmatpush.msra.mxu0 0.0
    %675 = vmatpush.msra.mxu0 0.0
    %676 = vmatpush.msra.mxu0 0.0
    %677 = vmatpush.msra.mxu0 0.0
    %678 = vmatpush.msra.mxu0 0.0
    %679 = vmatpush.msra.mxu0 0.0
    %680 = vmatpush.msra.mxu0 0.0
    %681 = vmatpush.msra.mxu0 %v661
    %682 = vmatmul.f32.gmra.mxu0 %v664
    %v683 = vpop.f32.mrf.mxu0
    %v684 = vadd.f32 0.0, %v683
    %685 = vdwg.mxu0
    %686 = vrot.lane.b32.xlu0 %v217, 48
    %v687 = vpop.permute.xlu0 %686
    %v690 = vsel %vm222, %v656, 0
    %692 = vmatpush.msra.mxu0 0.0
    %693 = vmatpush.msra.mxu0 0.0
    %694 = vmatpush.msra.mxu0 0.0
    %695 = vmatpush.msra.mxu0 0.0
    %696 = vmatpush.msra.mxu0 0.0
    %697 = vmatpush.msra.mxu0 0.0
    %698 = vmatpush.msra.mxu0 0.0
    %699 = vmatpush.msra.mxu0 0.0
    %700 = vmatpush.msra.mxu0 0.0
    %701 = vmatpush.msra.mxu0 0.0
    %702 = vmatpush.msra.mxu0 0.0
    %703 = vmatpush.msra.mxu0 0.0
    %704 = vmatpush.msra.mxu0 0.0
    %705 = vmatpush.msra.mxu0 0.0
    %706 = vmatpush.msra.mxu0 0.0
    %707 = vmatpush.msra.mxu0 %v687
    %708 = vmatmul.f32.gmra.mxu0 %v690
    %v709 = vpop.f32.mrf.mxu0
    %v710 = vadd.f32 0.0, %v709
    %711 = vdwg.mxu0
    %712 = vrot.lane.b32.xlu0 %v214, 104
    %v713 = vpop.permute.xlu0 %712
    %714 = vrot.lane.b32.xlu0 %v214, 72
    %v715 = vpop.permute.xlu0 %714
    %v716 = vsel %vm222, %v713, 0
    %v718 = vsel %vm222, %v715, 0
    %720 = vmatpush.xpose.msra.mxu0 0.0
    %721 = vmatpush.xpose.msra.mxu0 0.0
    %722 = vmatpush.xpose.msra.mxu0 0.0
    %723 = vmatpush.xpose.msra.mxu0 0.0
    %724 = vmatpush.xpose.msra.mxu0 0.0
    %725 = vmatpush.xpose.msra.mxu0 0.0
    %726 = vmatpush.xpose.msra.mxu0 0.0
    %727 = vmatpush.xpose.msra.mxu0 0.0
    %728 = vmatpush.xpose.msra.mxu0 0.0
    %729 = vmatpush.xpose.msra.mxu0 0.0
    %730 = vmatpush.xpose.msra.mxu0 0.0
    %731 = vmatpush.xpose.msra.mxu0 0.0
    %732 = vmatpush.xpose.msra.mxu0 0.0
    %733 = vmatpush.xpose.msra.mxu0 0.0
    %734 = vmatpush.xpose.msra.mxu0 0.0
    %735 = vmatpush.xpose.msra.mxu0 %v718
    %736 = vmatmul.f32.gmra.mxu0 %v716
    %v737 = vpop.f32.mrf.mxu0
    %v738 = vadd.f32 0.0, %v737
    %739 = vdwg.mxu0
    %740 = vrot.lane.b32.xlu0 %v217, 104
    %v741 = vpop.permute.xlu0 %740
    %742 = vrot.lane.b32.xlu0 %v217, 72
    %v743 = vpop.permute.xlu0 %742
    %v744 = vsel %vm222, %v741, 0
    %v746 = vsel %vm222, %v743, 0
    %748 = vmatpush.xpose.msra.mxu0 0.0
    %749 = vmatpush.xpose.msra.mxu0 0.0
    %750 = vmatpush.xpose.msra.mxu0 0.0
    %751 = vmatpush.xpose.msra.mxu0 0.0
    %752 = vmatpush.xpose.msra.mxu0 0.0
    %753 = vmatpush.xpose.msra.mxu0 0.0
    %754 = vmatpush.xpose.msra.mxu0 0.0
    %755 = vmatpush.xpose.msra.mxu0 0.0
    %756 = vmatpush.xpose.msra.mxu0 0.0
    %757 = vmatpush.xpose.msra.mxu0 0.0
    %758 = vmatpush.xpose.msra.mxu0 0.0
    %759 = vmatpush.xpose.msra.mxu0 0.0
    %760 = vmatpush.xpose.msra.mxu0 0.0
    %761 = vmatpush.xpose.msra.mxu0 0.0
    %762 = vmatpush.xpose.msra.mxu0 0.0
    %763 = vmatpush.xpose.msra.mxu0 %v746
    %764 = vmatmul.f32.gmra.mxu0 %v744
    %v765 = vpop.f32.mrf.mxu0
    %v766 = vadd.f32 0.0, %v765
    %767 = vdwg.mxu0
    %v768 = vmul.f32 %v738, 0.35355338
    %v769 = vmul.f32 %v766, 0.35355338
    %v770 = vsel %vm280, -10000.0, %v768
    %v771 = vsel %vm281, -10000.0, %v769
    %v772 = vsel %vm222, %v770, -inf
    %773 = vmax.xlane.f32.xlu0 %v772
    %v774 = vpop.xlane.xlu0 %773
    %v775 = vsel %vm222, %v771, -inf
    %776 = vmax.xlane.f32.xlu0 %v775
    %v777 = vpop.xlane.xlu0 %776
    %v778 = vsub.f32 %v770, %v774
    %v779 = vsub.f32 %v771, %v777
    %v780 = vmul.f32 %v778, 1.442695
    %v781 = vpow.pop %v780
    %v782 = vmul.f32 %v779, 1.442695
    %v783 = vpow.pop %v782
    %v784 = vsel %vm222, %v781, 0.0
    %785 = vadd.xlane.f32.xlu0 %v784
    %v786 = vpop.xlane.xlu0 %785
    %v787 = vsel %vm222, %v783, 0.0
    %788 = vadd.xlane.f32.xlu0 %v787
    %v789 = vpop.xlane.xlu0 %788
    %v790 = vrcp.pop %v786
    %v791 = vmul.f32 %v786, %v790
    %v792 = vsub.f32 1.0, %v791
    %v793 = vmul.f32 %v790, %v792
    %v794 = vadd.f32 %v790, %v793
    %vm795 = vweird.f32 %v786
    %vm796 = vweird.f32 %v790
    %vm797 = vmor %vm795, %vm796
    %v798 = vsel %vm797, %v790, %v794
    %v799 = vand.u32 2147483647, %v786
    %vm800 = vcmp.eq.f32.partialorder %v799, 8.507059e+37
    %v801 = vand.u32 %v786, 2147483648
    %v802 = vor.u32 1.1754944e-38, %v801
    %v803 = vsel %vm800, %v802, %v798
    %v804 = vmul.f32 %v781, %v803
    %v805 = vrcp.pop %v789
    %v806 = vmul.f32 %v789, %v805
    %v807 = vsub.f32 1.0, %v806
    %v808 = vmul.f32 %v805, %v807
    %v809 = vadd.f32 %v805, %v808
    %vm810 = vweird.f32 %v789
    %vm811 = vweird.f32 %v805
    %vm812 = vmor %vm810, %vm811
    %v813 = vsel %vm812, %v805, %v809
    %v814 = vand.u32 2147483647, %v789
    %vm815 = vcmp.eq.f32.partialorder %v814, 8.507059e+37
    %v816 = vand.u32 %v789, 2147483648
    %v817 = vor.u32 1.1754944e-38, %v816
    %v818 = vsel %vm815, %v817, %v813
    %v819 = vmul.f32 %v783, %v818
    %s820 = scalar_lea.vmem %s14, 48
    %821 = vst.msk [vmem:[%s820] sm:$0xff] %vm222, %v804
    %822 = vst.msk [vmem:[%s820 + $0x8] sm:$0xff] %vm222, %v819
    %823 = vrot.lane.b32.xlu0 %v214, 40
    %v824 = vpop.permute.xlu0 %823
    %v827 = vsel %vm222, %v804, 0
    %829 = vmatpush.msra.mxu0 0.0
    %830 = vmatpush.msra.mxu0 0.0
    %831 = vmatpush.msra.mxu0 0.0
    %832 = vmatpush.msra.mxu0 0.0
    %833 = vmatpush.msra.mxu0 0.0
    %834 = vmatpush.msra.mxu0 0.0
    %835 = vmatpush.msra.mxu0 0.0
    %836 = vmatpush.msra.mxu0 0.0
    %837 = vmatpush.msra.mxu0 0.0
    %838 = vmatpush.msra.mxu0 0.0
    %839 = vmatpush.msra.mxu0 0.0
    %840 = vmatpush.msra.mxu0 0.0
    %841 = vmatpush.msra.mxu0 0.0
    %842 = vmatpush.msra.mxu0 0.0
    %843 = vmatpush.msra.mxu0 0.0
    %844 = vmatpush.msra.mxu0 %v824
    %845 = vmatmul.f32.gmra.mxu0 %v827
    %v846 = vpop.f32.mrf.mxu0
    %v847 = vadd.f32 0.0, %v846
    %848 = vdwg.mxu0
    %849 = vrot.lane.b32.xlu0 %v217, 40
    %v850 = vpop.permute.xlu0 %849
    %v853 = vsel %vm222, %v819, 0
    %855 = vmatpush.msra.mxu0 0.0
    %856 = vmatpush.msra.mxu0 0.0
    %857 = vmatpush.msra.mxu0 0.0
    %858 = vmatpush.msra.mxu0 0.0
    %859 = vmatpush.msra.mxu0 0.0
    %860 = vmatpush.msra.mxu0 0.0
    %861 = vmatpush.msra.mxu0 0.0
    %862 = vmatpush.msra.mxu0 0.0
    %863 = vmatpush.msra.mxu0 0.0
    %864 = vmatpush.msra.mxu0 0.0
    %865 = vmatpush.msra.mxu0 0.0
    %866 = vmatpush.msra.mxu0 0.0
    %867 = vmatpush.msra.mxu0 0.0
    %868 = vmatpush.msra.mxu0 0.0
    %869 = vmatpush.msra.mxu0 0.0
    %870 = vmatpush.msra.mxu0 %v850
    %871 = vmatmul.f32.gmra.mxu0 %v853
    %v872 = vpop.f32.mrf.mxu0
    %v873 = vadd.f32 0.0, %v872
    %874 = vdwg.mxu0
    %877 = vrot.lane.b32.xlu0 %v521, 8
    %v878 = vpop.permute.xlu0 %877
    %879 = vrot.lane.b32.xlu0 %v547, 8
    %v880 = vpop.permute.xlu0 %879
    %885 = vrot.lane.b32.xlu0 %v684, 16
    %v886 = vpop.permute.xlu0 %885
    %887 = vrot.lane.b32.xlu0 %v710, 16
    %v888 = vpop.permute.xlu0 %887
    %893 = vrot.lane.b32.xlu0 %v847, 24
    %v894 = vpop.permute.xlu0 %893
    %895 = vrot.lane.b32.xlu0 %v873, 24
    %v896 = vpop.permute.xlu0 %895
    %v899 = vsel %vm222, %v358, %v878
    %v900 = vsel %vm222, %v384, %v880
    %v901 = vsel %vm141, %v899, %v886
    %v902 = vsel %vm141, %v900, %v888
    %vm903 = vcmask 195584
    %v904 = vsel %vm903, %v901, %v894
    %v905 = vsel %vm903, %v902, %v896
    %v906 = vld [vmem:[%s6] sm:$0xff]
    %v907 = vld [vmem:[%s6 + $0x8] sm:$0xff]
    %v908 = vld [vmem:[%s6 + $0x10] sm:$0xff]
    %v909 = vld [vmem:[%s6 + $0x18] sm:$0xff]
    %v910 = vld [vmem:[#allocation5] sm:$0x1]
    %v912 = vperm.slane %v910, 0
    %v915 = vsel %vm189, %v904, 0
    %v918 = vsel %vm189, %v905, 0
    %920 = vmatpush.msra.mxu0 0.0
    %921 = vmatpush.msra.mxu0 0.0
    %922 = vmatpush.msra.mxu0 0.0
    %923 = vmatpush.msra.mxu0 0.0
    %924 = vmatpush.msra.mxu0 0.0
    %925 = vmatpush.msra.mxu0 0.0
    %926 = vmatpush.msra.mxu0 0.0
    %927 = vmatpush.msra.mxu0 0.0
    %928 = vmatpush.msra.mxu0 0.0
    %929 = vmatpush.msra.mxu0 0.0
    %930 = vmatpush.msra.mxu0 0.0
    %931 = vmatpush.msra.mxu0 0.0
    %932 = vmatpush.msra.mxu0 %v909
    %933 = vmatpush.msra.mxu0 %v908
    %934 = vmatpush.msra.mxu0 %v907
    %935 = vmatpush.msra.mxu0 %v906
    %936 = vmatmul.f32.gmra.mxu0 %v915
    %v937 = vpop.f32.mrf.mxu0
    %v938 = vadd.f32 %v912, %v937
    %939 = vmatmul.f32.gmra.mxu0 %v918
    %v940 = vpop.f32.mrf.mxu0
    %v941 = vadd.f32 %v912, %v940
    %942 = vdwg.mxu0
    %v943 = vadd.f32 %v938, %v174
    %v944 = vadd.f32 %v941, %v175
    %v945 = vsel %vm189, %v943, 0.0
    %946 = vadd.xlane.f32.xlu0 %v945
    %v947 = vpop.xlane.xlu0 %946
    %v948 = vsel %vm189, %v944, 0.0
    %949 = vadd.xlane.f32.xlu0 %v948
    %v950 = vpop.xlane.xlu0 %949
    %v951 = vrcp.pop 32.0
    %v952 = vmul.f32 32.0, %v951
    %v953 = vsub.f32 1.0, %v952
    %v954 = vmul.f32 %v951, %v953
    %v955 = vadd.f32 %v951, %v954
    %vm956 = vweird.f32 %v951
    %v957 = vsel %vm956, %v951, %v955
    %v958 = vmul.f32 %v947, %v957
    %v959 = vmul.f32 %v950, %v957
    %v960 = vsub.f32 %v943, %v958
    %v961 = vsub.f32 %v944, %v959
    %v962 = vmul.f32 %v960, %v960
    %v963 = vmul.f32 %v961, %v961
    %v964 = vsel %vm189, %v962, 0.0
    %965 = vadd.xlane.f32.xlu0 %v964
    %v966 = vpop.xlane.xlu0 %965
    %v967 = vsel %vm189, %v963, 0.0
    %968 = vadd.xlane.f32.xlu0 %v967
    %v969 = vpop.xlane.xlu0 %968
    %v970 = vmul.f32 %v966, %v957
    %v971 = vmul.f32 %v969, %v957
    %v972 = vadd.f32 %v970, 1e-05
    %v973 = vadd.f32 %v971, 1e-05
    %v974 = vrsqrt.pop %v972
    %v975 = vmul.f32 %v974, %v972
    %v976 = vmul.f32 %v975, %v974
    %v977 = vmul.f32 0.5, %v976
    %v978 = vsub.f32 1.5, %v977
    %v979 = vmul.f32 %v974, %v978
    %vm980 = vweird.f32 %v972
    %vm981 = vweird.f32 %v974
    %vm982 = vmor %vm980, %vm981
    %v983 = vsel %vm982, %v974, %v979
    %v984 = vrsqrt.pop %v973
    %v985 = vmul.f32 %v984, %v973
    %v986 = vmul.f32 %v985, %v984
    %v987 = vmul.f32 0.5, %v986
    %v988 = vsub.f32 1.5, %v987
    %v989 = vmul.f32 %v984, %v988
    %vm990 = vweird.f32 %v973
    %vm991 = vweird.f32 %v984
    %vm992 = vmor %vm990, %vm991
    %v993 = vsel %vm992, %v984, %v989
    %v994 = vmul.f32 %v960, %v983
    %v995 = vmul.f32 %v961, %v993
    %v996 = vperm.slane %v180, 0
    %v997 = vmul.f32 %v994, %v996
    %v998 = vmul.f32 %v995, %v996
    %v999 = vperm.slane %v180, 1
    %v1000 = vadd.f32 %v997, %v999
    %v1001 = vadd.f32 %v998, %v999
    %v1002 = vld [vmem:[%s8] sm:$0xff]
    %v1003 = vld [vmem:[%s8 + $0x8] sm:$0xff]
    %v1004 = vld [vmem:[%s8 + $0x10] sm:$0xff]
    %v1005 = vld [vmem:[%s8 + $0x18] sm:$0xff]
    %v1006 = vld [vmem:[#allocation7] sm:$0x1]
    %v1008 = vperm.slane %v1006, 0
    %v1011 = vsel %vm189, %v1000, 0
    %v1014 = vsel %vm189, %v1001, 0
    %1016 = vmatpush.msra.mxu0 0.0
    %1017 = vmatpush.msra.mxu0 0.0
    %1018 = vmatpush.msra.mxu0 0.0
    %1019 = vmatpush.msra.mxu0 0.0
    %1020 = vmatpush.msra.mxu0 0.0
    %1021 = vmatpush.msra.mxu0 0.0
    %1022 = vmatpush.msra.mxu0 0.0
    %1023 = vmatpush.msra.mxu0 0.0
    %1024 = vmatpush.msra.mxu0 0.0
    %1025 = vmatpush.msra.mxu0 0.0
    %1026 = vmatpush.msra.mxu0 0.0
    %1027 = vmatpush.msra.mxu0 0.0
    %1028 = vmatpush.msra.mxu0 %v1005
    %1029 = vmatpush.msra.mxu0 %v1004
    %1030 = vmatpush.msra.mxu0 %v1003
    %1031 = vmatpush.msra.mxu0 %v1002
    %1032 = vmatmul.f32.gmra.mxu0 %v1011
    %v1033 = vpop.f32.mrf.mxu0
    %v1034 = vadd.f32 %v1008, %v1033
    %1035 = vmatmul.f32.gmra.mxu0 %v1014
    %v1036 = vpop.f32.mrf.mxu0
    %v1037 = vadd.f32 %v1008, %v1036
    %1038 = vdwg.mxu0
    %v1039 = vmax.f32 %v1034, 0.0
    %v1040 = vmax.f32 %v1037, 0.0
    %v1041 = vld [vmem:[%s10] sm:$0xff]
    %v1042 = vld [vmem:[%s10 + $0x8] sm:$0xff]
    %v1043 = vld [vmem:[%s10 + $0x10] sm:$0xff]
    %v1044 = vld [vmem:[%s10 + $0x18] sm:$0xff]
    %v1045 = vld [vmem:[%s10 + $0x20] sm:$0xff]
    %v1046 = vld [vmem:[%s10 + $0x28] sm:$0xff]
    %v1047 = vld [vmem:[%s10 + $0x30] sm:$0xff]
    %v1048 = vld [vmem:[%s10 + $0x38] sm:$0xff]
    %v1049 = vld [vmem:[#allocation8] sm:$0x1]
    %v1051 = vperm.slane %v1049, 0
    %vm1053 = vcmask 523264
    %v1055 = vsel %vm1053, %v1039, 0
    %v1058 = vsel %vm1053, %v1040, 0
    %1060 = vmatpush.msra.mxu0 0.0
    %1061 = vmatpush.msra.mxu0 0.0
    %1062 = vmatpush.msra.mxu0 0.0
    %1063 = vmatpush.msra.mxu0 0.0
    %1064 = vmatpush.msra.mxu0 0.0
    %1065 = vmatpush.msra.mxu0 0.0
    %1066 = vmatpush.msra.mxu0 0.0
    %1067 = vmatpush.msra.mxu0 0.0
    %1068 = vmatpush.msra.mxu0 %v1048
    %1069 = vmatpush.msra.mxu0 %v1047
    %1070 = vmatpush.msra.mxu0 %v1046
    %1071 = vmatpush.msra.mxu0 %v1045
    %1072 = vmatpush.msra.mxu0 %v1044
    %1073 = vmatpush.msra.mxu0 %v1043
    %1074 = vmatpush.msra.mxu0 %v1042
    %1075 = vmatpush.msra.mxu0 %v1041
    %1076 = vmatmul.f32.gmra.mxu0 %v1055
    %v1077 = vpop.f32.mrf.mxu0
    %v1078 = vadd.f32 %v1051, %v1077
    %1079 = vmatmul.f32.gmra.mxu0 %v1058
    %v1080 = vpop.f32.mrf.mxu0
    %v1081 = vadd.f32 %v1051, %v1080
    %1082 = vdwg.mxu0
    %v1083 = vadd.f32 %v1078, %v1000
    %v1084 = vadd.f32 %v1081, %v1001
    %v1085 = vsel %vm189, %v1083, 0.0
    %1086 = vadd.xlane.f32.xlu0 %v1085
    %v1087 = vpop.xlane.xlu0 %1086
    %v1088 = vsel %vm189, %v1084, 0.0
    %1089 = vadd.xlane.f32.xlu0 %v1088
    %v1090 = vpop.xlane.xlu0 %1089
    %v1091 = vmul.f32 %v1087, %v957
    %v1092 = vmul.f32 %v1090, %v957
    %v1093 = vsub.f32 %v1083, %v1091
    %v1094 = vsub.f32 %v1084, %v1092
    %v1095 = vmul.f32 %v1093, %v1093
    %v1096 = vmul.f32 %v1094, %v1094
    %v1097 = vsel %vm189, %v1095, 0.0
    %1098 = vadd.xlane.f32.xlu0 %v1097
    %v1099 = vpop.xlane.xlu0 %1098
    %v1100 = vsel %vm189, %v1096, 0.0
    %1101 = vadd.xlane.f32.xlu0 %v1100
    %v1102 = vpop.xlane.xlu0 %1101
    %v1103 = vmul.f32 %v1099, %v957
    %v1104 = vmul.f32 %v1102, %v957
    %v1105 = vadd.f32 %v1103, 1e-05
    %v1106 = vadd.f32 %v1104, 1e-05
    %v1107 = vrsqrt.pop %v1105
    %v1108 = vmul.f32 %v1107, %v1105
    %v1109 = vmul.f32 %v1108, %v1107
    %v1110 = vmul.f32 0.5, %v1109
    %v1111 = vsub.f32 1.5, %v1110
    %v1112 = vmul.f32 %v1107, %v1111
    %vm1113 = vweird.f32 %v1105
    %vm1114 = vweird.f32 %v1107
    %vm1115 = vmor %vm1113, %vm1114
    %v1116 = vsel %vm1115, %v1107, %v1112
    %v1117 = vrsqrt.pop %v1106
    %v1118 = vmul.f32 %v1117, %v1106
    %v1119 = vmul.f32 %v1118, %v1117
    %v1120 = vmul.f32 0.5, %v1119
    %v1121 = vsub.f32 1.5, %v1120
    %v1122 = vmul.f32 %v1117, %v1121
    %vm1123 = vweird.f32 %v1106
    %vm1124 = vweird.f32 %v1117
    %vm1125 = vmor %vm1123, %vm1124
    %v1126 = vsel %vm1125, %v1117, %v1122
    %v1127 = vmul.f32 %v1093, %v1116
    %v1128 = vmul.f32 %v1094, %v1126
    %v1129 = vperm.slane %v180, 2
    %v1130 = vmul.f32 %v1127, %v1129
    %v1131 = vmul.f32 %v1128, %v1129
    %v1132 = vperm.slane %v180, 3
    %v1133 = vadd.f32 %v1130, %v1132
    %v1134 = vadd.f32 %v1131, %v1132
    %s1135 = scalar_lea.vmem [#allocation10], 4
    %v1136 = vld [vmem:[%s1135] sm:$0xf]
    %s1137 = scalar_lea.vmem %s4, 32
    %v1138 = vld [vmem:[%s1137] sm:$0xff]
    %v1139 = vld [vmem:[%s1137 + $0x8] sm:$0xff]
    %v1140 = vld [vmem:[%s1137 + $0x10] sm:$0xff]
    %v1141 = vld [vmem:[%s1137 + $0x18] sm:$0xff]
    %s1142 = scalar_lea.vmem %s5, 1
    %v1143 = vld [vmem:[%s1142] sm:$0x1]
    %v1145 = vperm.slane %v1143, 0
    %v1148 = vsel %vm189, %v1133, 0
    %v1151 = vsel %vm189, %v1134, 0
    %1153 = vmatpush.msra.mxu0 0.0
    %1154 = vmatpush.msra.mxu0 0.0
    %1155 = vmatpush.msra.mxu0 0.0
    %1156 = vmatpush.msra.mxu0 0.0
    %1157 = vmatpush.msra.mxu0 0.0
    %1158 = vmatpush.msra.mxu0 0.0
    %1159 = vmatpush.msra.mxu0 0.0
    %1160 = vmatpush.msra.mxu0 0.0
    %1161 = vmatpush.msra.mxu0 0.0
    %1162 = vmatpush.msra.mxu0 0.0
    %1163 = vmatpush.msra.mxu0 0.0
    %1164 = vmatpush.msra.mxu0 0.0
    %1165 = vmatpush.msra.mxu0 %v1141
    %1166 = vmatpush.msra.mxu0 %v1140
    %1167 = vmatpush.msra.mxu0 %v1139
    %1168 = vmatpush.msra.mxu0 %v1138
    %1169 = vmatmul.f32.gmra.mxu0 %v1148
    %v1170 = vpop.f32.mrf.mxu0
    %v1171 = vadd.f32 %v1145, %v1170
    %1172 = vmatmul.f32.gmra.mxu0 %v1151
    %v1173 = vpop.f32.mrf.mxu0
    %v1174 = vadd.f32 %v1145, %v1173
    %1175 = vdwg.mxu0
    %1177 = vrot.lane.b32.xlu0 %v1171, 96
    %v1178 = vpop.permute.xlu0 %1177
    %v1179 = vsel %vm222, %v1171, 0
    %v1181 = vsel %vm222, %v1178, 0
    %1183 = vmatpush.xpose.msra.mxu0 0.0
    %1184 = vmatpush.xpose.msra.mxu0 0.0
    %1185 = vmatpush.xpose.msra.mxu0 0.0
    %1186 = vmatpush.xpose.msra.mxu0 0.0
    %1187 = vmatpush.xpose.msra.mxu0 0.0
    %1188 = vmatpush.xpose.msra.mxu0 0.0
    %1189 = vmatpush.xpose.msra.mxu0 0.0
    %1190 = vmatpush.xpose.msra.mxu0 0.0
    %1191 = vmatpush.xpose.msra.mxu0 0.0
    %1192 = vmatpush.xpose.msra.mxu0 0.0
    %1193 = vmatpush.xpose.msra.mxu0 0.0
    %1194 = vmatpush.xpose.msra.mxu0 0.0
    %1195 = vmatpush.xpose.msra.mxu0 0.0
    %1196 = vmatpush.xpose.msra.mxu0 0.0
    %1197 = vmatpush.xpose.msra.mxu0 0.0
    %1198 = vmatpush.xpose.msra.mxu0 %v1181
    %1199 = vmatmul.f32.gmra.mxu0 %v1179
    %v1200 = vpop.f32.mrf.mxu0
    %v1201 = vadd.f32 0.0, %v1200
    %1202 = vdwg.mxu0
    %1204 = vrot.lane.b32.xlu0 %v1174, 96
    %v1205 = vpop.permute.xlu0 %1204
    %v1206 = vsel %vm222, %v1174, 0
    %v1208 = vsel %vm222, %v1205, 0
    %1210 = vmatpush.xpose.msra.mxu0 0.0
    %1211 = vmatpush.xpose.msra.mxu0 0.0
    %1212 = vmatpush.xpose.msra.mxu0 0.0
    %1213 = vmatpush.xpose.msra.mxu0 0.0
    %1214 = vmatpush.xpose.msra.mxu0 0.0
    %1215 = vmatpush.xpose.msra.mxu0 0.0
    %1216 = vmatpush.xpose.msra.mxu0 0.0
    %1217 = vmatpush.xpose.msra.mxu0 0.0
    %1218 = vmatpush.xpose.msra.mxu0 0.0
    %1219 = vmatpush.xpose.msra.mxu0 0.0
    %1220 = vmatpush.xpose.msra.mxu0 0.0
    %1221 = vmatpush.xpose.msra.mxu0 0.0
    %1222 = vmatpush.xpose.msra.mxu0 0.0
    %1223 = vmatpush.xpose.msra.mxu0 0.0
    %1224 = vmatpush.xpose.msra.mxu0 0.0
    %1225 = vmatpush.xpose.msra.mxu0 %v1208
    %1226 = vmatmul.f32.gmra.mxu0 %v1206
    %v1227 = vpop.f32.mrf.mxu0
    %v1228 = vadd.f32 0.0, %v1227
    %1229 = vdwg.mxu0
    %v1230 = vmul.f32 %v1201, 0.35355338
    %v1231 = vmul.f32 %v1228, 0.35355338
    %v1232 = vsel %vm280, -10000.0, %v1230
    %v1233 = vsel %vm281, -10000.0, %v1231
    %v1234 = vsel %vm222, %v1232, -inf
    %1235 = vmax.xlane.f32.xlu0 %v1234
    %v1236 = vpop.xlane.xlu0 %1235
    %v1237 = vsel %vm222, %v1233, -inf
    %1238 = vmax.xlane.f32.xlu0 %v1237
    %v1239 = vpop.xlane.xlu0 %1238
    %v1240 = vsub.f32 %v1232, %v1236
    %v1241 = vsub.f32 %v1233, %v1239
    %v1242 = vmul.f32 %v1240, 1.442695
    %v1243 = vpow.pop %v1242
    %v1244 = vmul.f32 %v1241, 1.442695
    %v1245 = vpow.pop %v1244
    %v1246 = vsel %vm222, %v1243, 0.0
    %1247 = vadd.xlane.f32.xlu0 %v1246
    %v1248 = vpop.xlane.xlu0 %1247
    %v1249 = vsel %vm222, %v1245, 0.0
    %1250 = vadd.xlane.f32.xlu0 %v1249
    %v1251 = vpop.xlane.xlu0 %1250
    %v1252 = vrcp.pop %v1248
    %v1253 = vmul.f32 %v1248, %v1252
    %v1254 = vsub.f32 1.0, %v1253
    %v1255 = vmul.f32 %v1252, %v1254
    %v1256 = vadd.f32 %v1252, %v1255
    %vm1257 = vweird.f32 %v1248
    %vm1258 = vweird.f32 %v1252
    %vm1259 = vmor %vm1257, %vm1258
    %v1260 = vsel %vm1259, %v1252, %v1256
    %v1261 = vand.u32 2147483647, %v1248
    %vm1262 = vcmp.eq.f32.partialorder %v1261, 8.507059e+37
    %v1263 = vand.u32 %v1248, 2147483648
    %v1264 = vor.u32 1.1754944e-38, %v1263
    %v1265 = vsel %vm1262, %v1264, %v1260
    %v1266 = vmul.f32 %v1243, %v1265
    %v1267 = vrcp.pop %v1251
    %v1268 = vmul.f32 %v1251, %v1267
    %v1269 = vsub.f32 1.0, %v1268
    %v1270 = vmul.f32 %v1267, %v1269
    %v1271 = vadd.f32 %v1267, %v1270
    %vm1272 = vweird.f32 %v1251
    %vm1273 = vweird.f32 %v1267
    %vm1274 = vmor %vm1272, %vm1273
    %v1275 = vsel %vm1274, %v1267, %v1271
    %v1276 = vand.u32 2147483647, %v1251
    %vm1277 = vcmp.eq.f32.partialorder %v1276, 8.507059e+37
    %v1278 = vand.u32 %v1251, 2147483648
    %v1279 = vor.u32 1.1754944e-38, %v1278
    %v1280 = vsel %vm1277, %v1279, %v1275
    %v1281 = vmul.f32 %v1245, %v1280
    %s1282 = scalar_lea.vmem %s14, 64
    %1283 = vst.msk [vmem:[%s1282] sm:$0xff] %vm222, %v1266
    %1284 = vst.msk [vmem:[%s1282 + $0x8] sm:$0xff] %vm222, %v1281
    %1285 = vrot.lane.b32.xlu0 %v1171, 64
    %v1286 = vpop.permute.xlu0 %1285
    %v1289 = vsel %vm222, %v1266, 0
    %1291 = vmatpush.msra.mxu0 0.0
    %1292 = vmatpush.msra.mxu0 0.0
    %1293 = vmatpush.msra.mxu0 0.0
    %1294 = vmatpush.msra.mxu0 0.0
    %1295 = vmatpush.msra.mxu0 0.0
    %1296 = vmatpush.msra.mxu0 0.0
    %1297 = vmatpush.msra.mxu0 0.0
    %1298 = vmatpush.msra.mxu0 0.0
    %1299 = vmatpush.msra.mxu0 0.0
    %1300 = vmatpush.msra.mxu0 0.0
    %1301 = vmatpush.msra.mxu0 0.0
    %1302 = vmatpush.msra.mxu0 0.0
    %1303 = vmatpush.msra.mxu0 0.0
    %1304 = vmatpush.msra.mxu0 0.0
    %1305 = vmatpush.msra.mxu0 0.0
    %1306 = vmatpush.msra.mxu0 %v1286
    %1307 = vmatmul.f32.gmra.mxu0 %v1289
    %v1308 = vpop.f32.mrf.mxu0
    %v1309 = vadd.f32 0.0, %v1308
    %1310 = vdwg.mxu0
    %1311 = vrot.lane.b32.xlu0 %v1174, 64
    %v1312 = vpop.permute.xlu0 %1311
    %v1315 = vsel %vm222, %v1281, 0
    %1317 = vmatpush.msra.mxu0 0.0
    %1318 = vmatpush.msra.mxu0 0.0
    %1319 = vmatpush.msra.mxu0 0.0
    %1320 = vmatpush.msra.mxu0 0.0
    %1321 = vmatpush.msra.mxu0 0.0
    %1322 = vmatpush.msra.mxu0 0.0
    %1323 = vmatpush.msra.mxu0 0.0
    %1324 = vmatpush.msra.mxu0 0.0
    %1325 = vmatpush.msra.mxu0 0.0
    %1326 = vmatpush.msra.mxu0 0.0
    %1327 = vmatpush.msra.mxu0 0.0
    %1328 = vmatpush.msra.mxu0 0.0
    %1329 = vmatpush.msra.mxu0 0.0
    %1330 = vmatpush.msra.mxu0 0.0
    %1331 = vmatpush.msra.mxu0 0.0
    %1332 = vmatpush.msra.mxu0 %v1312
    %1333 = vmatmul.f32.gmra.mxu0 %v1315
    %v1334 = vpop.f32.mrf.mxu0
    %v1335 = vadd.f32 0.0, %v1334
    %1336 = vdwg.mxu0
    %1337 = vrot.lane.b32.xlu0 %v1171, 120
    %v1338 = vpop.permute.xlu0 %1337
    %1339 = vrot.lane.b32.xlu0 %v1171, 88
    %v1340 = vpop.permute.xlu0 %1339
    %v1341 = vsel %vm222, %v1338, 0
    %v1343 = vsel %vm222, %v1340, 0
    %1345 = vmatpush.xpose.msra.mxu0 0.0
    %1346 = vmatpush.xpose.msra.mxu0 0.0
    %1347 = vmatpush.xpose.msra.mxu0 0.0
    %1348 = vmatpush.xpose.msra.mxu0 0.0
    %1349 = vmatpush.xpose.msra.mxu0 0.0
    %1350 = vmatpush.xpose.msra.mxu0 0.0
    %1351 = vmatpush.xpose.msra.mxu0 0.0
    %1352 = vmatpush.xpose.msra.mxu0 0.0
    %1353 = vmatpush.xpose.msra.mxu0 0.0
    %1354 = vmatpush.xpose.msra.mxu0 0.0
    %1355 = vmatpush.xpose.msra.mxu0 0.0
    %1356 = vmatpush.xpose.msra.mxu0 0.0
    %1357 = vmatpush.xpose.msra.mxu0 0.0
    %1358 = vmatpush.xpose.msra.mxu0 0.0
    %1359 = vmatpush.xpose.msra.mxu0 0.0
    %1360 = vmatpush.xpose.msra.mxu0 %v1343
    %1361 = vmatmul.f32.gmra.mxu0 %v1341
    %v1362 = vpop.f32.mrf.mxu0
    %v1363 = vadd.f32 0.0, %v1362
    %1364 = vdwg.mxu0
    %1365 = vrot.lane.b32.xlu0 %v1174, 120
    %v1366 = vpop.permute.xlu0 %1365
    %1367 = vrot.lane.b32.xlu0 %v1174, 88
    %v1368 = vpop.permute.xlu0 %1367
    %v1369 = vsel %vm222, %v1366, 0
    %v1371 = vsel %vm222, %v1368, 0
    %1373 = vmatpush.xpose.msra.mxu0 0.0
    %1374 = vmatpush.xpose.msra.mxu0 0.0
    %1375 = vmatpush.xpose.msra.mxu0 0.0
    %1376 = vmatpush.xpose.msra.mxu0 0.0
    %1377 = vmatpush.xpose.msra.mxu0 0.0
    %1378 = vmatpush.xpose.msra.mxu0 0.0
    %1379 = vmatpush.xpose.msra.mxu0 0.0
    %1380 = vmatpush.xpose.msra.mxu0 0.0
    %1381 = vmatpush.xpose.msra.mxu0 0.0
    %1382 = vmatpush.xpose.msra.mxu0 0.0
    %1383 = vmatpush.xpose.msra.mxu0 0.0
    %1384 = vmatpush.xpose.msra.mxu0 0.0
    %1385 = vmatpush.xpose.msra.mxu0 0.0
    %1386 = vmatpush.xpose.msra.mxu0 0.0
    %1387 = vmatpush.xpose.msra.mxu0 0.0
    %1388 = vmatpush.xpose.msra.mxu0 %v1371
    %1389 = vmatmul.f32.gmra.mxu0 %v1369
    %v1390 = vpop.f32.mrf.mxu0
    %v1391 = vadd.f32 0.0, %v1390
    %1392 = vdwg.mxu0
    %v1393 = vmul.f32 %v1363, 0.35355338
    %v1394 = vmul.f32 %v1391, 0.35355338
    %v1395 = vsel %vm280, -10000.0, %v1393
    %v1396 = vsel %vm281, -10000.0, %v1394
    %v1397 = vsel %vm222, %v1395, -inf
    %1398 = vmax.xlane.f32.xlu0 %v1397
    %v1399 = vpop.xlane.xlu0 %1398
    %v1400 = vsel %vm222, %v1396, -inf
    %1401 = vmax.xlane.f32.xlu0 %v1400
    %v1402 = vpop.xlane.xlu0 %1401
    %v1403 = vsub.f32 %v1395, %v1399
    %v1404 = vsub.f32 %v1396, %v1402
    %v1405 = vmul.f32 %v1403, 1.442695
    %v1406 = vpow.pop %v1405
    %v1407 = vmul.f32 %v1404, 1.442695
    %v1408 = vpow.pop %v1407
    %v1409 = vsel %vm222, %v1406, 0.0
    %1410 = vadd.xlane.f32.xlu0 %v1409
    %v1411 = vpop.xlane.xlu0 %1410
    %v1412 = vsel %vm222, %v1408, 0.0
    %1413 = vadd.xlane.f32.xlu0 %v1412
    %v1414 = vpop.xlane.xlu0 %1413
    %v1415 = vrcp.pop %v1411
    %v1416 = vmul.f32 %v1411, %v1415
    %v1417 = vsub.f32 1.0, %v1416
    %v1418 = vmul.f32 %v1415, %v1417
    %v1419 = vadd.f32 %v1415, %v1418
    %vm1420 = vweird.f32 %v1411
    %vm1421 = vweird.f32 %v1415
    %vm1422 = vmor %vm1420, %vm1421
    %v1423 = vsel %vm1422, %v1415, %v1419
    %v1424 = vand.u32 2147483647, %v1411
    %vm1425 = vcmp.eq.f32.partialorder %v1424, 8.507059e+37
    %v1426 = vand.u32 %v1411, 2147483648
    %v1427 = vor.u32 1.1754944e-38, %v1426
    %v1428 = vsel %vm1425, %v1427, %v1423
    %v1429 = vmul.f32 %v1406, %v1428
    %v1430 = vrcp.pop %v1414
    %v1431 = vmul.f32 %v1414, %v1430
    %v1432 = vsub.f32 1.0, %v1431
    %v1433 = vmul.f32 %v1430, %v1432
    %v1434 = vadd.f32 %v1430, %v1433
    %vm1435 = vweird.f32 %v1414
    %vm1436 = vweird.f32 %v1430
    %vm1437 = vmor %vm1435, %vm1436
    %v1438 = vsel %vm1437, %v1430, %v1434
    %v1439 = vand.u32 2147483647, %v1414
    %vm1440 = vcmp.eq.f32.partialorder %v1439, 8.507059e+37
    %v1441 = vand.u32 %v1414, 2147483648
    %v1442 = vor.u32 1.1754944e-38, %v1441
    %v1443 = vsel %vm1440, %v1442, %v1438
    %v1444 = vmul.f32 %v1408, %v1443
    %s1445 = scalar_lea.vmem %s14, 80
    %1446 = vst.msk [vmem:[%s1445] sm:$0xff] %vm222, %v1429
    %1447 = vst.msk [vmem:[%s1445 + $0x8] sm:$0xff] %vm222, %v1444
    %1448 = vrot.lane.b32.xlu0 %v1171, 56
    %v1449 = vpop.permute.xlu0 %1448
    %v1452 = vsel %vm222, %v1429, 0
    %1454 = vmatpush.msra.mxu0 0.0
    %1455 = vmatpush.msra.mxu0 0.0
    %1456 = vmatpush.msra.mxu0 0.0
    %1457 = vmatpush.msra.mxu0 0.0
    %1458 = vmatpush.msra.mxu0 0.0
    %1459 = vmatpush.msra.mxu0 0.0
    %1460 = vmatpush.msra.mxu0 0.0
    %1461 = vmatpush.msra.mxu0 0.0
    %1462 = vmatpush.msra.mxu0 0.0
    %1463 = vmatpush.msra.mxu0 0.0
    %1464 = vmatpush.msra.mxu0 0.0
    %1465 = vmatpush.msra.mxu0 0.0
    %1466 = vmatpush.msra.mxu0 0.0
    %1467 = vmatpush.msra.mxu0 0.0
    %1468 = vmatpush.msra.mxu0 0.0
    %1469 = vmatpush.msra.mxu0 %v1449
    %1470 = vmatmul.f32.gmra.mxu0 %v1452
    %v1471 = vpop.f32.mrf.mxu0
    %v1472 = vadd.f32 0.0, %v1471
    %1473 = vdwg.mxu0
    %1474 = vrot.lane.b32.xlu0 %v1174, 56
    %v1475 = vpop.permute.xlu0 %1474
    %v1478 = vsel %vm222, %v1444, 0
    %1480 = vmatpush.msra.mxu0 0.0
    %1481 = vmatpush.msra.mxu0 0.0
    %1482 = vmatpush.msra.mxu0 0.0
    %1483 = vmatpush.msra.mxu0 0.0
    %1484 = vmatpush.msra.mxu0 0.0
    %1485 = vmatpush.msra.mxu0 0.0
    %1486 = vmatpush.msra.mxu0 0.0
    %1487 = vmatpush.msra.mxu0 0.0
    %1488 = vmatpush.msra.mxu0 0.0
    %1489 = vmatpush.msra.mxu0 0.0
    %1490 = vmatpush.msra.mxu0 0.0
    %1491 = vmatpush.msra.mxu0 0.0
    %1492 = vmatpush.msra.mxu0 0.0
    %1493 = vmatpush.msra.mxu0 0.0
    %1494 = vmatpush.msra.mxu0 0.0
    %1495 = vmatpush.msra.mxu0 %v1475
    %1496 = vmatmul.f32.gmra.mxu0 %v1478
    %v1497 = vpop.f32.mrf.mxu0
    %v1498 = vadd.f32 0.0, %v1497
    %1499 = vdwg.mxu0
    %1500 = vrot.lane.b32.xlu0 %v1171, 112
    %v1501 = vpop.permute.xlu0 %1500
    %1502 = vrot.lane.b32.xlu0 %v1171, 80
    %v1503 = vpop.permute.xlu0 %1502
    %v1504 = vsel %vm222, %v1501, 0
    %v1506 = vsel %vm222, %v1503, 0
    %1508 = vmatpush.xpose.msra.mxu0 0.0
    %1509 = vmatpush.xpose.msra.mxu0 0.0
    %1510 = vmatpush.xpose.msra.mxu0 0.0
    %1511 = vmatpush.xpose.msra.mxu0 0.0
    %1512 = vmatpush.xpose.msra.mxu0 0.0
    %1513 = vmatpush.xpose.msra.mxu0 0.0
    %1514 = vmatpush.xpose.msra.mxu0 0.0
    %1515 = vmatpush.xpose.msra.mxu0 0.0
    %1516 = vmatpush.xpose.msra.mxu0 0.0
    %1517 = vmatpush.xpose.msra.mxu0 0.0
    %1518 = vmatpush.xpose.msra.mxu0 0.0
    %1519 = vmatpush.xpose.msra.mxu0 0.0
    %1520 = vmatpush.xpose.msra.mxu0 0.0
    %1521 = vmatpush.xpose.msra.mxu0 0.0
    %1522 = vmatpush.xpose.msra.mxu0 0.0
    %1523 = vmatpush.xpose.msra.mxu0 %v1506
    %1524 = vmatmul.f32.gmra.mxu0 %v1504
    %v1525 = vpop.f32.mrf.mxu0
    %v1526 = vadd.f32 0.0, %v1525
    %1527 = vdwg.mxu0
    %1528 = vrot.lane.b32.xlu0 %v1174, 112
    %v1529 = vpop.permute.xlu0 %1528
    %1530 = vrot.lane.b32.xlu0 %v1174, 80
    %v1531 = vpop.permute.xlu0 %1530
    %v1532 = vsel %vm222, %v1529, 0
    %v1534 = vsel %vm222, %v1531, 0
    %1536 = vmatpush.xpose.msra.mxu0 0.0
    %1537 = vmatpush.xpose.msra.mxu0 0.0
    %1538 = vmatpush.xpose.msra.mxu0 0.0
    %1539 = vmatpush.xpose.msra.mxu0 0.0
    %1540 = vmatpush.xpose.msra.mxu0 0.0
    %1541 = vmatpush.xpose.msra.mxu0 0.0
    %1542 = vmatpush.xpose.msra.mxu0 0.0
    %1543 = vmatpush.xpose.msra.mxu0 0.0
    %1544 = vmatpush.xpose.msra.mxu0 0.0
    %1545 = vmatpush.xpose.msra.mxu0 0.0
    %1546 = vmatpush.xpose.msra.mxu0 0.0
    %1547 = vmatpush.xpose.msra.mxu0 0.0
    %1548 = vmatpush.xpose.msra.mxu0 0.0
    %1549 = vmatpush.xpose.msra.mxu0 0.0
    %1550 = vmatpush.xpose.msra.mxu0 0.0
    %1551 = vmatpush.xpose.msra.mxu0 %v1534
    %1552 = vmatmul.f32.gmra.mxu0 %v1532
    %v1553 = vpop.f32.mrf.mxu0
    %v1554 = vadd.f32 0.0, %v1553
    %1555 = vdwg.mxu0
    %v1556 = vmul.f32 %v1526, 0.35355338
    %v1557 = vmul.f32 %v1554, 0.35355338
    %v1558 = vsel %vm280, -10000.0, %v1556
    %v1559 = vsel %vm281, -10000.0, %v1557
    %v1560 = vsel %vm222, %v1558, -inf
    %1561 = vmax.xlane.f32.xlu0 %v1560
    %v1562 = vpop.xlane.xlu0 %1561
    %v1563 = vsel %vm222, %v1559, -inf
    %1564 = vmax.xlane.f32.xlu0 %v1563
    %v1565 = vpop.xlane.xlu0 %1564
    %v1566 = vsub.f32 %v1558, %v1562
    %v1567 = vsub.f32 %v1559, %v1565
    %v1568 = vmul.f32 %v1566, 1.442695
    %v1569 = vpow.pop %v1568
    %v1570 = vmul.f32 %v1567, 1.442695
    %v1571 = vpow.pop %v1570
    %v1572 = vsel %vm222, %v1569, 0.0
    %1573 = vadd.xlane.f32.xlu0 %v1572
    %v1574 = vpop.xlane.xlu0 %1573
    %v1575 = vsel %vm222, %v1571, 0.0
    %1576 = vadd.xlane.f32.xlu0 %v1575
    %v1577 = vpop.xlane.xlu0 %1576
    %v1578 = vrcp.pop %v1574
    %v1579 = vmul.f32 %v1574, %v1578
    %v1580 = vsub.f32 1.0, %v1579
    %v1581 = vmul.f32 %v1578, %v1580
    %v1582 = vadd.f32 %v1578, %v1581
    %vm1583 = vweird.f32 %v1574
    %vm1584 = vweird.f32 %v1578
    %vm1585 = vmor %vm1583, %vm1584
    %v1586 = vsel %vm1585, %v1578, %v1582
    %v1587 = vand.u32 2147483647, %v1574
    %vm1588 = vcmp.eq.f32.partialorder %v1587, 8.507059e+37
    %v1589 = vand.u32 %v1574, 2147483648
    %v1590 = vor.u32 1.1754944e-38, %v1589
    %v1591 = vsel %vm1588, %v1590, %v1586
    %v1592 = vmul.f32 %v1569, %v1591
    %v1593 = vrcp.pop %v1577
    %v1594 = vmul.f32 %v1577, %v1593
    %v1595 = vsub.f32 1.0, %v1594
    %v1596 = vmul.f32 %v1593, %v1595
    %v1597 = vadd.f32 %v1593, %v1596
    %vm1598 = vweird.f32 %v1577
    %vm1599 = vweird.f32 %v1593
    %vm1600 = vmor %vm1598, %vm1599
    %v1601 = vsel %vm1600, %v1593, %v1597
    %v1602 = vand.u32 2147483647, %v1577
    %vm1603 = vcmp.eq.f32.partialorder %v1602, 8.507059e+37
    %v1604 = vand.u32 %v1577, 2147483648
    %v1605 = vor.u32 1.1754944e-38, %v1604
    %v1606 = vsel %vm1603, %v1605, %v1601
    %v1607 = vmul.f32 %v1571, %v1606
    %s1608 = scalar_lea.vmem %s14, 96
    %1609 = vst.msk [vmem:[%s1608] sm:$0xff] %vm222, %v1592
    %1610 = vst.msk [vmem:[%s1608 + $0x8] sm:$0xff] %vm222, %v1607
    %1611 = vrot.lane.b32.xlu0 %v1171, 48
    %v1612 = vpop.permute.xlu0 %1611
    %v1615 = vsel %vm222, %v1592, 0
    %1617 = vmatpush.msra.mxu0 0.0
    %1618 = vmatpush.msra.mxu0 0.0
    %1619 = vmatpush.msra.mxu0 0.0
    %1620 = vmatpush.msra.mxu0 0.0
    %1621 = vmatpush.msra.mxu0 0.0
    %1622 = vmatpush.msra.mxu0 0.0
    %1623 = vmatpush.msra.mxu0 0.0
    %1624 = vmatpush.msra.mxu0 0.0
    %1625 = vmatpush.msra.mxu0 0.0
    %1626 = vmatpush.msra.mxu0 0.0
    %1627 = vmatpush.msra.mxu0 0.0
    %1628 = vmatpush.msra.mxu0 0.0
    %1629 = vmatpush.msra.mxu0 0.0
    %1630 = vmatpush.msra.mxu0 0.0
    %1631 = vmatpush.msra.mxu0 0.0
    %1632 = vmatpush.msra.mxu0 %v1612
    %1633 = vmatmul.f32.gmra.mxu0 %v1615
    %v1634 = vpop.f32.mrf.mxu0
    %v1635 = vadd.f32 0.0, %v1634
    %1636 = vdwg.mxu0
    %1637 = vrot.lane.b32.xlu0 %v1174, 48
    %v1638 = vpop.permute.xlu0 %1637
    %v1641 = vsel %vm222, %v1607, 0
    %1643 = vmatpush.msra.mxu0 0.0
    %1644 = vmatpush.msra.mxu0 0.0
    %1645 = vmatpush.msra.mxu0 0.0
    %1646 = vmatpush.msra.mxu0 0.0
    %1647 = vmatpush.msra.mxu0 0.0
    %1648 = vmatpush.msra.mxu0 0.0
    %1649 = vmatpush.msra.mxu0 0.0
    %1650 = vmatpush.msra.mxu0 0.0
    %1651 = vmatpush.msra.mxu0 0.0
    %1652 = vmatpush.msra.mxu0 0.0
    %1653 = vmatpush.msra.mxu0 0.0
    %1654 = vmatpush.msra.mxu0 0.0
    %1655 = vmatpush.msra.mxu0 0.0
    %1656 = vmatpush.msra.mxu0 0.0
    %1657 = vmatpush.msra.mxu0 0.0
    %1658 = vmatpush.msra.mxu0 %v1638
    %1659 = vmatmul.f32.gmra.mxu0 %v1641
    %v1660 = vpop.f32.mrf.mxu0
    %v1661 = vadd.f32 0.0, %v1660
    %1662 = vdwg.mxu0
    %1663 = vrot.lane.b32.xlu0 %v1171, 104
    %v1664 = vpop.permute.xlu0 %1663
    %1665 = vrot.lane.b32.xlu0 %v1171, 72
    %v1666 = vpop.permute.xlu0 %1665
    %v1667 = vsel %vm222, %v1664, 0
    %v1669 = vsel %vm222, %v1666, 0
    %1671 = vmatpush.xpose.msra.mxu0 0.0
    %1672 = vmatpush.xpose.msra.mxu0 0.0
    %1673 = vmatpush.xpose.msra.mxu0 0.0
    %1674 = vmatpush.xpose.msra.mxu0 0.0
    %1675 = vmatpush.xpose.msra.mxu0 0.0
    %1676 = vmatpush.xpose.msra.mxu0 0.0
    %1677 = vmatpush.xpose.msra.mxu0 0.0
    %1678 = vmatpush.xpose.msra.mxu0 0.0
    %1679 = vmatpush.xpose.msra.mxu0 0.0
    %1680 = vmatpush.xpose.msra.mxu0 0.0
    %1681 = vmatpush.xpose.msra.mxu0 0.0
    %1682 = vmatpush.xpose.msra.mxu0 0.0
    %1683 = vmatpush.xpose.msra.mxu0 0.0
    %1684 = vmatpush.xpose.msra.mxu0 0.0
    %1685 = vmatpush.xpose.msra.mxu0 0.0
    %1686 = vmatpush.xpose.msra.mxu0 %v1669
    %1687 = vmatmul.f32.gmra.mxu0 %v1667
    %v1688 = vpop.f32.mrf.mxu0
    %v1689 = vadd.f32 0.0, %v1688
    %1690 = vdwg.mxu0
    %1691 = vrot.lane.b32.xlu0 %v1174, 104
    %v1692 = vpop.permute.xlu0 %1691
    %1693 = vrot.lane.b32.xlu0 %v1174, 72
    %v1694 = vpop.permute.xlu0 %1693
    %v1695 = vsel %vm222, %v1692, 0
    %v1697 = vsel %vm222, %v1694, 0
    %1699 = vmatpush.xpose.msra.mxu0 0.0
    %1700 = vmatpush.xpose.msra.mxu0 0.0
    %1701 = vmatpush.xpose.msra.mxu0 0.0
    %1702 = vmatpush.xpose.msra.mxu0 0.0
    %1703 = vmatpush.xpose.msra.mxu0 0.0
    %1704 = vmatpush.xpose.msra.mxu0 0.0
    %1705 = vmatpush.xpose.msra.mxu0 0.0
    %1706 = vmatpush.xpose.msra.mxu0 0.0
    %1707 = vmatpush.xpose.msra.mxu0 0.0
    %1708 = vmatpush.xpose.msra.mxu0 0.0
    %1709 = vmatpush.xpose.msra.mxu0 0.0
    %1710 = vmatpush.xpose.msra.mxu0 0.0
    %1711 = vmatpush.xpose.msra.mxu0 0.0
    %1712 = vmatpush.xpose.msra.mxu0 0.0
    %1713 = vmatpush.xpose.msra.mxu0 0.0
    %1714 = vmatpush.xpose.msra.mxu0 %v1697
    %1715 = vmatmul.f32.gmra.mxu0 %v1695
    %v1716 = vpop.f32.mrf.mxu0
    %v1717 = vadd.f32 0.0, %v1716
    %1718 = vdwg.mxu0
    %v1719 = vmul.f32 %v1689, 0.35355338
    %v1720 = vmul.f32 %v1717, 0.35355338
    %v1721 = vsel %vm280, -10000.0, %v1719
    %v1722 = vsel %vm281, -10000.0, %v1720
    %v1723 = vsel %vm222, %v1721, -inf
    %1724 = vmax.xlane.f32.xlu0 %v1723
    %v1725 = vpop.xlane.xlu0 %1724
    %v1726 = vsel %vm222, %v1722, -inf
    %1727 = vmax.xlane.f32.xlu0 %v1726
    %v1728 = vpop.xlane.xlu0 %1727
    %v1729 = vsub.f32 %v1721, %v1725
    %v1730 = vsub.f32 %v1722, %v1728
    %v1731 = vmul.f32 %v1729, 1.442695
    %v1732 = vpow.pop %v1731
    %v1733 = vmul.f32 %v1730, 1.442695
    %v1734 = vpow.pop %v1733
    %v1735 = vsel %vm222, %v1732, 0.0
    %1736 = vadd.xlane.f32.xlu0 %v1735
    %v1737 = vpop.xlane.xlu0 %1736
    %v1738 = vsel %vm222, %v1734, 0.0
    %1739 = vadd.xlane.f32.xlu0 %v1738
    %v1740 = vpop.xlane.xlu0 %1739
    %v1741 = vrcp.pop %v1737
    %v1742 = vmul.f32 %v1737, %v1741
    %v1743 = vsub.f32 1.0, %v1742
    %v1744 = vmul.f32 %v1741, %v1743
    %v1745 = vadd.f32 %v1741, %v1744
    %vm1746 = vweird.f32 %v1737
    %vm1747 = vweird.f32 %v1741
    %vm1748 = vmor %vm1746, %vm1747
    %v1749 = vsel %vm1748, %v1741, %v1745
    %v1750 = vand.u32 2147483647, %v1737
    %vm1751 = vcmp.eq.f32.partialorder %v1750, 8.507059e+37
    %v1752 = vand.u32 %v1737, 2147483648
    %v1753 = vor.u32 1.1754944e-38, %v1752
    %v1754 = vsel %vm1751, %v1753, %v1749
    %v1755 = vmul.f32 %v1732, %v1754
    %v1756 = vrcp.pop %v1740
    %v1757 = vmul.f32 %v1740, %v1756
    %v1758 = vsub.f32 1.0, %v1757
    %v1759 = vmul.f32 %v1756, %v1758
    %v1760 = vadd.f32 %v1756, %v1759
    %vm1761 = vweird.f32 %v1740
    %vm1762 = vweird.f32 %v1756
    %vm1763 = vmor %vm1761, %vm1762
    %v1764 = vsel %vm1763, %v1756, %v1760
    %v1765 = vand.u32 2147483647, %v1740
    %vm1766 = vcmp.eq.f32.partialorder %v1765, 8.507059e+37
    %v1767 = vand.u32 %v1740, 2147483648
    %v1768 = vor.u32 1.1754944e-38, %v1767
    %v1769 = vsel %vm1766, %v1768, %v1764
    %v1770 = vmul.f32 %v1734, %v1769
    %s1771 = scalar_lea.vmem %s14, 112
    %1772 = vst.msk [vmem:[%s1771] sm:$0xff] %vm222, %v1755
    %1773 = vst.msk [vmem:[%s1771 + $0x8] sm:$0xff] %vm222, %v1770
    %1774 = vrot.lane.b32.xlu0 %v1171, 40
    %v1775 = vpop.permute.xlu0 %1774
    %v1778 = vsel %vm222, %v1755, 0
    %1780 = vmatpush.msra.mxu0 0.0
    %1781 = vmatpush.msra.mxu0 0.0
    %1782 = vmatpush.msra.mxu0 0.0
    %1783 = vmatpush.msra.mxu0 0.0
    %1784 = vmatpush.msra.mxu0 0.0
    %1785 = vmatpush.msra.mxu0 0.0
    %1786 = vmatpush.msra.mxu0 0.0
    %1787 = vmatpush.msra.mxu0 0.0
    %1788 = vmatpush.msra.mxu0 0.0
    %1789 = vmatpush.msra.mxu0 0.0
    %1790 = vmatpush.msra.mxu0 0.0
    %1791 = vmatpush.msra.mxu0 0.0
    %1792 = vmatpush.msra.mxu0 0.0
    %1793 = vmatpush.msra.mxu0 0.0
    %1794 = vmatpush.msra.mxu0 0.0
    %1795 = vmatpush.msra.mxu0 %v1775
    %1796 = vmatmul.f32.gmra.mxu0 %v1778
    %v1797 = vpop.f32.mrf.mxu0
    %v1798 = vadd.f32 0.0, %v1797
    %1799 = vdwg.mxu0
    %1800 = vrot.lane.b32.xlu0 %v1174, 40
    %v1801 = vpop.permute.xlu0 %1800
    %v1804 = vsel %vm222, %v1770, 0
    %1806 = vmatpush.msra.mxu0 0.0
    %1807 = vmatpush.msra.mxu0 0.0
    %1808 = vmatpush.msra.mxu0 0.0
    %1809 = vmatpush.msra.mxu0 0.0
    %1810 = vmatpush.msra.mxu0 0.0
    %1811 = vmatpush.msra.mxu0 0.0
    %1812 = vmatpush.msra.mxu0 0.0
    %1813 = vmatpush.msra.mxu0 0.0
    %1814 = vmatpush.msra.mxu0 0.0
    %1815 = vmatpush.msra.mxu0 0.0
    %1816 = vmatpush.msra.mxu0 0.0
    %1817 = vmatpush.msra.mxu0 0.0
    %1818 = vmatpush.msra.mxu0 0.0
    %1819 = vmatpush.msra.mxu0 0.0
    %1820 = vmatpush.msra.mxu0 0.0
    %1821 = vmatpush.msra.mxu0 %v1801
    %1822 = vmatmul.f32.gmra.mxu0 %v1804
    %v1823 = vpop.f32.mrf.mxu0
    %v1824 = vadd.f32 0.0, %v1823
    %1825 = vdwg.mxu0
    %1828 = vrot.lane.b32.xlu0 %v1472, 8
    %v1829 = vpop.permute.xlu0 %1828
    %1830 = vrot.lane.b32.xlu0 %v1498, 8
    %v1831 = vpop.permute.xlu0 %1830
    %1836 = vrot.lane.b32.xlu0 %v1635, 16
    %v1837 = vpop.permute.xlu0 %1836
    %1838 = vrot.lane.b32.xlu0 %v1661, 16
    %v1839 = vpop.permute.xlu0 %1838
    %1844 = vrot.lane.b32.xlu0 %v1798, 24
    %v1845 = vpop.permute.xlu0 %1844
    %1846 = vrot.lane.b32.xlu0 %v1824, 24
    %v1847 = vpop.permute.xlu0 %1846
    %v1850 = vsel %vm222, %v1309, %v1829
    %v1851 = vsel %vm222, %v1335, %v1831
    %v1852 = vsel %vm141, %v1850, %v1837
    %v1853 = vsel %vm141, %v1851, %v1839
    %v1854 = vsel %vm903, %v1852, %v1845
    %v1855 = vsel %vm903, %v1853, %v1847
    %s1856 = scalar_lea.vmem %s6, 32
    %v1857 = vld [vmem:[%s1856] sm:$0xff]
    %v1858 = vld [vmem:[%s1856 + $0x8] sm:$0xff]
    %v1859 = vld [vmem:[%s1856 + $0x10] sm:$0xff]
    %v1860 = vld [vmem:[%s1856 + $0x18] sm:$0xff]
    %s1861 = scalar_lea.vmem [#allocation5], 1
    %v1862 = vld [vmem:[%s1861] sm:$0x1]
    %v1864 = vperm.slane %v1862, 0
    %v1867 = vsel %vm189, %v1854, 0
    %v1870 = vsel %vm189, %v1855, 0
    %1872 = vmatpush.msra.mxu0 0.0
    %1873 = vmatpush.msra.mxu0 0.0
    %1874 = vmatpush.msra.mxu0 0.0
    %1875 = vmatpush.msra.mxu0 0.0
    %1876 = vmatpush.msra.mxu0 0.0
    %1877 = vmatpush.msra.mxu0 0.0
    %1878 = vmatpush.msra.mxu0 0.0
    %1879 = vmatpush.msra.mxu0 0.0
    %1880 = vmatpush.msra.mxu0 0.0
    %1881 = vmatpush.msra.mxu0 0.0
    %1882 = vmatpush.msra.mxu0 0.0
    %1883 = vmatpush.msra.mxu0 0.0
    %1884 = vmatpush.msra.mxu0 %v1860
    %1885 = vmatpush.msra.mxu0 %v1859
    %1886 = vmatpush.msra.mxu0 %v1858
    %1887 = vmatpush.msra.mxu0 %v1857
    %1888 = vmatmul.f32.gmra.mxu0 %v1867
    %v1889 = vpop.f32.mrf.mxu0
    %v1890 = vadd.f32 %v1864, %v1889
    %1891 = vmatmul.f32.gmra.mxu0 %v1870
    %v1892 = vpop.f32.mrf.mxu0
    %v1893 = vadd.f32 %v1864, %v1892
    %1894 = vdwg.mxu0
    %v1895 = vadd.f32 %v1890, %v1133
    %v1896 = vadd.f32 %v1893, %v1134
    %v1897 = vsel %vm189, %v1895, 0.0
    %1898 = vadd.xlane.f32.xlu0 %v1897
    %v1899 = vpop.xlane.xlu0 %1898
    %v1900 = vsel %vm189, %v1896, 0.0
    %1901 = vadd.xlane.f32.xlu0 %v1900
    %v1902 = vpop.xlane.xlu0 %1901
    %v1903 = vmul.f32 %v1899, %v957
    %v1904 = vmul.f32 %v1902, %v957
    %v1905 = vsub.f32 %v1895, %v1903
    %v1906 = vsub.f32 %v1896, %v1904
    %v1907 = vmul.f32 %v1905, %v1905
    %v1908 = vmul.f32 %v1906, %v1906
    %v1909 = vsel %vm189, %v1907, 0.0
    %1910 = vadd.xlane.f32.xlu0 %v1909
    %v1911 = vpop.xlane.xlu0 %1910
    %v1912 = vsel %vm189, %v1908, 0.0
    %1913 = vadd.xlane.f32.xlu0 %v1912
    %v1914 = vpop.xlane.xlu0 %1913
    %v1915 = vmul.f32 %v1911, %v957
    %v1916 = vmul.f32 %v1914, %v957
    %v1917 = vadd.f32 %v1915, 1e-05
    %v1918 = vadd.f32 %v1916, 1e-05
    %v1919 = vrsqrt.pop %v1917
    %v1920 = vmul.f32 %v1919, %v1917
    %v1921 = vmul.f32 %v1920, %v1919
    %v1922 = vmul.f32 0.5, %v1921
    %v1923 = vsub.f32 1.5, %v1922
    %v1924 = vmul.f32 %v1919, %v1923
    %vm1925 = vweird.f32 %v1917
    %vm1926 = vweird.f32 %v1919
    %vm1927 = vmor %vm1925, %vm1926
    %v1928 = vsel %vm1927, %v1919, %v1924
    %v1929 = vrsqrt.pop %v1918
    %v1930 = vmul.f32 %v1929, %v1918
    %v1931 = vmul.f32 %v1930, %v1929
    %v1932 = vmul.f32 0.5, %v1931
    %v1933 = vsub.f32 1.5, %v1932
    %v1934 = vmul.f32 %v1929, %v1933
    %vm1935 = vweird.f32 %v1918
    %vm1936 = vweird.f32 %v1929
    %vm1937 = vmor %vm1935, %vm1936
    %v1938 = vsel %vm1937, %v1929, %v1934
    %v1939 = vmul.f32 %v1905, %v1928
    %v1940 = vmul.f32 %v1906, %v1938
    %v1941 = vperm.slane %v1136, 0
    %v1942 = vmul.f32 %v1939, %v1941
    %v1943 = vmul.f32 %v1940, %v1941
    %v1944 = vperm.slane %v1136, 1
    %v1945 = vadd.f32 %v1942, %v1944
    %v1946 = vadd.f32 %v1943, %v1944
    %s1947 = scalar_lea.vmem %s8, 32
    %v1948 = vld [vmem:[%s1947] sm:$0xff]
    %v1949 = vld [vmem:[%s1947 + $0x8] sm:$0xff]
    %v1950 = vld [vmem:[%s1947 + $0x10] sm:$0xff]
    %v1951 = vld [vmem:[%s1947 + $0x18] sm:$0xff]
    %s1952 = scalar_lea.vmem [#allocation7], 1
    %v1953 = vld [vmem:[%s1952] sm:$0x1]
    %v1955 = vperm.slane %v1953, 0
    %v1958 = vsel %vm189, %v1945, 0
    %v1961 = vsel %vm189, %v1946, 0
    %1963 = vmatpush.msra.mxu0 0.0
    %1964 = vmatpush.msra.mxu0 0.0
    %1965 = vmatpush.msra.mxu0 0.0
    %1966 = vmatpush.msra.mxu0 0.0
    %1967 = vmatpush.msra.mxu0 0.0
    %1968 = vmatpush.msra.mxu0 0.0
    %1969 = vmatpush.msra.mxu0 0.0
    %1970 = vmatpush.msra.mxu0 0.0
    %1971 = vmatpush.msra.mxu0 0.0
    %1972 = vmatpush.msra.mxu0 0.0
    %1973 = vmatpush.msra.mxu0 0.0
    %1974 = vmatpush.msra.mxu0 0.0
    %1975 = vmatpush.msra.mxu0 %v1951
    %1976 = vmatpush.msra.mxu0 %v1950
    %1977 = vmatpush.msra.mxu0 %v1949
    %1978 = vmatpush.msra.mxu0 %v1948
    %1979 = vmatmul.f32.gmra.mxu0 %v1958
    %v1980 = vpop.f32.mrf.mxu0
    %v1981 = vadd.f32 %v1955, %v1980
    %1982 = vmatmul.f32.gmra.mxu0 %v1961
    %v1983 = vpop.f32.mrf.mxu0
    %v1984 = vadd.f32 %v1955, %v1983
    %1985 = vdwg.mxu0
    %v1986 = vmax.f32 %v1981, 0.0
    %v1987 = vmax.f32 %v1984, 0.0
    %s1988 = scalar_lea.vmem %s10, 64
    %v1989 = vld [vmem:[%s1988] sm:$0xff]
    %v1990 = vld [vmem:[%s1988 + $0x8] sm:$0xff]
    %v1991 = vld [vmem:[%s1988 + $0x10] sm:$0xff]
    %v1992 = vld [vmem:[%s1988 + $0x18] sm:$0xff]
    %v1993 = vld [vmem:[%s1988 + $0x20] sm:$0xff]
    %v1994 = vld [vmem:[%s1988 + $0x28] sm:$0xff]
    %v1995 = vld [vmem:[%s1988 + $0x30] sm:$0xff]
    %v1996 = vld [vmem:[%s1988 + $0x38] sm:$0xff]
    %s1997 = scalar_lea.vmem [#allocation8], 1
    %v1998 = vld [vmem:[%s1997] sm:$0x1]
    %v2000 = vperm.slane %v1998, 0
    %v2003 = vsel %vm1053, %v1986, 0
    %v2006 = vsel %vm1053, %v1987, 0
    %2008 = vmatpush.msra.mxu0 0.0
    %2009 = vmatpush.msra.mxu0 0.0
    %2010 = vmatpush.msra.mxu0 0.0
    %2011 = vmatpush.msra.mxu0 0.0
    %2012 = vmatpush.msra.mxu0 0.0
    %2013 = vmatpush.msra.mxu0 0.0
    %2014 = vmatpush.msra.mxu0 0.0
    %2015 = vmatpush.msra.mxu0 0.0
    %2016 = vmatpush.msra.mxu0 %v1996
    %2017 = vmatpush.msra.mxu0 %v1995
    %2018 = vmatpush.msra.mxu0 %v1994
    %2019 = vmatpush.msra.mxu0 %v1993
    %2020 = vmatpush.msra.mxu0 %v1992
    %2021 = vmatpush.msra.mxu0 %v1991
    %2022 = vmatpush.msra.mxu0 %v1990
    %2023 = vmatpush.msra.mxu0 %v1989
    %2024 = vmatmul.f32.gmra.mxu0 %v2003
    %v2025 = vpop.f32.mrf.mxu0
    %v2026 = vadd.f32 %v2000, %v2025
    %2027 = vmatmul.f32.gmra.mxu0 %v2006
    %v2028 = vpop.f32.mrf.mxu0
    %v2029 = vadd.f32 %v2000, %v2028
    %2030 = vdwg.mxu0
    %v2031 = vadd.f32 %v2026, %v1945
    %v2032 = vadd.f32 %v2029, %v1946
    %v2033 = vsel %vm189, %v2031, 0.0
    %2034 = vadd.xlane.f32.xlu0 %v2033
    %v2035 = vpop.xlane.xlu0 %2034
    %v2036 = vsel %vm189, %v2032, 0.0
    %2037 = vadd.xlane.f32.xlu0 %v2036
    %v2038 = vpop.xlane.xlu0 %2037
    %v2039 = vmul.f32 %v2035, %v957
    %v2040 = vmul.f32 %v2038, %v957
    %v2041 = vsub.f32 %v2031, %v2039
    %v2042 = vsub.f32 %v2032, %v2040
    %v2043 = vmul.f32 %v2041, %v2041
    %v2044 = vmul.f32 %v2042, %v2042
    %v2045 = vsel %vm189, %v2043, 0.0
    %2046 = vadd.xlane.f32.xlu0 %v2045
    %v2047 = vpop.xlane.xlu0 %2046
    %v2048 = vsel %vm189, %v2044, 0.0
    %2049 = vadd.xlane.f32.xlu0 %v2048
    %v2050 = vpop.xlane.xlu0 %2049
    %v2051 = vmul.f32 %v2047, %v957
    %v2052 = vmul.f32 %v2050, %v957
    %v2053 = vadd.f32 %v2051, 1e-05
    %v2054 = vadd.f32 %v2052, 1e-05
    %v2055 = vrsqrt.pop %v2053
    %v2056 = vmul.f32 %v2055, %v2053
    %v2057 = vmul.f32 %v2056, %v2055
    %v2058 = vmul.f32 0.5, %v2057
    %v2059 = vsub.f32 1.5, %v2058
    %v2060 = vmul.f32 %v2055, %v2059
    %vm2061 = vweird.f32 %v2053
    %vm2062 = vweird.f32 %v2055
    %vm2063 = vmor %vm2061, %vm2062
    %v2064 = vsel %vm2063, %v2055, %v2060
    %v2065 = vrsqrt.pop %v2054
    %v2066 = vmul.f32 %v2065, %v2054
    %v2067 = vmul.f32 %v2066, %v2065
    %v2068 = vmul.f32 0.5, %v2067
    %v2069 = vsub.f32 1.5, %v2068
    %v2070 = vmul.f32 %v2065, %v2069
    %vm2071 = vweird.f32 %v2054
    %vm2072 = vweird.f32 %v2065
    %vm2073 = vmor %vm2071, %vm2072
    %v2074 = vsel %vm2073, %v2065, %v2070
    %v2075 = vmul.f32 %v2041, %v2064
    %v2076 = vmul.f32 %v2042, %v2074
    %v2077 = vperm.slane %v1136, 2
    %v2078 = vmul.f32 %v2075, %v2077
    %v2079 = vmul.f32 %v2076, %v2077
    %v2080 = vperm.slane %v1136, 3
    %v2081 = vadd.f32 %v2078, %v2080
    %v2082 = vadd.f32 %v2079, %v2080
    %2083 = vst.msk [vmem:[#allocation11] sm:$0xff] %vm189, %v2081
    %2084 = vst.msk [vmem:[#allocation11 + $0x8] sm:$0xff] %vm189, %v2082
    // Predicated region
    $region74: #{transformer_encoder.1} parent=1 // pred_check
      _
    $region75: #{transformer_encoder.1} parent=1 // pred_check_branch
      %2086 = sbr.rel (0) target = $region77
    $region76: #{transformer_encoder.1} parent=1 // pred_region
      %2088 = vsyncadd [#allocation4], 0
      %s2089 = sshll.u32 [#allocation11], 4
      %s2090 = int_to_ptr.vmem [resolvable:$true] %s2089
      %s2091 = sshll.u32 %s13, 4
      %s2092 = int_to_ptr.hbm [resolvable:$true] %s2091
      %2097 = dma.vmem_to_hbm [thread:$0]  %s2090, 256, %s2092, [#allocation4], 128, 128, 8
    $region77: #{transformer_encoder.1} parent=1 // pred_fallthru
      _
    // Predicated region
    $region78: #{transformer_encoder.1} parent=1 // pred_check
      _
    $region79: #{transformer_encoder.1} parent=1 // pred_check_branch
      %2099 = sbr.rel (0) target = $region81
    $region80: #{transformer_encoder.1} parent=1 // pred_region
      _
    $region81: #{transformer_encoder.1} parent=1 // pred_fallthru
      _
    // Predicated region
    $region82: #{transformer_encoder.1} parent=1 // pred_check
      _
    $region83: #{transformer_encoder.1} parent=1 // pred_check_branch
      %2101 = sbr.rel (0) target = $region85
    $region84: #{transformer_encoder.1} parent=1 // pred_region
      %2103 = dma.done [#allocation4], 256
    $region85: #{transformer_encoder.1} parent=1 // pred_fallthru
      _
    // Predicated region
    $region86: #{transformer_encoder.1} parent=1 // pred_check
      _
    $region87: #{transformer_encoder.1} parent=1 // pred_check_branch
      %2105 = sbr.rel (0) target = $region89
    $region88: #{transformer_encoder.1} parent=1 // pred_region
      _
    $region89: #{transformer_encoder.1} parent=1 // pred_fallthru
      _
    %2106 = vsyncpa [#allocation3], 1
    %2107 = vsyncpa [#allocation6], 1
    %2108 = vsyncpa [#allocation9], 1
    %2109 = vsyncpa [#allocation4], 1

</llo_original>
